<compile_context>
chip_gen: v5e
topology: v5e:2x2
jax: 0.10.0
libtpu: 0.0.40
codegen_flags: <defaults>
</compile_context>

<pallas_src>
import jax
import jax.numpy as jnp
from jax import lax
from jax.experimental import pallas as pl
from jax.experimental.pallas import tpu as pltpu


def _round_up(x, m):
    return (x + m - 1) // m * m


def _pad_gate_dim(w, h, hp):
    """Pad the trailing 4*h gate dim to 4*hp, padding each of (i,f,g,o) to hp.

    Padding MUST be exact zeros: padded hidden lanes stay exactly zero through
    the recurrence only because padded gate columns / weight rows / bias lanes
    are zero.
    """
    lead = w.shape[:-1]
    w = w.reshape(lead + (4, h))
    w = jnp.pad(w, [(0, 0)] * len(lead) + [(0, 0), (0, hp - h)])
    return w.reshape(lead + (4 * hp,))


# ----------------------------------------------------------------------------
# Kernel 1: fused stacked-LSTM recurrence (one batch block per grid step).
# ----------------------------------------------------------------------------
def _lstm_stack_kernel(x_ref, wih0_ref, wihr_ref, whh_ref, b_ref, out_ref,
                       hid_scr, gates_scr, h_scr, c_scr):
    """Shapes (padded; TB = T * BB rows for this batch block):

    x_ref     : (TB, IP)       bf16  layer-0 input sequence (time-major)
    wih0_ref  : (IP, 4*HP)     bf16  layer-0 input->gate weights
    wihr_ref  : (max(L-1,1), HP, 4*HP) bf16  layers>0 input->gate weights
    whh_ref   : (L, HP, 4*HP)  bf16  hidden->gate weights
    b_ref     : (L, 1, 4*HP)   f32   combined bias (b_ih + b_hh)
    out_ref   : (TB, HP)       bf16  final layer hidden sequence
    hid_scr   : (TB, HP)       bf16  current layer's hidden sequence
    gates_scr : (TB, 4*HP)     bf16  hoisted input-side gate pre-activations
    h_scr,c_scr: (BB, HP)      f32   recurrent state
    """
    TB, _ = x_ref.shape
    L = whh_ref.shape[0]
    H4 = whh_ref.shape[2]
    HP = H4 // 4
    BB = h_scr.shape[0]
    T = TB // BB

    for layer in range(L):   # static unroll; all weights stay VMEM-resident
        # (1) Hoisted input projection + bias for the whole sequence: one big
        #     MXU matmul (bf16 operands, f32 accumulation), stored bf16.
        if layer == 0:
            inp = x_ref[...]                           # (TB, IP) bf16
            w_in = wih0_ref[...]                       # (IP, 4HP)
        else:
            inp = hid_scr[...]                         # (TB, HP) bf16
            w_in = wihr_ref[layer - 1]                 # (HP, 4HP)
        gates_scr[...] = (
            jnp.dot(inp, w_in, preferred_element_type=jnp.float32) + b_ref[layer]
        ).astype(jnp.bfloat16)

        w_hh = whh_ref[layer]                          # (HP, 4HP) bf16

        # (2) Serialized recurrence: per step only h @ W_hh + precomputed gates.
        h_scr[...] = jnp.zeros_like(h_scr)
        c_scr[...] = jnp.zeros_like(c_scr)

        def step(t, carry, w_hh=w_hh):
            row = pl.multiple_of(t * BB, BB)
            gates = gates_scr[pl.ds(row, BB), :].astype(jnp.float32) + jnp.dot(
                h_scr[...].astype(jnp.bfloat16), w_hh,
                preferred_element_type=jnp.float32)    # (BB, 4HP) f32
            # 128-lane-aligned gate slices; PyTorch gate order i, f, g, o.
            i_g = jax.nn.sigmoid(gates[:, 0 * HP:1 * HP])
            f_g = jax.nn.sigmoid(gates[:, 1 * HP:2 * HP])
            g_g = jnp.tanh(gates[:, 2 * HP:3 * HP])
            o_g = jax.nn.sigmoid(gates[:, 3 * HP:4 * HP])
            c_new = f_g * c_scr[...] + i_g * g_g
            h_new = o_g * jnp.tanh(c_new)
            c_scr[...] = c_new
            h_scr[...] = h_new
            hid_scr[pl.ds(row, BB), :] = h_new.astype(jnp.bfloat16)
            return carry

        # Full unroll for short sequences; bounded unroll for long ones to
        # avoid vreg spills from bundle bloat.
        lax.fori_loop(0, T, step, 0, unroll=(True if T <= 16 else 8))

    out_ref[...] = hid_scr[...]


# ----------------------------------------------------------------------------
# Kernel 2: tiled output projection (vocab matmul), lane-dense f32 stores.
# ----------------------------------------------------------------------------
def _proj_kernel(h_ref, w_ref, b_ref, o_ref):
    o_ref[...] = (
        jnp.dot(h_ref[...], w_ref[...], preferred_element_type=jnp.float32)
        + b_ref[...]
    ).astype(o_ref.dtype)


# ----------------------------------------------------------------------------
# Parameter construction / packing
# ----------------------------------------------------------------------------
def init_params(key, embed_size, hidden_size, vocab_size, num_layers):
    scale = 0.1
    keys = jax.random.split(key, 3 + 4 * num_layers)
    params = {
        "embed": scale * jax.random.normal(
            keys[0], (vocab_size, embed_size), jnp.float32),
        "linear_w_t": scale * jax.random.normal(
            keys[1], (hidden_size, vocab_size), jnp.float32),
        "linear_b": scale * jax.random.normal(
            keys[2], (vocab_size,), jnp.float32),
        "lstm": [],
    }
    for layer in range(num_layers):
        in_size = embed_size if layer == 0 else hidden_size
        k = keys[3 + 4 * layer: 3 + 4 * (layer + 1)]
        # Stored pre-transposed: (in, 4H). Biases combined (b_ih + b_hh).
        params["lstm"].append({
            "w_ih_t": scale * jax.random.normal(
                k[0], (in_size, 4 * hidden_size), jnp.float32),
            "w_hh_t": scale * jax.random.normal(
                k[1], (hidden_size, 4 * hidden_size), jnp.float32),
            "bias": scale * (jax.random.normal(k[2], (4 * hidden_size,), jnp.float32)
                             + jax.random.normal(k[3], (4 * hidden_size,), jnp.float32)),
        })
    return params


def pack_params(params):
    """Pad / stack / cast parameters into the kernel-ready layout (done once)."""
    lstm = params["lstm"]
    E = params["embed"].shape[1]
    H = lstm[0]["w_hh_t"].shape[0]
    V = params["linear_w_t"].shape[1]

    IP = _round_up(E, 128)       # layer-0 input width only
    HP = _round_up(H, 128)
    VP = _round_up(V, 128)

    # Layer 0 input weights, padded to (IP, 4HP).
    w_ih0 = _pad_gate_dim(lstm[0]["w_ih_t"], H, HP)
    w_ih0 = jnp.pad(w_ih0, ((0, IP - E), (0, 0)))

    wih_rest, whh, b = [], [], []
    for li, p in enumerate(lstm):
        if li > 0:
            w_in = _pad_gate_dim(p["w_ih_t"], H, HP)                  # (H, 4HP)
            wih_rest.append(jnp.pad(w_in, ((0, HP - H), (0, 0))))     # (HP, 4HP)
        w_h = _pad_gate_dim(p["w_hh_t"], H, HP)                       # (H, 4HP)
        whh.append(jnp.pad(w_h, ((0, HP - H), (0, 0))))               # (HP, 4HP)
        b.append(_pad_gate_dim(p["bias"], H, HP).reshape(1, 4 * HP))

    if not wih_rest:  # single-layer model: dummy block, never read by kernel
        wih_rest.append(jnp.zeros((HP, 4 * HP), jnp.float32))

    return {
        "embed": params["embed"],
        "w_ih0": w_ih0.astype(jnp.bfloat16),                          # (IP, 4HP)
        "wih_rest": jnp.stack(wih_rest).astype(jnp.bfloat16),         # (max(L-1,1), HP, 4HP)
        "whh": jnp.stack(whh).astype(jnp.bfloat16),                   # (L, HP, 4HP)
        "b": jnp.stack(b),                                            # (L, 1, 4HP) f32
        "w_lin": jnp.pad(params["linear_w_t"],
                         ((0, HP - H), (0, VP - V))).astype(jnp.bfloat16),  # (HP, VP)
        "b_lin": jnp.pad(params["linear_b"], (0, VP - V)).reshape(1, VP),   # (1, VP) f32
    }


def _recurrence_vmem_limit(T, BB, IP, HP, L):
    """Explicit scoped-VMEM request (double-buffered blocks + weights + scratch)."""
    H4 = 4 * HP
    need = (
        2 * T * BB * IP * 2                     # x block, double-buffered, bf16
        + 2 * T * BB * HP * 2                   # out block, double-buffered, bf16
        + 2 * (IP * H4 * 2 + max(L - 1, 1) * HP * H4 * 2
               + L * HP * H4 * 2 + L * H4 * 4)  # weights (+buffering headroom)
        + T * BB * H4 * 2 + T * BB * HP * 2     # gates + hidden scratch (bf16)
        + 2 * BB * HP * 4                       # h/c state (f32)
    )
    return int(min(64 * 1024 * 1024, max(16 * 1024 * 1024, 2 * need)))


# ----------------------------------------------------------------------------
# Forward pass
# ----------------------------------------------------------------------------
@jax.jit
def decoder_rnn_forward(packed, features, captions):
    """features: (B, E) f32, captions: (T_cap, B) int32 -> (T_cap+1, B, V) f32."""
    emb_tbl = packed["embed"]
    V, E = emb_tbl.shape
    IP = packed["w_ih0"].shape[0]
    L, HP, H4 = packed["whh"].shape
    VP = packed["w_lin"].shape[1]

    # Embedding lookup + feature concat (plain JAX glue).
    # TODO(synk): nn.Dropout(0.5) applied with eval semantics (identity);
    # training-mode random masking not reproduced.
    # TODO(synk): embedding gather could move in-kernel via scalar prefetch to
    # save one HBM round trip of the activation sequence.
    emb = jnp.take(emb_tbl, captions, axis=0)                     # (T_cap, B, E)
    x = jnp.concatenate([features[None, :, :], emb], axis=0)      # (T, B, E)
    T, B, _ = x.shape

    BB = 8                                  # sublane-aligned batch block
    BP = _round_up(B, BB)
    NB = BP // BB

    # bf16 activations: the kernel only ever consumes them as bf16 MXU operands.
    x = jnp.pad(x, ((0, 0), (0, BP - B), (0, IP - E))).astype(jnp.bfloat16)
    x_blocks = x.reshape(T, NB, BB, IP).transpose(1, 0, 2, 3).reshape(NB, T * BB, IP)

    # (1) Fused stacked-LSTM recurrence, one batch block per grid step
    #     ("parallel" -> both v7x TensorCores when NB >= 2).
    hid_blocks = pl.pallas_call(
        _lstm_stack_kernel,
        out_shape=jax.ShapeDtypeStruct((NB, T * BB, HP), jnp.bfloat16),
        grid=(NB,),
        in_specs=[
            pl.BlockSpec((None, T * BB, IP), lambda nb: (nb, 0, 0)),
            pl.BlockSpec(packed["w_ih0"].shape, lambda nb: (0, 0)),
            pl.BlockSpec(packed["wih_rest"].shape, lambda nb: (0, 0, 0)),
            pl.BlockSpec(packed["whh"].shape, lambda nb: (0, 0, 0)),
            pl.BlockSpec(packed["b"].shape, lambda nb: (0, 0, 0)),
        ],
        out_specs=pl.BlockSpec((None, T * BB, HP), lambda nb: (nb, 0, 0)),
        scratch_shapes=[
            pltpu.VMEM((T * BB, HP), jnp.bfloat16),   # current layer hidden sequence
            pltpu.VMEM((T * BB, H4), jnp.bfloat16),   # hoisted input-side gates
            pltpu.VMEM((BB, HP), jnp.float32),        # h state
            pltpu.VMEM((BB, HP), jnp.float32),        # c state
        ],
        compiler_params=pltpu.CompilerParams(
            dimension_semantics=("parallel",),
            vmem_limit_bytes=_recurrence_vmem_limit(T, BB, IP, HP, L)),
    )(x_blocks, packed["w_ih0"], packed["wih_rest"], packed["whh"], packed["b"])

    # (2) Tiled vocab projection: f32 logits are produced tile-by-tile with
    #     lane-dense stores; never held fully VMEM-resident.
    rows = NB * T * BB
    hid2d = hid_blocks.reshape(rows, HP)
    tm = T * BB
    tn = 512 if VP % 512 == 0 else (256 if VP % 256 == 0 else 128)
    logits = pl.pallas_call(
        _proj_kernel,
        out_shape=jax.ShapeDtypeStruct((rows, VP), jnp.float32),
        grid=(rows // tm, VP // tn),
        in_specs=[
            pl.BlockSpec((tm, HP), lambda i, j: (i, 0)),
            pl.BlockSpec((HP, tn), lambda i, j: (0, j)),
            pl.BlockSpec((1, tn), lambda i, j: (0, j)),
        ],
        out_specs=pl.BlockSpec((tm, tn), lambda i, j: (i, j)),
        compiler_params=pltpu.CompilerParams(
            dimension_semantics=("parallel", "parallel")),
    )(hid2d, packed["w_lin"], packed["b_lin"])

    out = logits.reshape(NB, T, BB, VP).transpose(1, 0, 2, 3).reshape(T, BP, VP)
    return out[:, :B, :V]


def decoder_rnn_reference(params, features, captions):
    """Pure-JAX f32 reference (matches nn.LSTM semantics) for validation."""
    emb = jnp.take(params["embed"], captions, axis=0)
    x = jnp.concatenate([features[None, :, :], emb], axis=0)
    B = x.shape[1]
    H = params["lstm"][0]["w_hh_t"].shape[0]
    for lp in params["lstm"]:
        def step(carry, xt, lp=lp):
            h, c = carry
            gates = xt @ lp["w_ih_t"] + h @ lp["w_hh_t"] + lp["bias"]
            i, f, g, o = jnp.split(gates, 4, axis=-1)
            c = jax.nn.sigmoid(f) * c + jax.nn.sigmoid(i) * jnp.tanh(g)
            h = jax.nn.sigmoid(o) * jnp.tanh(c)
            return (h, c), h
        zeros = jnp.zeros((B, H), jnp.float32)
        _, x = lax.scan(step, (zeros, zeros), x)
    return x @ params["linear_w_t"] + params["linear_b"]


if __name__ == "__main__":
    embed_size = 32
    hidden_size = 32
    vocab_size = 128
    num_layers = 2
    seq_len = 8       # caption length -> total sequence length 9 with image feature
    batch = 4

    key = jax.random.PRNGKey(0)
    k_param, k_feat, k_cap = jax.random.split(key, 3)

    params = init_params(k_param, embed_size, hidden_size, vocab_size, num_layers)
    packed = pack_params(params)
    features = jax.random.normal(k_feat, (batch, embed_size), jnp.float32)
    captions = jax.random.randint(k_cap, (seq_len, batch), 0, vocab_size, jnp.int32)

    outputs = decoder_rnn_forward(packed, features, captions)
    jax.block_until_ready(outputs)

    assert outputs.shape == (seq_len + 1, batch, vocab_size), outputs.shape
    assert outputs.dtype == jnp.float32

    ref = decoder_rnn_reference(params, features, captions)
    max_err = float(jnp.max(jnp.abs(outputs - ref)))
    assert max_err < 5e-2, f"max abs error vs f32 reference: {max_err}"

    print("KERNEL_OK")
</pallas_src>

<mosaic_0001>
module attributes {stable_mosaic.version = 11 : i64} {
  func.func @_proj_kernel(%arg0: i32, %arg1: i32, %arg2: memref<72x128xbf16, #tpu.memory_space<vmem>>, %arg3: memref<128x128xbf16, #tpu.memory_space<vmem>>, %arg4: memref<1x128xf32, #tpu.memory_space<vmem>>, %arg5: memref<72x128xf32, #tpu.memory_space<vmem>>) attributes {dimension_semantics = [#tpu.dimension_semantics<parallel>, #tpu.dimension_semantics<parallel>], iteration_bounds = array<i64: 1, 1>, scalar_prefetch = 0 : i64, scratch_operands = 0 : i64, tpu.core_type = #tpu.core_type<tc>, window_params = [{transform_indices = @transform_0, window_bounds = array<i64: 72, 128>}, {transform_indices = @transform_1, window_bounds = array<i64: 128, 128>}, {transform_indices = @transform_2, window_bounds = array<i64: 1, 128>}, {transform_indices = @transform_3, window_bounds = array<i64: 72, 128>}]} {
    %c0 = arith.constant 0 : index
    %c0_0 = arith.constant 0 : index
    %0 = vector.load %arg2[%c0, %c0_0] : memref<72x128xbf16, #tpu.memory_space<vmem>>, vector<72x128xbf16>
    %c0_1 = arith.constant 0 : index
    %c0_2 = arith.constant 0 : index
    %1 = vector.load %arg3[%c0_1, %c0_2] : memref<128x128xbf16, #tpu.memory_space<vmem>>, vector<128x128xbf16>
    %cst = arith.constant dense<0.000000e+00> : vector<72x128xf32>
    %2 = tpu.matmul %0, %1, %cst {dimension_numbers = #tpu.dot_dimension_numbers<[1], [0], [0], [1], [0, 0, 1, 1], [], []>} : vector<72x128xbf16>, vector<128x128xbf16>, vector<72x128xf32> -> vector<72x128xf32>
    %c0_3 = arith.constant 0 : index
    %c0_4 = arith.constant 0 : index
    %3 = vector.load %arg4[%c0_3, %c0_4] : memref<1x128xf32, #tpu.memory_space<vmem>>, vector<1x128xf32>
    %4 = vector.broadcast %3 : vector<1x128xf32> to vector<72x128xf32>
    %5 = arith.addf %2, %4 : vector<72x128xf32>
    %c0_5 = arith.constant 0 : index
    %c0_6 = arith.constant 0 : index
    %6 = vector.load %arg5[%c0_5, %c0_6] : memref<72x128xf32, #tpu.memory_space<vmem>>, vector<72x128xf32>
    tpu.vector_store %arg5[%c0_5, %c0_6], %5 {strides = array<i32>} : memref<72x128xf32, #tpu.memory_space<vmem>>, vector<72x128xf32>,
    return
  }
  func.func @transform_0(%arg0: i32, %arg1: i32) -> (i32, i32) {
    %c0_i32 = arith.constant 0 : i32
    %c0_i32_0 = arith.constant 0 : i32
    return %arg0, %c0_i32 : i32, i32
  }
  func.func @transform_1(%arg0: i32, %arg1: i32) -> (i32, i32) {
    %c0_i32 = arith.constant 0 : i32
    %c0_i32_0 = arith.constant 0 : i32
    return %c0_i32, %arg1 : i32, i32
  }
  func.func @transform_2(%arg0: i32, %arg1: i32) -> (i32, i32) {
    %c0_i32 = arith.constant 0 : i32
    %c0_i32_0 = arith.constant 0 : i32
    return %c0_i32, %arg1 : i32, i32
  }
  func.func @transform_3(%arg0: i32, %arg1: i32) -> (i32, i32) {
    %c0_i32 = arith.constant 0 : i32
    return %arg0, %arg1 : i32, i32
  }
}

module attributes {stable_mosaic.version = 11 : i64} {
  func.func @_lstm_stack_kernel(%arg0: i32, %arg1: memref<1x72x128xbf16, #tpu.memory_space<vmem>>, %arg2: memref<128x512xbf16, #tpu.memory_space<vmem>>, %arg3: memref<1x128x512xbf16, #tpu.memory_space<vmem>>, %arg4: memref<2x128x512xbf16, #tpu.memory_space<vmem>>, %arg5: memref<2x1x512xf32, #tpu.memory_space<vmem>>, %arg6: memref<1x72x128xbf16, #tpu.memory_space<vmem>>, %arg7: memref<72x128xbf16, #tpu.memory_space<vmem>>, %arg8: memref<72x512xbf16, #tpu.memory_space<vmem>>, %arg9: memref<8x128xf32, #tpu.memory_space<vmem>>, %arg10: memref<8x128xf32, #tpu.memory_space<vmem>>) attributes {dimension_semantics = [#tpu.dimension_semantics<parallel>], iteration_bounds = array<i64: 1>, scalar_prefetch = 0 : i64, scratch_operands = 4 : i64, tpu.core_type = #tpu.core_type<tc>, window_params = [{transform_indices = @transform_0, window_bounds = array<i64: 1, 72, 128>}, {pipeline_mode = #tpu.pipeline_mode<synchronous>, transform_indices = @transform_1, window_bounds = array<i64: 128, 512>}, {pipeline_mode = #tpu.pipeline_mode<synchronous>, transform_indices = @transform_2, window_bounds = array<i64: 1, 128, 512>}, {pipeline_mode = #tpu.pipeline_mode<synchronous>, transform_indices = @transform_3, window_bounds = array<i64: 2, 128, 512>}, {pipeline_mode = #tpu.pipeline_mode<synchronous>, transform_indices = @transform_4, window_bounds = array<i64: 2, 1, 512>}, {transform_indices = @transform_5, window_bounds = array<i64: 1, 72, 128>}]} {
    %c0 = arith.constant 0 : index
    %c0_0 = arith.constant 0 : index
    %c0_1 = arith.constant 0 : index
    %0 = vector.load %arg1[%c0, %c0_0, %c0_1] : memref<1x72x128xbf16, #tpu.memory_space<vmem>>, vector<1x72x128xbf16>
    %1 = vector.shape_cast %0 : vector<1x72x128xbf16> to vector<72x128xbf16>
    %c0_2 = arith.constant 0 : index
    %c0_3 = arith.constant 0 : index
    %2 = vector.load %arg2[%c0_2, %c0_3] : memref<128x512xbf16, #tpu.memory_space<vmem>>, vector<128x512xbf16>
    %cst = arith.constant dense<0.000000e+00> : vector<72x512xf32>
    %3 = tpu.matmul %1, %2, %cst {dimension_numbers = #tpu.dot_dimension_numbers<[1], [0], [0], [1], [0, 0, 1, 1], [], []>} : vector<72x128xbf16>, vector<128x512xbf16>, vector<72x512xf32> -> vector<72x512xf32>
    %c0_4 = arith.constant 0 : index
    %c0_5 = arith.constant 0 : index
    %c0_6 = arith.constant 0 : index
    %4 = vector.load %arg5[%c0_4, %c0_5, %c0_6] : memref<2x1x512xf32, #tpu.memory_space<vmem>>, vector<1x1x512xf32>
    %5 = vector.shape_cast %4 : vector<1x1x512xf32> to vector<1x512xf32>
    %6 = vector.broadcast %5 : vector<1x512xf32> to vector<72x512xf32>
    %7 = arith.addf %3, %6 : vector<72x512xf32>
    %8 = arith.truncf %7 : vector<72x512xf32> to vector<72x512xbf16>
    %c0_7 = arith.constant 0 : index
    %c0_8 = arith.constant 0 : index
    %9 = vector.load %arg8[%c0_7, %c0_8] : memref<72x512xbf16, #tpu.memory_space<vmem>>, vector<72x512xbf16>
    tpu.vector_store %arg8[%c0_7, %c0_8], %8 {strides = array<i32>} : memref<72x512xbf16, #tpu.memory_space<vmem>>, vector<72x512xbf16>,
    %c0_9 = arith.constant 0 : index
    %c0_10 = arith.constant 0 : index
    %c0_11 = arith.constant 0 : index
    %10 = vector.load %arg4[%c0_9, %c0_10, %c0_11] : memref<2x128x512xbf16, #tpu.memory_space<vmem>>, vector<1x128x512xbf16>
    %11 = vector.shape_cast %10 : vector<1x128x512xbf16> to vector<128x512xbf16>
    %cst_12 = arith.constant 0.000000e+00 : f32
    %12 = vector.broadcast %cst_12 : f32 to vector<8x128xf32>
    %c0_13 = arith.constant 0 : index
    %c0_14 = arith.constant 0 : index
    %13 = vector.load %arg9[%c0_13, %c0_14] : memref<8x128xf32, #tpu.memory_space<vmem>>, vector<8x128xf32>
    tpu.vector_store %arg9[%c0_13, %c0_14], %12 {strides = array<i32>} : memref<8x128xf32, #tpu.memory_space<vmem>>, vector<8x128xf32>,
    %cst_15 = arith.constant 0.000000e+00 : f32
    %14 = vector.broadcast %cst_15 : f32 to vector<8x128xf32>
    %c0_16 = arith.constant 0 : index
    %c0_17 = arith.constant 0 : index
    %15 = vector.load %arg10[%c0_16, %c0_17] : memref<8x128xf32, #tpu.memory_space<vmem>>, vector<8x128xf32>
    tpu.vector_store %arg10[%c0_16, %c0_17], %14 {strides = array<i32>} : memref<8x128xf32, #tpu.memory_space<vmem>>, vector<8x128xf32>,
    %c0_i32 = arith.constant 0 : i32
    %c8_i32 = arith.constant 8 : i32
    %16 = arith.muli %c0_i32, %c8_i32 : i32
    %17 = tpu.assume_multiple %16, 8 : i32
    %18 = arith.index_cast %17 : i32 to index
    %c0_18 = arith.constant 0 : index
    %19 = vector.load %arg8[%18, %c0_18] : memref<72x512xbf16, #tpu.memory_space<vmem>>, vector<8x512xbf16>
    %20 = arith.extf %19 : vector<8x512xbf16> to vector<8x512xf32>
    %c0_19 = arith.constant 0 : index
    %c0_20 = arith.constant 0 : index
    %21 = vector.load %arg9[%c0_19, %c0_20] : memref<8x128xf32, #tpu.memory_space<vmem>>, vector<8x128xf32>
    %22 = arith.truncf %21 : vector<8x128xf32> to vector<8x128xbf16>
    %cst_21 = arith.constant dense<0.000000e+00> : vector<8x512xf32>
    %23 = tpu.matmul %22, %11, %cst_21 {dimension_numbers = #tpu.dot_dimension_numbers<[1], [0], [0], [1], [0, 0, 1, 1], [], []>} : vector<8x128xbf16>, vector<128x512xbf16>, vector<8x512xf32> -> vector<8x512xf32>
    %24 = arith.addf %20, %23 : vector<8x512xf32>
    %25 = vector.extract_strided_slice %24 {offsets = [0, 0], sizes = [8, 128], strides = [1, 1]} : vector<8x512xf32> to vector<8x128xf32>
    %26 = arith.negf %25 : vector<8x128xf32>
    %27 = math.exp %26 : vector<8x128xf32>
    %cst_22 = arith.constant 1.000000e+00 : f32
    %28 = vector.broadcast %cst_22 : f32 to vector<8x128xf32>
    %29 = arith.addf %28, %27 : vector<8x128xf32>
    %30 = arith.divf %28, %29 : vector<8x128xf32>
    %31 = vector.extract_strided_slice %24 {offsets = [0, 128], sizes = [8, 128], strides = [1, 1]} : vector<8x512xf32> to vector<8x128xf32>
    %32 = arith.negf %31 : vector<8x128xf32>
    %33 = math.exp %32 : vector<8x128xf32>
    %cst_23 = arith.constant 1.000000e+00 : f32
    %34 = vector.broadcast %cst_23 : f32 to vector<8x128xf32>
    %35 = arith.addf %34, %33 : vector<8x128xf32>
    %36 = arith.divf %34, %35 : vector<8x128xf32>
    %37 = vector.extract_strided_slice %24 {offsets = [0, 256], sizes = [8, 128], strides = [1, 1]} : vector<8x512xf32> to vector<8x128xf32>
    %38 = math.tanh %37 : vector<8x128xf32>
    %39 = vector.extract_strided_slice %24 {offsets = [0, 384], sizes = [8, 128], strides = [1, 1]} : vector<8x512xf32> to vector<8x128xf32>
    %40 = arith.negf %39 : vector<8x128xf32>
    %41 = math.exp %40 : vector<8x128xf32>
    %cst_24 = arith.constant 1.000000e+00 : f32
    %42 = vector.broadcast %cst_24 : f32 to vector<8x128xf32>
    %43 = arith.addf %42, %41 : vector<8x128xf32>
    %44 = arith.divf %42, %43 : vector<8x128xf32>
    %c0_25 = arith.constant 0 : index
    %c0_26 = arith.constant 0 : index
    %45 = vector.load %arg10[%c0_25, %c0_26] : memref<8x128xf32, #tpu.memory_space<vmem>>, vector<8x128xf32>
    %46 = arith.mulf %36, %45 : vector<8x128xf32>
    %47 = arith.mulf %30, %38 : vector<8x128xf32>
    %48 = arith.addf %46, %47 : vector<8x128xf32>
    %49 = math.tanh %48 : vector<8x128xf32>
    %50 = arith.mulf %44, %49 : vector<8x128xf32>
    %c0_27 = arith.constant 0 : index
    %c0_28 = arith.constant 0 : index
    %51 = vector.load %arg10[%c0_27, %c0_28] : memref<8x128xf32, #tpu.memory_space<vmem>>, vector<8x128xf32>
    tpu.vector_store %arg10[%c0_27, %c0_28], %48 {strides = array<i32>} : memref<8x128xf32, #tpu.memory_space<vmem>>, vector<8x128xf32>,
    %c0_29 = arith.constant 0 : index
    %c0_30 = arith.constant 0 : index
    %52 = vector.load %arg9[%c0_29, %c0_30] : memref<8x128xf32, #tpu.memory_space<vmem>>, vector<8x128xf32>
    tpu.vector_store %arg9[%c0_29, %c0_30], %50 {strides = array<i32>} : memref<8x128xf32, #tpu.memory_space<vmem>>, vector<8x128xf32>,
    %53 = arith.truncf %50 : vector<8x128xf32> to vector<8x128xbf16>
    %54 = arith.index_cast %17 : i32 to index
    %c0_31 = arith.constant 0 : index
    %55 = vector.load %arg7[%54, %c0_31] : memref<72x128xbf16, #tpu.memory_space<vmem>>, vector<8x128xbf16>
    tpu.vector_store %arg7[%54, %c0_31], %53 {strides = array<i32>} : memref<72x128xbf16, #tpu.memory_space<vmem>>, vector<8x128xbf16>,
    %c1_i32 = arith.constant 1 : i32
    %c8_i32_32 = arith.constant 8 : i32
    %56 = arith.muli %c1_i32, %c8_i32_32 : i32
    %57 = tpu.assume_multiple %56, 8 : i32
    %58 = arith.index_cast %57 : i32 to index
    %c0_33 = arith.constant 0 : index
    %59 = vector.load %arg8[%58, %c0_33] : memref<72x512xbf16, #tpu.memory_space<vmem>>, vector<8x512xbf16>
    %60 = arith.extf %59 : vector<8x512xbf16> to vector<8x512xf32>
    %c0_34 = arith.constant 0 : index
    %c0_35 = arith.constant 0 : index
    %61 = vector.load %arg9[%c0_34, %c0_35] : memref<8x128xf32, #tpu.memory_space<vmem>>, vector<8x128xf32>
    %62 = arith.truncf %61 : vector<8x128xf32> to vector<8x128xbf16>
    %cst_36 = arith.constant dense<0.000000e+00> : vector<8x512xf32>
    %63 = tpu.matmul %62, %11, %cst_36 {dimension_numbers = #tpu.dot_dimension_numbers<[1], [0], [0], [1], [0, 0, 1, 1], [], []>} : vector<8x128xbf16>, vector<128x512xbf16>, vector<8x512xf32> -> vector<8x512xf32>
    %64 = arith.addf %60, %63 : vector<8x512xf32>
    %65 = vector.extract_strided_slice %64 {offsets = [0, 0], sizes = [8, 128], strides = [1, 1]} : vector<8x512xf32> to vector<8x128xf32>
    %66 = arith.negf %65 : vector<8x128xf32>
    %67 = math.exp %66 : vector<8x128xf32>
    %cst_37 = arith.constant 1.000000e+00 : f32
    %68 = vector.broadcast %cst_37 : f32 to vector<8x128xf32>
    %69 = arith.addf %68, %67 : vector<8x128xf32>
    %70 = arith.divf %68, %69 : vector<8x128xf32>
    %71 = vector.extract_strided_slice %64 {offsets = [0, 128], sizes = [8, 128], strides = [1, 1]} : vector<8x512xf32> to vector<8x128xf32>
    %72 = arith.negf %71 : vector<8x128xf32>
    %73 = math.exp %72 : vector<8x128xf32>
    %cst_38 = arith.constant 1.000000e+00 : f32
    %74 = vector.broadcast %cst_38 : f32 to vector<8x128xf32>
    %75 = arith.addf %74, %73 : vector<8x128xf32>
    %76 = arith.divf %74, %75 : vector<8x128xf32>
    %77 = vector.extract_strided_slice %64 {offsets = [0, 256], sizes = [8, 128], strides = [1, 1]} : vector<8x512xf32> to vector<8x128xf32>
    %78 = math.tanh %77 : vector<8x128xf32>
    %79 = vector.extract_strided_slice %64 {offsets = [0, 384], sizes = [8, 128], strides = [1, 1]} : vector<8x512xf32> to vector<8x128xf32>
    %80 = arith.negf %79 : vector<8x128xf32>
    %81 = math.exp %80 : vector<8x128xf32>
    %cst_39 = arith.constant 1.000000e+00 : f32
    %82 = vector.broadcast %cst_39 : f32 to vector<8x128xf32>
    %83 = arith.addf %82, %81 : vector<8x128xf32>
    %84 = arith.divf %82, %83 : vector<8x128xf32>
    %c0_40 = arith.constant 0 : index
    %c0_41 = arith.constant 0 : index
    %85 = vector.load %arg10[%c0_40, %c0_41] : memref<8x128xf32, #tpu.memory_space<vmem>>, vector<8x128xf32>
    %86 = arith.mulf %76, %85 : vector<8x128xf32>
    %87 = arith.mulf %70, %78 : vector<8x128xf32>
    %88 = arith.addf %86, %87 : vector<8x128xf32>
    %89 = math.tanh %88 : vector<8x128xf32>
    %90 = arith.mulf %84, %89 : vector<8x128xf32>
    %c0_42 = arith.constant 0 : index
    %c0_43 = arith.constant 0 : index
    %91 = vector.load %arg10[%c0_42, %c0_43] : memref<8x128xf32, #tpu.memory_space<vmem>>, vector<8x128xf32>
    tpu.vector_store %arg10[%c0_42, %c0_43], %88 {strides = array<i32>} : memref<8x128xf32, #tpu.memory_space<vmem>>, vector<8x128xf32>,
    %c0_44 = arith.constant 0 : index
    %c0_45 = arith.constant 0 : index
    %92 = vector.load %arg9[%c0_44, %c0_45] : memref<8x128xf32, #tpu.memory_space<vmem>>, vector<8x128xf32>
    tpu.vector_store %arg9[%c0_44, %c0_45], %90 {strides = array<i32>} : memref<8x128xf32, #tpu.memory_space<vmem>>, vector<8x128xf32>,
    %93 = arith.truncf %90 : vector<8x128xf32> to vector<8x128xbf16>
    %94 = arith.index_cast %57 : i32 to index
    %c0_46 = arith.constant 0 : index
    %95 = vector.load %arg7[%94, %c0_46] : memref<72x128xbf16, #tpu.memory_space<vmem>>, vector<8x128xbf16>
    tpu.vector_store %arg7[%94, %c0_46], %93 {strides = array<i32>} : memref<72x128xbf16, #tpu.memory_space<vmem>>, vector<8x128xbf16>,
    %c2_i32 = arith.constant 2 : i32
    %c8_i32_47 = arith.constant 8 : i32
    %96 = arith.muli %c2_i32, %c8_i32_47 : i32
    %97 = tpu.assume_multiple %96, 8 : i32
    %98 = arith.index_cast %97 : i32 to index
    %c0_48 = arith.constant 0 : index
    %99 = vector.load %arg8[%98, %c0_48] : memref<72x512xbf16, #tpu.memory_space<vmem>>, vector<8x512xbf16>
    %100 = arith.extf %99 : vector<8x512xbf16> to vector<8x512xf32>
    %c0_49 = arith.constant 0 : index
    %c0_50 = arith.constant 0 : index
    %101 = vector.load %arg9[%c0_49, %c0_50] : memref<8x128xf32, #tpu.memory_space<vmem>>, vector<8x128xf32>
    %102 = arith.truncf %101 : vector<8x128xf32> to vector<8x128xbf16>
    %cst_51 = arith.constant dense<0.000000e+00> : vector<8x512xf32>
    %103 = tpu.matmul %102, %11, %cst_51 {dimension_numbers = #tpu.dot_dimension_numbers<[1], [0], [0], [1], [0, 0, 1, 1], [], []>} : vector<8x128xbf16>, vector<128x512xbf16>, vector<8x512xf32> -> vector<8x512xf32>
    %104 = arith.addf %100, %103 : vector<8x512xf32>
    %105 = vector.extract_strided_slice %104 {offsets = [0, 0], sizes = [8, 128], strides = [1, 1]} : vector<8x512xf32> to vector<8x128xf32>
    %106 = arith.negf %105 : vector<8x128xf32>
    %107 = math.exp %106 : vector<8x128xf32>
    %cst_52 = arith.constant 1.000000e+00 : f32
    %108 = vector.broadcast %cst_52 : f32 to vector<8x128xf32>
    %109 = arith.addf %108, %107 : vector<8x128xf32>
    %110 = arith.divf %108, %109 : vector<8x128xf32>
    %111 = vector.extract_strided_slice %104 {offsets = [0, 128], sizes = [8, 128], strides = [1, 1]} : vector<8x512xf32> to vector<8x128xf32>
    %112 = arith.negf %111 : vector<8x128xf32>
    %113 = math.exp %112 : vector<8x128xf32>
    %cst_53 = arith.constant 1.000000e+00 : f32
    %114 = vector.broadcast %cst_53 : f32 to vector<8x128xf32>
    %115 = arith.addf %114, %113 : vector<8x128xf32>
    %116 = arith.divf %114, %115 : vector<8x128xf32>
    %117 = vector.extract_strided_slice %104 {offsets = [0, 256], sizes = [8, 128], strides = [1, 1]} : vector<8x512xf32> to vector<8x128xf32>
    %118 = math.tanh %117 : vector<8x128xf32>
    %119 = vector.extract_strided_slice %104 {offsets = [0, 384], sizes = [8, 128], strides = [1, 1]} : vector<8x512xf32> to vector<8x128xf32>
    %120 = arith.negf %119 : vector<8x128xf32>
    %121 = math.exp %120 : vector<8x128xf32>
    %cst_54 = arith.constant 1.000000e+00 : f32
    %122 = vector.broadcast %cst_54 : f32 to vector<8x128xf32>
    %123 = arith.addf %122, %121 : vector<8x128xf32>
    %124 = arith.divf %122, %123 : vector<8x128xf32>
    %c0_55 = arith.constant 0 : index
    %c0_56 = arith.constant 0 : index
    %125 = vector.load %arg10[%c0_55, %c0_56] : memref<8x128xf32, #tpu.memory_space<vmem>>, vector<8x128xf32>
    %126 = arith.mulf %116, %125 : vector<8x128xf32>
    %127 = arith.mulf %110, %118 : vector<8x128xf32>
    %128 = arith.addf %126, %127 : vector<8x128xf32>
    %129 = math.tanh %128 : vector<8x128xf32>
    %130 = arith.mulf %124, %129 : vector<8x128xf32>
    %c0_57 = arith.constant 0 : index
    %c0_58 = arith.constant 0 : index
    %131 = vector.load %arg10[%c0_57, %c0_58] : memref<8x128xf32, #tpu.memory_space<vmem>>, vector<8x128xf32>
    tpu.vector_store %arg10[%c0_57, %c0_58], %128 {strides = array<i32>} : memref<8x128xf32, #tpu.memory_space<vmem>>, vector<8x128xf32>,
    %c0_59 = arith.constant 0 : index
    %c0_60 = arith.constant 0 : index
    %132 = vector.load %arg9[%c0_59, %c0_60] : memref<8x128xf32, #tpu.memory_space<vmem>>, vector<8x128xf32>
    tpu.vector_store %arg9[%c0_59, %c0_60], %130 {strides = array<i32>} : memref<8x128xf32, #tpu.memory_space<vmem>>, vector<8x128xf32>,
    %133 = arith.truncf %130 : vector<8x128xf32> to vector<8x128xbf16>
    %134 = arith.index_cast %97 : i32 to index
    %c0_61 = arith.constant 0 : index
    %135 = vector.load %arg7[%134, %c0_61] : memref<72x128xbf16, #tpu.memory_space<vmem>>, vector<8x128xbf16>
    tpu.vector_store %arg7[%134, %c0_61], %133 {strides = array<i32>} : memref<72x128xbf16, #tpu.memory_space<vmem>>, vector<8x128xbf16>,
    %c3_i32 = arith.constant 3 : i32
    %c8_i32_62 = arith.constant 8 : i32
    %136 = arith.muli %c3_i32, %c8_i32_62 : i32
    %137 = tpu.assume_multiple %136, 8 : i32
    %138 = arith.index_cast %137 : i32 to index
    %c0_63 = arith.constant 0 : index
    %139 = vector.load %arg8[%138, %c0_63] : memref<72x512xbf16, #tpu.memory_space<vmem>>, vector<8x512xbf16>
    %140 = arith.extf %139 : vector<8x512xbf16> to vector<8x512xf32>
    %c0_64 = arith.constant 0 : index
    %c0_65 = arith.constant 0 : index
    %141 = vector.load %arg9[%c0_64, %c0_65] : memref<8x128xf32, #tpu.memory_space<vmem>>, vector<8x128xf32>
    %142 = arith.truncf %141 : vector<8x128xf32> to vector<8x128xbf16>
    %cst_66 = arith.constant dense<0.000000e+00> : vector<8x512xf32>
    %143 = tpu.matmul %142, %11, %cst_66 {dimension_numbers = #tpu.dot_dimension_numbers<[1], [0], [0], [1], [0, 0, 1, 1], [], []>} : vector<8x128xbf16>, vector<128x512xbf16>, vector<8x512xf32> -> vector<8x512xf32>
    %144 = arith.addf %140, %143 : vector<8x512xf32>
    %145 = vector.extract_strided_slice %144 {offsets = [0, 0], sizes = [8, 128], strides = [1, 1]} : vector<8x512xf32> to vector<8x128xf32>
    %146 = arith.negf %145 : vector<8x128xf32>
    %147 = math.exp %146 : vector<8x128xf32>
    %cst_67 = arith.constant 1.000000e+00 : f32
    %148 = vector.broadcast %cst_67 : f32 to vector<8x128xf32>
    %149 = arith.addf %148, %147 : vector<8x128xf32>
    %150 = arith.divf %148, %149 : vector<8x128xf32>
    %151 = vector.extract_strided_slice %144 {offsets = [0, 128], sizes = [8, 128], strides = [1, 1]} : vector<8x512xf32> to vector<8x128xf32>
    %152 = arith.negf %151 : vector<8x128xf32>
    %153 = math.exp %152 : vector<8x128xf32>
    %cst_68 = arith.constant 1.000000e+00 : f32
    %154 = vector.broadcast %cst_68 : f32 to vector<8x128xf32>
    %155 = arith.addf %154, %153 : vector<8x128xf32>
    %156 = arith.divf %154, %155 : vector<8x128xf32>
    %157 = vector.extract_strided_slice %144 {offsets = [0, 256], sizes = [8, 128], strides = [1, 1]} : vector<8x512xf32> to vector<8x128xf32>
    %158 = math.tanh %157 : vector<8x128xf32>
    %159 = vector.extract_strided_slice %144 {offsets = [0, 384], sizes = [8, 128], strides = [1, 1]} : vector<8x512xf32> to vector<8x128xf32>
    %160 = arith.negf %159 : vector<8x128xf32>
    %161 = math.exp %160 : vector<8x128xf32>
    %cst_69 = arith.constant 1.000000e+00 : f32
    %162 = vector.broadcast %cst_69 : f32 to vector<8x128xf32>
    %163 = arith.addf %162, %161 : vector<8x128xf32>
    %164 = arith.divf %162, %163 : vector<8x128xf32>
    %c0_70 = arith.constant 0 : index
    %c0_71 = arith.constant 0 : index
    %165 = vector.load %arg10[%c0_70, %c0_71] : memref<8x128xf32, #tpu.memory_space<vmem>>, vector<8x128xf32>
    %166 = arith.mulf %156, %165 : vector<8x128xf32>
    %167 = arith.mulf %150, %158 : vector<8x128xf32>
    %168 = arith.addf %166, %167 : vector<8x128xf32>
    %169 = math.tanh %168 : vector<8x128xf32>
    %170 = arith.mulf %164, %169 : vector<8x128xf32>
    %c0_72 = arith.constant 0 : index
    %c0_73 = arith.constant 0 : index
    %171 = vector.load %arg10[%c0_72, %c0_73] : memref<8x128xf32, #tpu.memory_space<vmem>>, vector<8x128xf32>
    tpu.vector_store %arg10[%c0_72, %c0_73], %168 {strides = array<i32>} : memref<8x128xf32, #tpu.memory_space<vmem>>, vector<8x128xf32>,
    %c0_74 = arith.constant 0 : index
    %c0_75 = arith.constant 0 : index
    %172 = vector.load %arg9[%c0_74, %c0_75] : memref<8x128xf32, #tpu.memory_space<vmem>>, vector<8x128xf32>
    tpu.vector_store %arg9[%c0_74, %c0_75], %170 {strides = array<i32>} : memref<8x128xf32, #tpu.memory_space<vmem>>, vector<8x128xf32>,
    %173 = arith.truncf %170 : vector<8x128xf32> to vector<8x128xbf16>
    %174 = arith.index_cast %137 : i32 to index
    %c0_76 = arith.constant 0 : index
    %175 = vector.load %arg7[%174, %c0_76] : memref<72x128xbf16, #tpu.memory_space<vmem>>, vector<8x128xbf16>
    tpu.vector_store %arg7[%174, %c0_76], %173 {strides = array<i32>} : memref<72x128xbf16, #tpu.memory_space<vmem>>, vector<8x128xbf16>,
    %c4_i32 = arith.constant 4 : i32
    %c8_i32_77 = arith.constant 8 : i32
    %176 = arith.muli %c4_i32, %c8_i32_77 : i32
    %177 = tpu.assume_multiple %176, 8 : i32
    %178 = arith.index_cast %177 : i32 to index
    %c0_78 = arith.constant 0 : index
    %179 = vector.load %arg8[%178, %c0_78] : memref<72x512xbf16, #tpu.memory_space<vmem>>, vector<8x512xbf16>
    %180 = arith.extf %179 : vector<8x512xbf16> to vector<8x512xf32>
    %c0_79 = arith.constant 0 : index
    %c0_80 = arith.constant 0 : index
    %181 = vector.load %arg9[%c0_79, %c0_80] : memref<8x128xf32, #tpu.memory_space<vmem>>, vector<8x128xf32>
    %182 = arith.truncf %181 : vector<8x128xf32> to vector<8x128xbf16>
    %cst_81 = arith.constant dense<0.000000e+00> : vector<8x512xf32>
    %183 = tpu.matmul %182, %11, %cst_81 {dimension_numbers = #tpu.dot_dimension_numbers<[1], [0], [0], [1], [0, 0, 1, 1], [], []>} : vector<8x128xbf16>, vector<128x512xbf16>, vector<8x512xf32> -> vector<8x512xf32>
    %184 = arith.addf %180, %183 : vector<8x512xf32>
    %185 = vector.extract_strided_slice %184 {offsets = [0, 0], sizes = [8, 128], strides = [1, 1]} : vector<8x512xf32> to vector<8x128xf32>
    %186 = arith.negf %185 : vector<8x128xf32>
    %187 = math.exp %186 : vector<8x128xf32>
    %cst_82 = arith.constant 1.000000e+00 : f32
    %188 = vector.broadcast %cst_82 : f32 to vector<8x128xf32>
    %189 = arith.addf %188, %187 : vector<8x128xf32>
    %190 = arith.divf %188, %189 : vector<8x128xf32>
    %191 = vector.extract_strided_slice %184 {offsets = [0, 128], sizes = [8, 128], strides = [1, 1]} : vector<8x512xf32> to vector<8x128xf32>
    %192 = arith.negf %191 : vector<8x128xf32>
    %193 = math.exp %192 : vector<8x128xf32>
    %cst_83 = arith.constant 1.000000e+00 : f32
    %194 = vector.broadcast %cst_83 : f32 to vector<8x128xf32>
    %195 = arith.addf %194, %193 : vector<8x128xf32>
    %196 = arith.divf %194, %195 : vector<8x128xf32>
    %197 = vector.extract_strided_slice %184 {offsets = [0, 256], sizes = [8, 128], strides = [1, 1]} : vector<8x512xf32> to vector<8x128xf32>
    %198 = math.tanh %197 : vector<8x128xf32>
    %199 = vector.extract_strided_slice %184 {offsets = [0, 384], sizes = [8, 128], strides = [1, 1]} : vector<8x512xf32> to vector<8x128xf32>
    %200 = arith.negf %199 : vector<8x128xf32>
    %201 = math.exp %200 : vector<8x128xf32>
    %cst_84 = arith.constant 1.000000e+00 : f32
    %202 = vector.broadcast %cst_84 : f32 to vector<8x128xf32>
    %203 = arith.addf %202, %201 : vector<8x128xf32>
    %204 = arith.divf %202, %203 : vector<8x128xf32>
    %c0_85 = arith.constant 0 : index
    %c0_86 = arith.constant 0 : index
    %205 = vector.load %arg10[%c0_85, %c0_86] : memref<8x128xf32, #tpu.memory_space<vmem>>, vector<8x128xf32>
    %206 = arith.mulf %196, %205 : vector<8x128xf32>
    %207 = arith.mulf %190, %198 : vector<8x128xf32>
    %208 = arith.addf %206, %207 : vector<8x128xf32>
    %209 = math.tanh %208 : vector<8x128xf32>
    %210 = arith.mulf %204, %209 : vector<8x128xf32>
    %c0_87 = arith.constant 0 : index
    %c0_88 = arith.constant 0 : index
    %211 = vector.load %arg10[%c0_87, %c0_88] : memref<8x128xf32, #tpu.memory_space<vmem>>, vector<8x128xf32>
    tpu.vector_store %arg10[%c0_87, %c0_88], %208 {strides = array<i32>} : memref<8x128xf32, #tpu.memory_space<vmem>>, vector<8x128xf32>,
    %c0_89 = arith.constant 0 : index
    %c0_90 = arith.constant 0 : index
    %212 = vector.load %arg9[%c0_89, %c0_90] : memref<8x128xf32, #tpu.memory_space<vmem>>, vector<8x128xf32>
    tpu.vector_store %arg9[%c0_89, %c0_90], %210 {strides = array<i32>} : memref<8x128xf32, #tpu.memory_space<vmem>>, vector<8x128xf32>,
    %213 = arith.truncf %210 : vector<8x128xf32> to vector<8x128xbf16>
    %214 = arith.index_cast %177 : i32 to index
    %c0_91 = arith.constant 0 : index
    %215 = vector.load %arg7[%214, %c0_91] : memref<72x128xbf16, #tpu.memory_space<vmem>>, vector<8x128xbf16>
    tpu.vector_store %arg7[%214, %c0_91], %213 {strides = array<i32>} : memref<72x128xbf16, #tpu.memory_space<vmem>>, vector<8x128xbf16>,
    %c5_i32 = arith.constant 5 : i32
    %c8_i32_92 = arith.constant 8 : i32
    %216 = arith.muli %c5_i32, %c8_i32_92 : i32
    %217 = tpu.assume_multiple %216, 8 : i32
    %218 = arith.index_cast %217 : i32 to index
    %c0_93 = arith.constant 0 : index
    %219 = vector.load %arg8[%218, %c0_93] : memref<72x512xbf16, #tpu.memory_space<vmem>>, vector<8x512xbf16>
    %220 = arith.extf %219 : vector<8x512xbf16> to vector<8x512xf32>
    %c0_94 = arith.constant 0 : index
    %c0_95 = arith.constant 0 : index
    %221 = vector.load %arg9[%c0_94, %c0_95] : memref<8x128xf32, #tpu.memory_space<vmem>>, vector<8x128xf32>
    %222 = arith.truncf %221 : vector<8x128xf32> to vector<8x128xbf16>
    %cst_96 = arith.constant dense<0.000000e+00> : vector<8x512xf32>
    %223 = tpu.matmul %222, %11, %cst_96 {dimension_numbers = #tpu.dot_dimension_numbers<[1], [0], [0], [1], [0, 0, 1, 1], [], []>} : vector<8x128xbf16>, vector<128x512xbf16>, vector<8x512xf32> -> vector<8x512xf32>
    %224 = arith.addf %220, %223 : vector<8x512xf32>
    %225 = vector.extract_strided_slice %224 {offsets = [0, 0], sizes = [8, 128], strides = [1, 1]} : vector<8x512xf32> to vector<8x128xf32>
    %226 = arith.negf %225 : vector<8x128xf32>
    %227 = math.exp %226 : vector<8x128xf32>
    %cst_97 = arith.constant 1.000000e+00 : f32
    %228 = vector.broadcast %cst_97 : f32 to vector<8x128xf32>
    %229 = arith.addf %228, %227 : vector<8x128xf32>
    %230 = arith.divf %228, %229 : vector<8x128xf32>
    %231 = vector.extract_strided_slice %224 {offsets = [0, 128], sizes = [8, 128], strides = [1, 1]} : vector<8x512xf32> to vector<8x128xf32>
    %232 = arith.negf %231 : vector<8x128xf32>
    %233 = math.exp %232 : vector<8x128xf32>
    %cst_98 = arith.constant 1.000000e+00 : f32
    %234 = vector.broadcast %cst_98 : f32 to vector<8x128xf32>
    %235 = arith.addf %234, %233 : vector<8x128xf32>
    %236 = arith.divf %234, %235 : vector<8x128xf32>
    %237 = vector.extract_strided_slice %224 {offsets = [0, 256], sizes = [8, 128], strides = [1, 1]} : vector<8x512xf32> to vector<8x128xf32>
    %238 = math.tanh %237 : vector<8x128xf32>
    %239 = vector.extract_strided_slice %224 {offsets = [0, 384], sizes = [8, 128], strides = [1, 1]} : vector<8x512xf32> to vector<8x128xf32>
    %240 = arith.negf %239 : vector<8x128xf32>
    %241 = math.exp %240 : vector<8x128xf32>
    %cst_99 = arith.constant 1.000000e+00 : f32
    %242 = vector.broadcast %cst_99 : f32 to vector<8x128xf32>
    %243 = arith.addf %242, %241 : vector<8x128xf32>
    %244 = arith.divf %242, %243 : vector<8x128xf32>
    %c0_100 = arith.constant 0 : index
    %c0_101 = arith.constant 0 : index
    %245 = vector.load %arg10[%c0_100, %c0_101] : memref<8x128xf32, #tpu.memory_space<vmem>>, vector<8x128xf32>
    %246 = arith.mulf %236, %245 : vector<8x128xf32>
    %247 = arith.mulf %230, %238 : vector<8x128xf32>
    %248 = arith.addf %246, %247 : vector<8x128xf32>
    %249 = math.tanh %248 : vector<8x128xf32>
    %250 = arith.mulf %244, %249 : vector<8x128xf32>
    %c0_102 = arith.constant 0 : index
    %c0_103 = arith.constant 0 : index
    %251 = vector.load %arg10[%c0_102, %c0_103] : memref<8x128xf32, #tpu.memory_space<vmem>>, vector<8x128xf32>
    tpu.vector_store %arg10[%c0_102, %c0_103], %248 {strides = array<i32>} : memref<8x128xf32, #tpu.memory_space<vmem>>, vector<8x128xf32>,
    %c0_104 = arith.constant 0 : index
    %c0_105 = arith.constant 0 : index
    %252 = vector.load %arg9[%c0_104, %c0_105] : memref<8x128xf32, #tpu.memory_space<vmem>>, vector<8x128xf32>
    tpu.vector_store %arg9[%c0_104, %c0_105], %250 {strides = array<i32>} : memref<8x128xf32, #tpu.memory_space<vmem>>, vector<8x128xf32>,
    %253 = arith.truncf %250 : vector<8x128xf32> to vector<8x128xbf16>
    %254 = arith.index_cast %217 : i32 to index
    %c0_106 = arith.constant 0 : index
    %255 = vector.load %arg7[%254, %c0_106] : memref<72x128xbf16, #tpu.memory_space<vmem>>, vector<8x128xbf16>
    tpu.vector_store %arg7[%254, %c0_106], %253 {strides = array<i32>} : memref<72x128xbf16, #tpu.memory_space<vmem>>, vector<8x128xbf16>,
    %c6_i32 = arith.constant 6 : i32
    %c8_i32_107 = arith.constant 8 : i32
    %256 = arith.muli %c6_i32, %c8_i32_107 : i32
    %257 = tpu.assume_multiple %256, 8 : i32
    %258 = arith.index_cast %257 : i32 to index
    %c0_108 = arith.constant 0 : index
    %259 = vector.load %arg8[%258, %c0_108] : memref<72x512xbf16, #tpu.memory_space<vmem>>, vector<8x512xbf16>
    %260 = arith.extf %259 : vector<8x512xbf16> to vector<8x512xf32>
    %c0_109 = arith.constant 0 : index
    %c0_110 = arith.constant 0 : index
    %261 = vector.load %arg9[%c0_109, %c0_110] : memref<8x128xf32, #tpu.memory_space<vmem>>, vector<8x128xf32>
    %262 = arith.truncf %261 : vector<8x128xf32> to vector<8x128xbf16>
    %cst_111 = arith.constant dense<0.000000e+00> : vector<8x512xf32>
    %263 = tpu.matmul %262, %11, %cst_111 {dimension_numbers = #tpu.dot_dimension_numbers<[1], [0], [0], [1], [0, 0, 1, 1], [], []>} : vector<8x128xbf16>, vector<128x512xbf16>, vector<8x512xf32> -> vector<8x512xf32>
    %264 = arith.addf %260, %263 : vector<8x512xf32>
    %265 = vector.extract_strided_slice %264 {offsets = [0, 0], sizes = [8, 128], strides = [1, 1]} : vector<8x512xf32> to vector<8x128xf32>
    %266 = arith.negf %265 : vector<8x128xf32>
    %267 = math.exp %266 : vector<8x128xf32>
    %cst_112 = arith.constant 1.000000e+00 : f32
    %268 = vector.broadcast %cst_112 : f32 to vector<8x128xf32>
    %269 = arith.addf %268, %267 : vector<8x128xf32>
    %270 = arith.divf %268, %269 : vector<8x128xf32>
    %271 = vector.extract_strided_slice %264 {offsets = [0, 128], sizes = [8, 128], strides = [1, 1]} : vector<8x512xf32> to vector<8x128xf32>
    %272 = arith.negf %271 : vector<8x128xf32>
    %273 = math.exp %272 : vector<8x128xf32>
    %cst_113 = arith.constant 1.000000e+00 : f32
    %274 = vector.broadcast %cst_113 : f32 to vector<8x128xf32>
    %275 = arith.addf %274, %273 : vector<8x128xf32>
    %276 = arith.divf %274, %275 : vector<8x128xf32>
    %277 = vector.extract_strided_slice %264 {offsets = [0, 256], sizes = [8, 128], strides = [1, 1]} : vector<8x512xf32> to vector<8x128xf32>
    %278 = math.tanh %277 : vector<8x128xf32>
    %279 = vector.extract_strided_slice %264 {offsets = [0, 384], sizes = [8, 128], strides = [1, 1]} : vector<8x512xf32> to vector<8x128xf32>
    %280 = arith.negf %279 : vector<8x128xf32>
    %281 = math.exp %280 : vector<8x128xf32>
    %cst_114 = arith.constant 1.000000e+00 : f32
    %282 = vector.broadcast %cst_114 : f32 to vector<8x128xf32>
    %283 = arith.addf %282, %281 : vector<8x128xf32>
    %284 = arith.divf %282, %283 : vector<8x128xf32>
    %c0_115 = arith.constant 0 : index
    %c0_116 = arith.constant 0 : index
    %285 = vector.load %arg10[%c0_115, %c0_116] : memref<8x128xf32, #tpu.memory_space<vmem>>, vector<8x128xf32>
    %286 = arith.mulf %276, %285 : vector<8x128xf32>
    %287 = arith.mulf %270, %278 : vector<8x128xf32>
    %288 = arith.addf %286, %287 : vector<8x128xf32>
    %289 = math.tanh %288 : vector<8x128xf32>
    %290 = arith.mulf %284, %289 : vector<8x128xf32>
    %c0_117 = arith.constant 0 : index
    %c0_118 = arith.constant 0 : index
    %291 = vector.load %arg10[%c0_117, %c0_118] : memref<8x128xf32, #tpu.memory_space<vmem>>, vector<8x128xf32>
    tpu.vector_store %arg10[%c0_117, %c0_118], %288 {strides = array<i32>} : memref<8x128xf32, #tpu.memory_space<vmem>>, vector<8x128xf32>,
    %c0_119 = arith.constant 0 : index
    %c0_120 = arith.constant 0 : index
    %292 = vector.load %arg9[%c0_119, %c0_120] : memref<8x128xf32, #tpu.memory_space<vmem>>, vector<8x128xf32>
    tpu.vector_store %arg9[%c0_119, %c0_120], %290 {strides = array<i32>} : memref<8x128xf32, #tpu.memory_space<vmem>>, vector<8x128xf32>,
    %293 = arith.truncf %290 : vector<8x128xf32> to vector<8x128xbf16>
    %294 = arith.index_cast %257 : i32 to index
    %c0_121 = arith.constant 0 : index
    %295 = vector.load %arg7[%294, %c0_121] : memref<72x128xbf16, #tpu.memory_space<vmem>>, vector<8x128xbf16>
    tpu.vector_store %arg7[%294, %c0_121], %293 {strides = array<i32>} : memref<72x128xbf16, #tpu.memory_space<vmem>>, vector<8x128xbf16>,
    %c7_i32 = arith.constant 7 : i32
    %c8_i32_122 = arith.constant 8 : i32
    %296 = arith.muli %c7_i32, %c8_i32_122 : i32
    %297 = tpu.assume_multiple %296, 8 : i32
    %298 = arith.index_cast %297 : i32 to index
    %c0_123 = arith.constant 0 : index
    %299 = vector.load %arg8[%298, %c0_123] : memref<72x512xbf16, #tpu.memory_space<vmem>>, vector<8x512xbf16>
    %300 = arith.extf %299 : vector<8x512xbf16> to vector<8x512xf32>
    %c0_124 = arith.constant 0 : index
    %c0_125 = arith.constant 0 : index
    %301 = vector.load %arg9[%c0_124, %c0_125] : memref<8x128xf32, #tpu.memory_space<vmem>>, vector<8x128xf32>
    %302 = arith.truncf %301 : vector<8x128xf32> to vector<8x128xbf16>
    %cst_126 = arith.constant dense<0.000000e+00> : vector<8x512xf32>
    %303 = tpu.matmul %302, %11, %cst_126 {dimension_numbers = #tpu.dot_dimension_numbers<[1], [0], [0], [1], [0, 0, 1, 1], [], []>} : vector<8x128xbf16>, vector<128x512xbf16>, vector<8x512xf32> -> vector<8x512xf32>
    %304 = arith.addf %300, %303 : vector<8x512xf32>
    %305 = vector.extract_strided_slice %304 {offsets = [0, 0], sizes = [8, 128], strides = [1, 1]} : vector<8x512xf32> to vector<8x128xf32>
    %306 = arith.negf %305 : vector<8x128xf32>
    %307 = math.exp %306 : vector<8x128xf32>
    %cst_127 = arith.constant 1.000000e+00 : f32
    %308 = vector.broadcast %cst_127 : f32 to vector<8x128xf32>
    %309 = arith.addf %308, %307 : vector<8x128xf32>
    %310 = arith.divf %308, %309 : vector<8x128xf32>
    %311 = vector.extract_strided_slice %304 {offsets = [0, 128], sizes = [8, 128], strides = [1, 1]} : vector<8x512xf32> to vector<8x128xf32>
    %312 = arith.negf %311 : vector<8x128xf32>
    %313 = math.exp %312 : vector<8x128xf32>
    %cst_128 = arith.constant 1.000000e+00 : f32
    %314 = vector.broadcast %cst_128 : f32 to vector<8x128xf32>
    %315 = arith.addf %314, %313 : vector<8x128xf32>
    %316 = arith.divf %314, %315 : vector<8x128xf32>
    %317 = vector.extract_strided_slice %304 {offsets = [0, 256], sizes = [8, 128], strides = [1, 1]} : vector<8x512xf32> to vector<8x128xf32>
    %318 = math.tanh %317 : vector<8x128xf32>
    %319 = vector.extract_strided_slice %304 {offsets = [0, 384], sizes = [8, 128], strides = [1, 1]} : vector<8x512xf32> to vector<8x128xf32>
    %320 = arith.negf %319 : vector<8x128xf32>
    %321 = math.exp %320 : vector<8x128xf32>
    %cst_129 = arith.constant 1.000000e+00 : f32
    %322 = vector.broadcast %cst_129 : f32 to vector<8x128xf32>
    %323 = arith.addf %322, %321 : vector<8x128xf32>
    %324 = arith.divf %322, %323 : vector<8x128xf32>
    %c0_130 = arith.constant 0 : index
    %c0_131 = arith.constant 0 : index
    %325 = vector.load %arg10[%c0_130, %c0_131] : memref<8x128xf32, #tpu.memory_space<vmem>>, vector<8x128xf32>
    %326 = arith.mulf %316, %325 : vector<8x128xf32>
    %327 = arith.mulf %310, %318 : vector<8x128xf32>
    %328 = arith.addf %326, %327 : vector<8x128xf32>
    %329 = math.tanh %328 : vector<8x128xf32>
    %330 = arith.mulf %324, %329 : vector<8x128xf32>
    %c0_132 = arith.constant 0 : index
    %c0_133 = arith.constant 0 : index
    %331 = vector.load %arg10[%c0_132, %c0_133] : memref<8x128xf32, #tpu.memory_space<vmem>>, vector<8x128xf32>
    tpu.vector_store %arg10[%c0_132, %c0_133], %328 {strides = array<i32>} : memref<8x128xf32, #tpu.memory_space<vmem>>, vector<8x128xf32>,
    %c0_134 = arith.constant 0 : index
    %c0_135 = arith.constant 0 : index
    %332 = vector.load %arg9[%c0_134, %c0_135] : memref<8x128xf32, #tpu.memory_space<vmem>>, vector<8x128xf32>
    tpu.vector_store %arg9[%c0_134, %c0_135], %330 {strides = array<i32>} : memref<8x128xf32, #tpu.memory_space<vmem>>, vector<8x128xf32>,
    %333 = arith.truncf %330 : vector<8x128xf32> to vector<8x128xbf16>
    %334 = arith.index_cast %297 : i32 to index
    %c0_136 = arith.constant 0 : index
    %335 = vector.load %arg7[%334, %c0_136] : memref<72x128xbf16, #tpu.memory_space<vmem>>, vector<8x128xbf16>
    tpu.vector_store %arg7[%334, %c0_136], %333 {strides = array<i32>} : memref<72x128xbf16, #tpu.memory_space<vmem>>, vector<8x128xbf16>,
    %c8_i32_137 = arith.constant 8 : i32
    %c8_i32_138 = arith.constant 8 : i32
    %336 = arith.muli %c8_i32_137, %c8_i32_138 : i32
    %337 = tpu.assume_multiple %336, 8 : i32
    %338 = arith.index_cast %337 : i32 to index
    %c0_139 = arith.constant 0 : index
    %339 = vector.load %arg8[%338, %c0_139] : memref<72x512xbf16, #tpu.memory_space<vmem>>, vector<8x512xbf16>
    %340 = arith.extf %339 : vector<8x512xbf16> to vector<8x512xf32>
    %c0_140 = arith.constant 0 : index
    %c0_141 = arith.constant 0 : index
    %341 = vector.load %arg9[%c0_140, %c0_141] : memref<8x128xf32, #tpu.memory_space<vmem>>, vector<8x128xf32>
    %342 = arith.truncf %341 : vector<8x128xf32> to vector<8x128xbf16>
    %cst_142 = arith.constant dense<0.000000e+00> : vector<8x512xf32>
    %343 = tpu.matmul %342, %11, %cst_142 {dimension_numbers = #tpu.dot_dimension_numbers<[1], [0], [0], [1], [0, 0, 1, 1], [], []>} : vector<8x128xbf16>, vector<128x512xbf16>, vector<8x512xf32> -> vector<8x512xf32>
    %344 = arith.addf %340, %343 : vector<8x512xf32>
    %345 = vector.extract_strided_slice %344 {offsets = [0, 0], sizes = [8, 128], strides = [1, 1]} : vector<8x512xf32> to vector<8x128xf32>
    %346 = arith.negf %345 : vector<8x128xf32>
    %347 = math.exp %346 : vector<8x128xf32>
    %cst_143 = arith.constant 1.000000e+00 : f32
    %348 = vector.broadcast %cst_143 : f32 to vector<8x128xf32>
    %349 = arith.addf %348, %347 : vector<8x128xf32>
    %350 = arith.divf %348, %349 : vector<8x128xf32>
    %351 = vector.extract_strided_slice %344 {offsets = [0, 128], sizes = [8, 128], strides = [1, 1]} : vector<8x512xf32> to vector<8x128xf32>
    %352 = arith.negf %351 : vector<8x128xf32>
    %353 = math.exp %352 : vector<8x128xf32>
    %cst_144 = arith.constant 1.000000e+00 : f32
    %354 = vector.broadcast %cst_144 : f32 to vector<8x128xf32>
    %355 = arith.addf %354, %353 : vector<8x128xf32>
    %356 = arith.divf %354, %355 : vector<8x128xf32>
    %357 = vector.extract_strided_slice %344 {offsets = [0, 256], sizes = [8, 128], strides = [1, 1]} : vector<8x512xf32> to vector<8x128xf32>
    %358 = math.tanh %357 : vector<8x128xf32>
    %359 = vector.extract_strided_slice %344 {offsets = [0, 384], sizes = [8, 128], strides = [1, 1]} : vector<8x512xf32> to vector<8x128xf32>
    %360 = arith.negf %359 : vector<8x128xf32>
    %361 = math.exp %360 : vector<8x128xf32>
    %cst_145 = arith.constant 1.000000e+00 : f32
    %362 = vector.broadcast %cst_145 : f32 to vector<8x128xf32>
    %363 = arith.addf %362, %361 : vector<8x128xf32>
    %364 = arith.divf %362, %363 : vector<8x128xf32>
    %c0_146 = arith.constant 0 : index
    %c0_147 = arith.constant 0 : index
    %365 = vector.load %arg10[%c0_146, %c0_147] : memref<8x128xf32, #tpu.memory_space<vmem>>, vector<8x128xf32>
    %366 = arith.mulf %356, %365 : vector<8x128xf32>
    %367 = arith.mulf %350, %358 : vector<8x128xf32>
    %368 = arith.addf %366, %367 : vector<8x128xf32>
    %369 = math.tanh %368 : vector<8x128xf32>
    %370 = arith.mulf %364, %369 : vector<8x128xf32>
    %c0_148 = arith.constant 0 : index
    %c0_149 = arith.constant 0 : index
    %371 = vector.load %arg10[%c0_148, %c0_149] : memref<8x128xf32, #tpu.memory_space<vmem>>, vector<8x128xf32>
    tpu.vector_store %arg10[%c0_148, %c0_149], %368 {strides = array<i32>} : memref<8x128xf32, #tpu.memory_space<vmem>>, vector<8x128xf32>,
    %c0_150 = arith.constant 0 : index
    %c0_151 = arith.constant 0 : index
    %372 = vector.load %arg9[%c0_150, %c0_151] : memref<8x128xf32, #tpu.memory_space<vmem>>, vector<8x128xf32>
    tpu.vector_store %arg9[%c0_150, %c0_151], %370 {strides = array<i32>} : memref<8x128xf32, #tpu.memory_space<vmem>>, vector<8x128xf32>,
    %373 = arith.truncf %370 : vector<8x128xf32> to vector<8x128xbf16>
    %374 = arith.index_cast %337 : i32 to index
    %c0_152 = arith.constant 0 : index
    %375 = vector.load %arg7[%374, %c0_152] : memref<72x128xbf16, #tpu.memory_space<vmem>>, vector<8x128xbf16>
    tpu.vector_store %arg7[%374, %c0_152], %373 {strides = array<i32>} : memref<72x128xbf16, #tpu.memory_space<vmem>>, vector<8x128xbf16>,
    %c9_i32 = arith.constant 9 : i32
    %c0_153 = arith.constant 0 : index
    %c0_154 = arith.constant 0 : index
    %376 = vector.load %arg7[%c0_153, %c0_154] : memref<72x128xbf16, #tpu.memory_space<vmem>>, vector<72x128xbf16>
    %c0_155 = arith.constant 0 : index
    %c0_156 = arith.constant 0 : index
    %c0_157 = arith.constant 0 : index
    %377 = vector.load %arg3[%c0_155, %c0_156, %c0_157] : memref<1x128x512xbf16, #tpu.memory_space<vmem>>, vector<1x128x512xbf16>
    %378 = vector.shape_cast %377 : vector<1x128x512xbf16> to vector<128x512xbf16>
    %cst_158 = arith.constant dense<0.000000e+00> : vector<72x512xf32>
    %379 = tpu.matmul %376, %378, %cst_158 {dimension_numbers = #tpu.dot_dimension_numbers<[1], [0], [0], [1], [0, 0, 1, 1], [], []>} : vector<72x128xbf16>, vector<128x512xbf16>, vector<72x512xf32> -> vector<72x512xf32>
    %c1 = arith.constant 1 : index
    %c0_159 = arith.constant 0 : index
    %c0_160 = arith.constant 0 : index
    %380 = vector.load %arg5[%c1, %c0_159, %c0_160] : memref<2x1x512xf32, #tpu.memory_space<vmem>>, vector<1x1x512xf32>
    %381 = vector.shape_cast %380 : vector<1x1x512xf32> to vector<1x512xf32>
    %382 = vector.broadcast %381 : vector<1x512xf32> to vector<72x512xf32>
    %383 = arith.addf %379, %382 : vector<72x512xf32>
    %384 = arith.truncf %383 : vector<72x512xf32> to vector<72x512xbf16>
    %c0_161 = arith.constant 0 : index
    %c0_162 = arith.constant 0 : index
    %385 = vector.load %arg8[%c0_161, %c0_162] : memref<72x512xbf16, #tpu.memory_space<vmem>>, vector<72x512xbf16>
    tpu.vector_store %arg8[%c0_161, %c0_162], %384 {strides = array<i32>} : memref<72x512xbf16, #tpu.memory_space<vmem>>, vector<72x512xbf16>,
    %c1_163 = arith.constant 1 : index
    %c0_164 = arith.constant 0 : index
    %c0_165 = arith.constant 0 : index
    %386 = vector.load %arg4[%c1_163, %c0_164, %c0_165] : memref<2x128x512xbf16, #tpu.memory_space<vmem>>, vector<1x128x512xbf16>
    %387 = vector.shape_cast %386 : vector<1x128x512xbf16> to vector<128x512xbf16>
    %cst_166 = arith.constant 0.000000e+00 : f32
    %388 = vector.broadcast %cst_166 : f32 to vector<8x128xf32>
    %c0_167 = arith.constant 0 : index
    %c0_168 = arith.constant 0 : index
    %389 = vector.load %arg9[%c0_167, %c0_168] : memref<8x128xf32, #tpu.memory_space<vmem>>, vector<8x128xf32>
    tpu.vector_store %arg9[%c0_167, %c0_168], %388 {strides = array<i32>} : memref<8x128xf32, #tpu.memory_space<vmem>>, vector<8x128xf32>,
    %cst_169 = arith.constant 0.000000e+00 : f32
    %390 = vector.broadcast %cst_169 : f32 to vector<8x128xf32>
    %c0_170 = arith.constant 0 : index
    %c0_171 = arith.constant 0 : index
    %391 = vector.load %arg10[%c0_170, %c0_171] : memref<8x128xf32, #tpu.memory_space<vmem>>, vector<8x128xf32>
    tpu.vector_store %arg10[%c0_170, %c0_171], %390 {strides = array<i32>} : memref<8x128xf32, #tpu.memory_space<vmem>>, vector<8x128xf32>,
    %c0_i32_172 = arith.constant 0 : i32
    %c8_i32_173 = arith.constant 8 : i32
    %392 = arith.muli %c0_i32_172, %c8_i32_173 : i32
    %393 = tpu.assume_multiple %392, 8 : i32
    %394 = arith.index_cast %393 : i32 to index
    %c0_174 = arith.constant 0 : index
    %395 = vector.load %arg8[%394, %c0_174] : memref<72x512xbf16, #tpu.memory_space<vmem>>, vector<8x512xbf16>
    %396 = arith.extf %395 : vector<8x512xbf16> to vector<8x512xf32>
    %c0_175 = arith.constant 0 : index
    %c0_176 = arith.constant 0 : index
    %397 = vector.load %arg9[%c0_175, %c0_176] : memref<8x128xf32, #tpu.memory_space<vmem>>, vector<8x128xf32>
    %398 = arith.truncf %397 : vector<8x128xf32> to vector<8x128xbf16>
    %cst_177 = arith.constant dense<0.000000e+00> : vector<8x512xf32>
    %399 = tpu.matmul %398, %387, %cst_177 {dimension_numbers = #tpu.dot_dimension_numbers<[1], [0], [0], [1], [0, 0, 1, 1], [], []>} : vector<8x128xbf16>, vector<128x512xbf16>, vector<8x512xf32> -> vector<8x512xf32>
    %400 = arith.addf %396, %399 : vector<8x512xf32>
    %401 = vector.extract_strided_slice %400 {offsets = [0, 0], sizes = [8, 128], strides = [1, 1]} : vector<8x512xf32> to vector<8x128xf32>
    %402 = arith.negf %401 : vector<8x128xf32>
    %403 = math.exp %402 : vector<8x128xf32>
    %cst_178 = arith.constant 1.000000e+00 : f32
    %404 = vector.broadcast %cst_178 : f32 to vector<8x128xf32>
    %405 = arith.addf %404, %403 : vector<8x128xf32>
    %406 = arith.divf %404, %405 : vector<8x128xf32>
    %407 = vector.extract_strided_slice %400 {offsets = [0, 128], sizes = [8, 128], strides = [1, 1]} : vector<8x512xf32> to vector<8x128xf32>
    %408 = arith.negf %407 : vector<8x128xf32>
    %409 = math.exp %408 : vector<8x128xf32>
    %cst_179 = arith.constant 1.000000e+00 : f32
    %410 = vector.broadcast %cst_179 : f32 to vector<8x128xf32>
    %411 = arith.addf %410, %409 : vector<8x128xf32>
    %412 = arith.divf %410, %411 : vector<8x128xf32>
    %413 = vector.extract_strided_slice %400 {offsets = [0, 256], sizes = [8, 128], strides = [1, 1]} : vector<8x512xf32> to vector<8x128xf32>
    %414 = math.tanh %413 : vector<8x128xf32>
    %415 = vector.extract_strided_slice %400 {offsets = [0, 384], sizes = [8, 128], strides = [1, 1]} : vector<8x512xf32> to vector<8x128xf32>
    %416 = arith.negf %415 : vector<8x128xf32>
    %417 = math.exp %416 : vector<8x128xf32>
    %cst_180 = arith.constant 1.000000e+00 : f32
    %418 = vector.broadcast %cst_180 : f32 to vector<8x128xf32>
    %419 = arith.addf %418, %417 : vector<8x128xf32>
    %420 = arith.divf %418, %419 : vector<8x128xf32>
    %c0_181 = arith.constant 0 : index
    %c0_182 = arith.constant 0 : index
    %421 = vector.load %arg10[%c0_181, %c0_182] : memref<8x128xf32, #tpu.memory_space<vmem>>, vector<8x128xf32>
    %422 = arith.mulf %412, %421 : vector<8x128xf32>
    %423 = arith.mulf %406, %414 : vector<8x128xf32>
    %424 = arith.addf %422, %423 : vector<8x128xf32>
    %425 = math.tanh %424 : vector<8x128xf32>
    %426 = arith.mulf %420, %425 : vector<8x128xf32>
    %c0_183 = arith.constant 0 : index
    %c0_184 = arith.constant 0 : index
    %427 = vector.load %arg10[%c0_183, %c0_184] : memref<8x128xf32, #tpu.memory_space<vmem>>, vector<8x128xf32>
    tpu.vector_store %arg10[%c0_183, %c0_184], %424 {strides = array<i32>} : memref<8x128xf32, #tpu.memory_space<vmem>>, vector<8x128xf32>,
    %c0_185 = arith.constant 0 : index
    %c0_186 = arith.constant 0 : index
    %428 = vector.load %arg9[%c0_185, %c0_186] : memref<8x128xf32, #tpu.memory_space<vmem>>, vector<8x128xf32>
    tpu.vector_store %arg9[%c0_185, %c0_186], %426 {strides = array<i32>} : memref<8x128xf32, #tpu.memory_space<vmem>>, vector<8x128xf32>,
    %429 = arith.truncf %426 : vector<8x128xf32> to vector<8x128xbf16>
    %430 = arith.index_cast %393 : i32 to index
    %c0_187 = arith.constant 0 : index
    %431 = vector.load %arg7[%430, %c0_187] : memref<72x128xbf16, #tpu.memory_space<vmem>>, vector<8x128xbf16>
    tpu.vector_store %arg7[%430, %c0_187], %429 {strides = array<i32>} : memref<72x128xbf16, #tpu.memory_space<vmem>>, vector<8x128xbf16>,
    %c1_i32_188 = arith.constant 1 : i32
    %c8_i32_189 = arith.constant 8 : i32
    %432 = arith.muli %c1_i32_188, %c8_i32_189 : i32
    %433 = tpu.assume_multiple %432, 8 : i32
    %434 = arith.index_cast %433 : i32 to index
    %c0_190 = arith.constant 0 : index
    %435 = vector.load %arg8[%434, %c0_190] : memref<72x512xbf16, #tpu.memory_space<vmem>>, vector<8x512xbf16>
    %436 = arith.extf %435 : vector<8x512xbf16> to vector<8x512xf32>
    %c0_191 = arith.constant 0 : index
    %c0_192 = arith.constant 0 : index
    %437 = vector.load %arg9[%c0_191, %c0_192] : memref<8x128xf32, #tpu.memory_space<vmem>>, vector<8x128xf32>
    %438 = arith.truncf %437 : vector<8x128xf32> to vector<8x128xbf16>
    %cst_193 = arith.constant dense<0.000000e+00> : vector<8x512xf32>
    %439 = tpu.matmul %438, %387, %cst_193 {dimension_numbers = #tpu.dot_dimension_numbers<[1], [0], [0], [1], [0, 0, 1, 1], [], []>} : vector<8x128xbf16>, vector<128x512xbf16>, vector<8x512xf32> -> vector<8x512xf32>
    %440 = arith.addf %436, %439 : vector<8x512xf32>
    %441 = vector.extract_strided_slice %440 {offsets = [0, 0], sizes = [8, 128], strides = [1, 1]} : vector<8x512xf32> to vector<8x128xf32>
    %442 = arith.negf %441 : vector<8x128xf32>
    %443 = math.exp %442 : vector<8x128xf32>
    %cst_194 = arith.constant 1.000000e+00 : f32
    %444 = vector.broadcast %cst_194 : f32 to vector<8x128xf32>
    %445 = arith.addf %444, %443 : vector<8x128xf32>
    %446 = arith.divf %444, %445 : vector<8x128xf32>
    %447 = vector.extract_strided_slice %440 {offsets = [0, 128], sizes = [8, 128], strides = [1, 1]} : vector<8x512xf32> to vector<8x128xf32>
    %448 = arith.negf %447 : vector<8x128xf32>
    %449 = math.exp %448 : vector<8x128xf32>
    %cst_195 = arith.constant 1.000000e+00 : f32
    %450 = vector.broadcast %cst_195 : f32 to vector<8x128xf32>
    %451 = arith.addf %450, %449 : vector<8x128xf32>
    %452 = arith.divf %450, %451 : vector<8x128xf32>
    %453 = vector.extract_strided_slice %440 {offsets = [0, 256], sizes = [8, 128], strides = [1, 1]} : vector<8x512xf32> to vector<8x128xf32>
    %454 = math.tanh %453 : vector<8x128xf32>
    %455 = vector.extract_strided_slice %440 {offsets = [0, 384], sizes = [8, 128], strides = [1, 1]} : vector<8x512xf32> to vector<8x128xf32>
    %456 = arith.negf %455 : vector<8x128xf32>
    %457 = math.exp %456 : vector<8x128xf32>
    %cst_196 = arith.constant 1.000000e+00 : f32
    %458 = vector.broadcast %cst_196 : f32 to vector<8x128xf32>
    %459 = arith.addf %458, %457 : vector<8x128xf32>
    %460 = arith.divf %458, %459 : vector<8x128xf32>
    %c0_197 = arith.constant 0 : index
    %c0_198 = arith.constant 0 : index
    %461 = vector.load %arg10[%c0_197, %c0_198] : memref<8x128xf32, #tpu.memory_space<vmem>>, vector<8x128xf32>
    %462 = arith.mulf %452, %461 : vector<8x128xf32>
    %463 = arith.mulf %446, %454 : vector<8x128xf32>
    %464 = arith.addf %462, %463 : vector<8x128xf32>
    %465 = math.tanh %464 : vector<8x128xf32>
    %466 = arith.mulf %460, %465 : vector<8x128xf32>
    %c0_199 = arith.constant 0 : index
    %c0_200 = arith.constant 0 : index
    %467 = vector.load %arg10[%c0_199, %c0_200] : memref<8x128xf32, #tpu.memory_space<vmem>>, vector<8x128xf32>
    tpu.vector_store %arg10[%c0_199, %c0_200], %464 {strides = array<i32>} : memref<8x128xf32, #tpu.memory_space<vmem>>, vector<8x128xf32>,
    %c0_201 = arith.constant 0 : index
    %c0_202 = arith.constant 0 : index
    %468 = vector.load %arg9[%c0_201, %c0_202] : memref<8x128xf32, #tpu.memory_space<vmem>>, vector<8x128xf32>
    tpu.vector_store %arg9[%c0_201, %c0_202], %466 {strides = array<i32>} : memref<8x128xf32, #tpu.memory_space<vmem>>, vector<8x128xf32>,
    %469 = arith.truncf %466 : vector<8x128xf32> to vector<8x128xbf16>
    %470 = arith.index_cast %433 : i32 to index
    %c0_203 = arith.constant 0 : index
    %471 = vector.load %arg7[%470, %c0_203] : memref<72x128xbf16, #tpu.memory_space<vmem>>, vector<8x128xbf16>
    tpu.vector_store %arg7[%470, %c0_203], %469 {strides = array<i32>} : memref<72x128xbf16, #tpu.memory_space<vmem>>, vector<8x128xbf16>,
    %c2_i32_204 = arith.constant 2 : i32
    %c8_i32_205 = arith.constant 8 : i32
    %472 = arith.muli %c2_i32_204, %c8_i32_205 : i32
    %473 = tpu.assume_multiple %472, 8 : i32
    %474 = arith.index_cast %473 : i32 to index
    %c0_206 = arith.constant 0 : index
    %475 = vector.load %arg8[%474, %c0_206] : memref<72x512xbf16, #tpu.memory_space<vmem>>, vector<8x512xbf16>
    %476 = arith.extf %475 : vector<8x512xbf16> to vector<8x512xf32>
    %c0_207 = arith.constant 0 : index
    %c0_208 = arith.constant 0 : index
    %477 = vector.load %arg9[%c0_207, %c0_208] : memref<8x128xf32, #tpu.memory_space<vmem>>, vector<8x128xf32>
    %478 = arith.truncf %477 : vector<8x128xf32> to vector<8x128xbf16>
    %cst_209 = arith.constant dense<0.000000e+00> : vector<8x512xf32>
    %479 = tpu.matmul %478, %387, %cst_209 {dimension_numbers = #tpu.dot_dimension_numbers<[1], [0], [0], [1], [0, 0, 1, 1], [], []>} : vector<8x128xbf16>, vector<128x512xbf16>, vector<8x512xf32> -> vector<8x512xf32>
    %480 = arith.addf %476, %479 : vector<8x512xf32>
    %481 = vector.extract_strided_slice %480 {offsets = [0, 0], sizes = [8, 128], strides = [1, 1]} : vector<8x512xf32> to vector<8x128xf32>
    %482 = arith.negf %481 : vector<8x128xf32>
    %483 = math.exp %482 : vector<8x128xf32>
    %cst_210 = arith.constant 1.000000e+00 : f32
    %484 = vector.broadcast %cst_210 : f32 to vector<8x128xf32>
    %485 = arith.addf %484, %483 : vector<8x128xf32>
    %486 = arith.divf %484, %485 : vector<8x128xf32>
    %487 = vector.extract_strided_slice %480 {offsets = [0, 128], sizes = [8, 128], strides = [1, 1]} : vector<8x512xf32> to vector<8x128xf32>
    %488 = arith.negf %487 : vector<8x128xf32>
    %489 = math.exp %488 : vector<8x128xf32>
    %cst_211 = arith.constant 1.000000e+00 : f32
    %490 = vector.broadcast %cst_211 : f32 to vector<8x128xf32>
    %491 = arith.addf %490, %489 : vector<8x128xf32>
    %492 = arith.divf %490, %491 : vector<8x128xf32>
    %493 = vector.extract_strided_slice %480 {offsets = [0, 256], sizes = [8, 128], strides = [1, 1]} : vector<8x512xf32> to vector<8x128xf32>
    %494 = math.tanh %493 : vector<8x128xf32>
    %495 = vector.extract_strided_slice %480 {offsets = [0, 384], sizes = [8, 128], strides = [1, 1]} : vector<8x512xf32> to vector<8x128xf32>
    %496 = arith.negf %495 : vector<8x128xf32>
    %497 = math.exp %496 : vector<8x128xf32>
    %cst_212 = arith.constant 1.000000e+00 : f32
    %498 = vector.broadcast %cst_212 : f32 to vector<8x128xf32>
    %499 = arith.addf %498, %497 : vector<8x128xf32>
    %500 = arith.divf %498, %499 : vector<8x128xf32>
    %c0_213 = arith.constant 0 : index
    %c0_214 = arith.constant 0 : index
    %501 = vector.load %arg10[%c0_213, %c0_214] : memref<8x128xf32, #tpu.memory_space<vmem>>, vector<8x128xf32>
    %502 = arith.mulf %492, %501 : vector<8x128xf32>
    %503 = arith.mulf %486, %494 : vector<8x128xf32>
    %504 = arith.addf %502, %503 : vector<8x128xf32>
    %505 = math.tanh %504 : vector<8x128xf32>
    %506 = arith.mulf %500, %505 : vector<8x128xf32>
    %c0_215 = arith.constant 0 : index
    %c0_216 = arith.constant 0 : index
    %507 = vector.load %arg10[%c0_215, %c0_216] : memref<8x128xf32, #tpu.memory_space<vmem>>, vector<8x128xf32>
    tpu.vector_store %arg10[%c0_215, %c0_216], %504 {strides = array<i32>} : memref<8x128xf32, #tpu.memory_space<vmem>>, vector<8x128xf32>,
    %c0_217 = arith.constant 0 : index
    %c0_218 = arith.constant 0 : index
    %508 = vector.load %arg9[%c0_217, %c0_218] : memref<8x128xf32, #tpu.memory_space<vmem>>, vector<8x128xf32>
    tpu.vector_store %arg9[%c0_217, %c0_218], %506 {strides = array<i32>} : memref<8x128xf32, #tpu.memory_space<vmem>>, vector<8x128xf32>,
    %509 = arith.truncf %506 : vector<8x128xf32> to vector<8x128xbf16>
    %510 = arith.index_cast %473 : i32 to index
    %c0_219 = arith.constant 0 : index
    %511 = vector.load %arg7[%510, %c0_219] : memref<72x128xbf16, #tpu.memory_space<vmem>>, vector<8x128xbf16>
    tpu.vector_store %arg7[%510, %c0_219], %509 {strides = array<i32>} : memref<72x128xbf16, #tpu.memory_space<vmem>>, vector<8x128xbf16>,
    %c3_i32_220 = arith.constant 3 : i32
    %c8_i32_221 = arith.constant 8 : i32
    %512 = arith.muli %c3_i32_220, %c8_i32_221 : i32
    %513 = tpu.assume_multiple %512, 8 : i32
    %514 = arith.index_cast %513 : i32 to index
    %c0_222 = arith.constant 0 : index
    %515 = vector.load %arg8[%514, %c0_222] : memref<72x512xbf16, #tpu.memory_space<vmem>>, vector<8x512xbf16>
    %516 = arith.extf %515 : vector<8x512xbf16> to vector<8x512xf32>
    %c0_223 = arith.constant 0 : index
    %c0_224 = arith.constant 0 : index
    %517 = vector.load %arg9[%c0_223, %c0_224] : memref<8x128xf32, #tpu.memory_space<vmem>>, vector<8x128xf32>
    %518 = arith.truncf %517 : vector<8x128xf32> to vector<8x128xbf16>
    %cst_225 = arith.constant dense<0.000000e+00> : vector<8x512xf32>
    %519 = tpu.matmul %518, %387, %cst_225 {dimension_numbers = #tpu.dot_dimension_numbers<[1], [0], [0], [1], [0, 0, 1, 1], [], []>} : vector<8x128xbf16>, vector<128x512xbf16>, vector<8x512xf32> -> vector<8x512xf32>
    %520 = arith.addf %516, %519 : vector<8x512xf32>
    %521 = vector.extract_strided_slice %520 {offsets = [0, 0], sizes = [8, 128], strides = [1, 1]} : vector<8x512xf32> to vector<8x128xf32>
    %522 = arith.negf %521 : vector<8x128xf32>
    %523 = math.exp %522 : vector<8x128xf32>
    %cst_226 = arith.constant 1.000000e+00 : f32
    %524 = vector.broadcast %cst_226 : f32 to vector<8x128xf32>
    %525 = arith.addf %524, %523 : vector<8x128xf32>
    %526 = arith.divf %524, %525 : vector<8x128xf32>
    %527 = vector.extract_strided_slice %520 {offsets = [0, 128], sizes = [8, 128], strides = [1, 1]} : vector<8x512xf32> to vector<8x128xf32>
    %528 = arith.negf %527 : vector<8x128xf32>
    %529 = math.exp %528 : vector<8x128xf32>
    %cst_227 = arith.constant 1.000000e+00 : f32
    %530 = vector.broadcast %cst_227 : f32 to vector<8x128xf32>
    %531 = arith.addf %530, %529 : vector<8x128xf32>
    %532 = arith.divf %530, %531 : vector<8x128xf32>
    %533 = vector.extract_strided_slice %520 {offsets = [0, 256], sizes = [8, 128], strides = [1, 1]} : vector<8x512xf32> to vector<8x128xf32>
    %534 = math.tanh %533 : vector<8x128xf32>
    %535 = vector.extract_strided_slice %520 {offsets = [0, 384], sizes = [8, 128], strides = [1, 1]} : vector<8x512xf32> to vector<8x128xf32>
    %536 = arith.negf %535 : vector<8x128xf32>
    %537 = math.exp %536 : vector<8x128xf32>
    %cst_228 = arith.constant 1.000000e+00 : f32
    %538 = vector.broadcast %cst_228 : f32 to vector<8x128xf32>
    %539 = arith.addf %538, %537 : vector<8x128xf32>
    %540 = arith.divf %538, %539 : vector<8x128xf32>
    %c0_229 = arith.constant 0 : index
    %c0_230 = arith.constant 0 : index
    %541 = vector.load %arg10[%c0_229, %c0_230] : memref<8x128xf32, #tpu.memory_space<vmem>>, vector<8x128xf32>
    %542 = arith.mulf %532, %541 : vector<8x128xf32>
    %543 = arith.mulf %526, %534 : vector<8x128xf32>
    %544 = arith.addf %542, %543 : vector<8x128xf32>
    %545 = math.tanh %544 : vector<8x128xf32>
    %546 = arith.mulf %540, %545 : vector<8x128xf32>
    %c0_231 = arith.constant 0 : index
    %c0_232 = arith.constant 0 : index
    %547 = vector.load %arg10[%c0_231, %c0_232] : memref<8x128xf32, #tpu.memory_space<vmem>>, vector<8x128xf32>
    tpu.vector_store %arg10[%c0_231, %c0_232], %544 {strides = array<i32>} : memref<8x128xf32, #tpu.memory_space<vmem>>, vector<8x128xf32>,
    %c0_233 = arith.constant 0 : index
    %c0_234 = arith.constant 0 : index
    %548 = vector.load %arg9[%c0_233, %c0_234] : memref<8x128xf32, #tpu.memory_space<vmem>>, vector<8x128xf32>
    tpu.vector_store %arg9[%c0_233, %c0_234], %546 {strides = array<i32>} : memref<8x128xf32, #tpu.memory_space<vmem>>, vector<8x128xf32>,
    %549 = arith.truncf %546 : vector<8x128xf32> to vector<8x128xbf16>
    %550 = arith.index_cast %513 : i32 to index
    %c0_235 = arith.constant 0 : index
    %551 = vector.load %arg7[%550, %c0_235] : memref<72x128xbf16, #tpu.memory_space<vmem>>, vector<8x128xbf16>
    tpu.vector_store %arg7[%550, %c0_235], %549 {strides = array<i32>} : memref<72x128xbf16, #tpu.memory_space<vmem>>, vector<8x128xbf16>,
    %c4_i32_236 = arith.constant 4 : i32
    %c8_i32_237 = arith.constant 8 : i32
    %552 = arith.muli %c4_i32_236, %c8_i32_237 : i32
    %553 = tpu.assume_multiple %552, 8 : i32
    %554 = arith.index_cast %553 : i32 to index
    %c0_238 = arith.constant 0 : index
    %555 = vector.load %arg8[%554, %c0_238] : memref<72x512xbf16, #tpu.memory_space<vmem>>, vector<8x512xbf16>
    %556 = arith.extf %555 : vector<8x512xbf16> to vector<8x512xf32>
    %c0_239 = arith.constant 0 : index
    %c0_240 = arith.constant 0 : index
    %557 = vector.load %arg9[%c0_239, %c0_240] : memref<8x128xf32, #tpu.memory_space<vmem>>, vector<8x128xf32>
    %558 = arith.truncf %557 : vector<8x128xf32> to vector<8x128xbf16>
    %cst_241 = arith.constant dense<0.000000e+00> : vector<8x512xf32>
    %559 = tpu.matmul %558, %387, %cst_241 {dimension_numbers = #tpu.dot_dimension_numbers<[1], [0], [0], [1], [0, 0, 1, 1], [], []>} : vector<8x128xbf16>, vector<128x512xbf16>, vector<8x512xf32> -> vector<8x512xf32>
    %560 = arith.addf %556, %559 : vector<8x512xf32>
    %561 = vector.extract_strided_slice %560 {offsets = [0, 0], sizes = [8, 128], strides = [1, 1]} : vector<8x512xf32> to vector<8x128xf32>
    %562 = arith.negf %561 : vector<8x128xf32>
    %563 = math.exp %562 : vector<8x128xf32>
    %cst_242 = arith.constant 1.000000e+00 : f32
    %564 = vector.broadcast %cst_242 : f32 to vector<8x128xf32>
    %565 = arith.addf %564, %563 : vector<8x128xf32>
    %566 = arith.divf %564, %565 : vector<8x128xf32>
    %567 = vector.extract_strided_slice %560 {offsets = [0, 128], sizes = [8, 128], strides = [1, 1]} : vector<8x512xf32> to vector<8x128xf32>
    %568 = arith.negf %567 : vector<8x128xf32>
    %569 = math.exp %568 : vector<8x128xf32>
    %cst_243 = arith.constant 1.000000e+00 : f32
    %570 = vector.broadcast %cst_243 : f32 to vector<8x128xf32>
    %571 = arith.addf %570, %569 : vector<8x128xf32>
    %572 = arith.divf %570, %571 : vector<8x128xf32>
    %573 = vector.extract_strided_slice %560 {offsets = [0, 256], sizes = [8, 128], strides = [1, 1]} : vector<8x512xf32> to vector<8x128xf32>
    %574 = math.tanh %573 : vector<8x128xf32>
    %575 = vector.extract_strided_slice %560 {offsets = [0, 384], sizes = [8, 128], strides = [1, 1]} : vector<8x512xf32> to vector<8x128xf32>
    %576 = arith.negf %575 : vector<8x128xf32>
    %577 = math.exp %576 : vector<8x128xf32>
    %cst_244 = arith.constant 1.000000e+00 : f32
    %578 = vector.broadcast %cst_244 : f32 to vector<8x128xf32>
    %579 = arith.addf %578, %577 : vector<8x128xf32>
    %580 = arith.divf %578, %579 : vector<8x128xf32>
    %c0_245 = arith.constant 0 : index
    %c0_246 = arith.constant 0 : index
    %581 = vector.load %arg10[%c0_245, %c0_246] : memref<8x128xf32, #tpu.memory_space<vmem>>, vector<8x128xf32>
    %582 = arith.mulf %572, %581 : vector<8x128xf32>
    %583 = arith.mulf %566, %574 : vector<8x128xf32>
    %584 = arith.addf %582, %583 : vector<8x128xf32>
    %585 = math.tanh %584 : vector<8x128xf32>
    %586 = arith.mulf %580, %585 : vector<8x128xf32>
    %c0_247 = arith.constant 0 : index
    %c0_248 = arith.constant 0 : index
    %587 = vector.load %arg10[%c0_247, %c0_248] : memref<8x128xf32, #tpu.memory_space<vmem>>, vector<8x128xf32>
    tpu.vector_store %arg10[%c0_247, %c0_248], %584 {strides = array<i32>} : memref<8x128xf32, #tpu.memory_space<vmem>>, vector<8x128xf32>,
    %c0_249 = arith.constant 0 : index
    %c0_250 = arith.constant 0 : index
    %588 = vector.load %arg9[%c0_249, %c0_250] : memref<8x128xf32, #tpu.memory_space<vmem>>, vector<8x128xf32>
    tpu.vector_store %arg9[%c0_249, %c0_250], %586 {strides = array<i32>} : memref<8x128xf32, #tpu.memory_space<vmem>>, vector<8x128xf32>,
    %589 = arith.truncf %586 : vector<8x128xf32> to vector<8x128xbf16>
    %590 = arith.index_cast %553 : i32 to index
    %c0_251 = arith.constant 0 : index
    %591 = vector.load %arg7[%590, %c0_251] : memref<72x128xbf16, #tpu.memory_space<vmem>>, vector<8x128xbf16>
    tpu.vector_store %arg7[%590, %c0_251], %589 {strides = array<i32>} : memref<72x128xbf16, #tpu.memory_space<vmem>>, vector<8x128xbf16>,
    %c5_i32_252 = arith.constant 5 : i32
    %c8_i32_253 = arith.constant 8 : i32
    %592 = arith.muli %c5_i32_252, %c8_i32_253 : i32
    %593 = tpu.assume_multiple %592, 8 : i32
    %594 = arith.index_cast %593 : i32 to index
    %c0_254 = arith.constant 0 : index
    %595 = vector.load %arg8[%594, %c0_254] : memref<72x512xbf16, #tpu.memory_space<vmem>>, vector<8x512xbf16>
    %596 = arith.extf %595 : vector<8x512xbf16> to vector<8x512xf32>
    %c0_255 = arith.constant 0 : index
    %c0_256 = arith.constant 0 : index
    %597 = vector.load %arg9[%c0_255, %c0_256] : memref<8x128xf32, #tpu.memory_space<vmem>>, vector<8x128xf32>
    %598 = arith.truncf %597 : vector<8x128xf32> to vector<8x128xbf16>
    %cst_257 = arith.constant dense<0.000000e+00> : vector<8x512xf32>
    %599 = tpu.matmul %598, %387, %cst_257 {dimension_numbers = #tpu.dot_dimension_numbers<[1], [0], [0], [1], [0, 0, 1, 1], [], []>} : vector<8x128xbf16>, vector<128x512xbf16>, vector<8x512xf32> -> vector<8x512xf32>
    %600 = arith.addf %596, %599 : vector<8x512xf32>
    %601 = vector.extract_strided_slice %600 {offsets = [0, 0], sizes = [8, 128], strides = [1, 1]} : vector<8x512xf32> to vector<8x128xf32>
    %602 = arith.negf %601 : vector<8x128xf32>
    %603 = math.exp %602 : vector<8x128xf32>
    %cst_258 = arith.constant 1.000000e+00 : f32
    %604 = vector.broadcast %cst_258 : f32 to vector<8x128xf32>
    %605 = arith.addf %604, %603 : vector<8x128xf32>
    %606 = arith.divf %604, %605 : vector<8x128xf32>
    %607 = vector.extract_strided_slice %600 {offsets = [0, 128], sizes = [8, 128], strides = [1, 1]} : vector<8x512xf32> to vector<8x128xf32>
    %608 = arith.negf %607 : vector<8x128xf32>
    %609 = math.exp %608 : vector<8x128xf32>
    %cst_259 = arith.constant 1.000000e+00 : f32
    %610 = vector.broadcast %cst_259 : f32 to vector<8x128xf32>
    %611 = arith.addf %610, %609 : vector<8x128xf32>
    %612 = arith.divf %610, %611 : vector<8x128xf32>
    %613 = vector.extract_strided_slice %600 {offsets = [0, 256], sizes = [8, 128], strides = [1, 1]} : vector<8x512xf32> to vector<8x128xf32>
    %614 = math.tanh %613 : vector<8x128xf32>
    %615 = vector.extract_strided_slice %600 {offsets = [0, 384], sizes = [8, 128], strides = [1, 1]} : vector<8x512xf32> to vector<8x128xf32>
    %616 = arith.negf %615 : vector<8x128xf32>
    %617 = math.exp %616 : vector<8x128xf32>
    %cst_260 = arith.constant 1.000000e+00 : f32
    %618 = vector.broadcast %cst_260 : f32 to vector<8x128xf32>
    %619 = arith.addf %618, %617 : vector<8x128xf32>
    %620 = arith.divf %618, %619 : vector<8x128xf32>
    %c0_261 = arith.constant 0 : index
    %c0_262 = arith.constant 0 : index
    %621 = vector.load %arg10[%c0_261, %c0_262] : memref<8x128xf32, #tpu.memory_space<vmem>>, vector<8x128xf32>
    %622 = arith.mulf %612, %621 : vector<8x128xf32>
    %623 = arith.mulf %606, %614 : vector<8x128xf32>
    %624 = arith.addf %622, %623 : vector<8x128xf32>
    %625 = math.tanh %624 : vector<8x128xf32>
    %626 = arith.mulf %620, %625 : vector<8x128xf32>
    %c0_263 = arith.constant 0 : index
    %c0_264 = arith.constant 0 : index
    %627 = vector.load %arg10[%c0_263, %c0_264] : memref<8x128xf32, #tpu.memory_space<vmem>>, vector<8x128xf32>
    tpu.vector_store %arg10[%c0_263, %c0_264], %624 {strides = array<i32>} : memref<8x128xf32, #tpu.memory_space<vmem>>, vector<8x128xf32>,
    %c0_265 = arith.constant 0 : index
    %c0_266 = arith.constant 0 : index
    %628 = vector.load %arg9[%c0_265, %c0_266] : memref<8x128xf32, #tpu.memory_space<vmem>>, vector<8x128xf32>
    tpu.vector_store %arg9[%c0_265, %c0_266], %626 {strides = array<i32>} : memref<8x128xf32, #tpu.memory_space<vmem>>, vector<8x128xf32>,
    %629 = arith.truncf %626 : vector<8x128xf32> to vector<8x128xbf16>
    %630 = arith.index_cast %593 : i32 to index
    %c0_267 = arith.constant 0 : index
    %631 = vector.load %arg7[%630, %c0_267] : memref<72x128xbf16, #tpu.memory_space<vmem>>, vector<8x128xbf16>
    tpu.vector_store %arg7[%630, %c0_267], %629 {strides = array<i32>} : memref<72x128xbf16, #tpu.memory_space<vmem>>, vector<8x128xbf16>,
    %c6_i32_268 = arith.constant 6 : i32
    %c8_i32_269 = arith.constant 8 : i32
    %632 = arith.muli %c6_i32_268, %c8_i32_269 : i32
    %633 = tpu.assume_multiple %632, 8 : i32
    %634 = arith.index_cast %633 : i32 to index
    %c0_270 = arith.constant 0 : index
    %635 = vector.load %arg8[%634, %c0_270] : memref<72x512xbf16, #tpu.memory_space<vmem>>, vector<8x512xbf16>
    %636 = arith.extf %635 : vector<8x512xbf16> to vector<8x512xf32>
    %c0_271 = arith.constant 0 : index
    %c0_272 = arith.constant 0 : index
    %637 = vector.load %arg9[%c0_271, %c0_272] : memref<8x128xf32, #tpu.memory_space<vmem>>, vector<8x128xf32>
    %638 = arith.truncf %637 : vector<8x128xf32> to vector<8x128xbf16>
    %cst_273 = arith.constant dense<0.000000e+00> : vector<8x512xf32>
    %639 = tpu.matmul %638, %387, %cst_273 {dimension_numbers = #tpu.dot_dimension_numbers<[1], [0], [0], [1], [0, 0, 1, 1], [], []>} : vector<8x128xbf16>, vector<128x512xbf16>, vector<8x512xf32> -> vector<8x512xf32>
    %640 = arith.addf %636, %639 : vector<8x512xf32>
    %641 = vector.extract_strided_slice %640 {offsets = [0, 0], sizes = [8, 128], strides = [1, 1]} : vector<8x512xf32> to vector<8x128xf32>
    %642 = arith.negf %641 : vector<8x128xf32>
    %643 = math.exp %642 : vector<8x128xf32>
    %cst_274 = arith.constant 1.000000e+00 : f32
    %644 = vector.broadcast %cst_274 : f32 to vector<8x128xf32>
    %645 = arith.addf %644, %643 : vector<8x128xf32>
    %646 = arith.divf %644, %645 : vector<8x128xf32>
    %647 = vector.extract_strided_slice %640 {offsets = [0, 128], sizes = [8, 128], strides = [1, 1]} : vector<8x512xf32> to vector<8x128xf32>
    %648 = arith.negf %647 : vector<8x128xf32>
    %649 = math.exp %648 : vector<8x128xf32>
    %cst_275 = arith.constant 1.000000e+00 : f32
    %650 = vector.broadcast %cst_275 : f32 to vector<8x128xf32>
    %651 = arith.addf %650, %649 : vector<8x128xf32>
    %652 = arith.divf %650, %651 : vector<8x128xf32>
    %653 = vector.extract_strided_slice %640 {offsets = [0, 256], sizes = [8, 128], strides = [1, 1]} : vector<8x512xf32> to vector<8x128xf32>
    %654 = math.tanh %653 : vector<8x128xf32>
    %655 = vector.extract_strided_slice %640 {offsets = [0, 384], sizes = [8, 128], strides = [1, 1]} : vector<8x512xf32> to vector<8x128xf32>
    %656 = arith.negf %655 : vector<8x128xf32>
    %657 = math.exp %656 : vector<8x128xf32>
    %cst_276 = arith.constant 1.000000e+00 : f32
    %658 = vector.broadcast %cst_276 : f32 to vector<8x128xf32>
    %659 = arith.addf %658, %657 : vector<8x128xf32>
    %660 = arith.divf %658, %659 : vector<8x128xf32>
    %c0_277 = arith.constant 0 : index
    %c0_278 = arith.constant 0 : index
    %661 = vector.load %arg10[%c0_277, %c0_278] : memref<8x128xf32, #tpu.memory_space<vmem>>, vector<8x128xf32>
    %662 = arith.mulf %652, %661 : vector<8x128xf32>
    %663 = arith.mulf %646, %654 : vector<8x128xf32>
    %664 = arith.addf %662, %663 : vector<8x128xf32>
    %665 = math.tanh %664 : vector<8x128xf32>
    %666 = arith.mulf %660, %665 : vector<8x128xf32>
    %c0_279 = arith.constant 0 : index
    %c0_280 = arith.constant 0 : index
    %667 = vector.load %arg10[%c0_279, %c0_280] : memref<8x128xf32, #tpu.memory_space<vmem>>, vector<8x128xf32>
    tpu.vector_store %arg10[%c0_279, %c0_280], %664 {strides = array<i32>} : memref<8x128xf32, #tpu.memory_space<vmem>>, vector<8x128xf32>,
    %c0_281 = arith.constant 0 : index
    %c0_282 = arith.constant 0 : index
    %668 = vector.load %arg9[%c0_281, %c0_282] : memref<8x128xf32, #tpu.memory_space<vmem>>, vector<8x128xf32>
    tpu.vector_store %arg9[%c0_281, %c0_282], %666 {strides = array<i32>} : memref<8x128xf32, #tpu.memory_space<vmem>>, vector<8x128xf32>,
    %669 = arith.truncf %666 : vector<8x128xf32> to vector<8x128xbf16>
    %670 = arith.index_cast %633 : i32 to index
    %c0_283 = arith.constant 0 : index
    %671 = vector.load %arg7[%670, %c0_283] : memref<72x128xbf16, #tpu.memory_space<vmem>>, vector<8x128xbf16>
    tpu.vector_store %arg7[%670, %c0_283], %669 {strides = array<i32>} : memref<72x128xbf16, #tpu.memory_space<vmem>>, vector<8x128xbf16>,
    %c7_i32_284 = arith.constant 7 : i32
    %c8_i32_285 = arith.constant 8 : i32
    %672 = arith.muli %c7_i32_284, %c8_i32_285 : i32
    %673 = tpu.assume_multiple %672, 8 : i32
    %674 = arith.index_cast %673 : i32 to index
    %c0_286 = arith.constant 0 : index
    %675 = vector.load %arg8[%674, %c0_286] : memref<72x512xbf16, #tpu.memory_space<vmem>>, vector<8x512xbf16>
    %676 = arith.extf %675 : vector<8x512xbf16> to vector<8x512xf32>
    %c0_287 = arith.constant 0 : index
    %c0_288 = arith.constant 0 : index
    %677 = vector.load %arg9[%c0_287, %c0_288] : memref<8x128xf32, #tpu.memory_space<vmem>>, vector<8x128xf32>
    %678 = arith.truncf %677 : vector<8x128xf32> to vector<8x128xbf16>
    %cst_289 = arith.constant dense<0.000000e+00> : vector<8x512xf32>
    %679 = tpu.matmul %678, %387, %cst_289 {dimension_numbers = #tpu.dot_dimension_numbers<[1], [0], [0], [1], [0, 0, 1, 1], [], []>} : vector<8x128xbf16>, vector<128x512xbf16>, vector<8x512xf32> -> vector<8x512xf32>
    %680 = arith.addf %676, %679 : vector<8x512xf32>
    %681 = vector.extract_strided_slice %680 {offsets = [0, 0], sizes = [8, 128], strides = [1, 1]} : vector<8x512xf32> to vector<8x128xf32>
    %682 = arith.negf %681 : vector<8x128xf32>
    %683 = math.exp %682 : vector<8x128xf32>
    %cst_290 = arith.constant 1.000000e+00 : f32
    %684 = vector.broadcast %cst_290 : f32 to vector<8x128xf32>
    %685 = arith.addf %684, %683 : vector<8x128xf32>
    %686 = arith.divf %684, %685 : vector<8x128xf32>
    %687 = vector.extract_strided_slice %680 {offsets = [0, 128], sizes = [8, 128], strides = [1, 1]} : vector<8x512xf32> to vector<8x128xf32>
    %688 = arith.negf %687 : vector<8x128xf32>
    %689 = math.exp %688 : vector<8x128xf32>
    %cst_291 = arith.constant 1.000000e+00 : f32
    %690 = vector.broadcast %cst_291 : f32 to vector<8x128xf32>
    %691 = arith.addf %690, %689 : vector<8x128xf32>
    %692 = arith.divf %690, %691 : vector<8x128xf32>
    %693 = vector.extract_strided_slice %680 {offsets = [0, 256], sizes = [8, 128], strides = [1, 1]} : vector<8x512xf32> to vector<8x128xf32>
    %694 = math.tanh %693 : vector<8x128xf32>
    %695 = vector.extract_strided_slice %680 {offsets = [0, 384], sizes = [8, 128], strides = [1, 1]} : vector<8x512xf32> to vector<8x128xf32>
    %696 = arith.negf %695 : vector<8x128xf32>
    %697 = math.exp %696 : vector<8x128xf32>
    %cst_292 = arith.constant 1.000000e+00 : f32
    %698 = vector.broadcast %cst_292 : f32 to vector<8x128xf32>
    %699 = arith.addf %698, %697 : vector<8x128xf32>
    %700 = arith.divf %698, %699 : vector<8x128xf32>
    %c0_293 = arith.constant 0 : index
    %c0_294 = arith.constant 0 : index
    %701 = vector.load %arg10[%c0_293, %c0_294] : memref<8x128xf32, #tpu.memory_space<vmem>>, vector<8x128xf32>
    %702 = arith.mulf %692, %701 : vector<8x128xf32>
    %703 = arith.mulf %686, %694 : vector<8x128xf32>
    %704 = arith.addf %702, %703 : vector<8x128xf32>
    %705 = math.tanh %704 : vector<8x128xf32>
    %706 = arith.mulf %700, %705 : vector<8x128xf32>
    %c0_295 = arith.constant 0 : index
    %c0_296 = arith.constant 0 : index
    %707 = vector.load %arg10[%c0_295, %c0_296] : memref<8x128xf32, #tpu.memory_space<vmem>>, vector<8x128xf32>
    tpu.vector_store %arg10[%c0_295, %c0_296], %704 {strides = array<i32>} : memref<8x128xf32, #tpu.memory_space<vmem>>, vector<8x128xf32>,
    %c0_297 = arith.constant 0 : index
    %c0_298 = arith.constant 0 : index
    %708 = vector.load %arg9[%c0_297, %c0_298] : memref<8x128xf32, #tpu.memory_space<vmem>>, vector<8x128xf32>
    tpu.vector_store %arg9[%c0_297, %c0_298], %706 {strides = array<i32>} : memref<8x128xf32, #tpu.memory_space<vmem>>, vector<8x128xf32>,
    %709 = arith.truncf %706 : vector<8x128xf32> to vector<8x128xbf16>
    %710 = arith.index_cast %673 : i32 to index
    %c0_299 = arith.constant 0 : index
    %711 = vector.load %arg7[%710, %c0_299] : memref<72x128xbf16, #tpu.memory_space<vmem>>, vector<8x128xbf16>
    tpu.vector_store %arg7[%710, %c0_299], %709 {strides = array<i32>} : memref<72x128xbf16, #tpu.memory_space<vmem>>, vector<8x128xbf16>,
    %c8_i32_300 = arith.constant 8 : i32
    %c8_i32_301 = arith.constant 8 : i32
    %712 = arith.muli %c8_i32_300, %c8_i32_301 : i32
    %713 = tpu.assume_multiple %712, 8 : i32
    %714 = arith.index_cast %713 : i32 to index
    %c0_302 = arith.constant 0 : index
    %715 = vector.load %arg8[%714, %c0_302] : memref<72x512xbf16, #tpu.memory_space<vmem>>, vector<8x512xbf16>
    %716 = arith.extf %715 : vector<8x512xbf16> to vector<8x512xf32>
    %c0_303 = arith.constant 0 : index
    %c0_304 = arith.constant 0 : index
    %717 = vector.load %arg9[%c0_303, %c0_304] : memref<8x128xf32, #tpu.memory_space<vmem>>, vector<8x128xf32>
    %718 = arith.truncf %717 : vector<8x128xf32> to vector<8x128xbf16>
    %cst_305 = arith.constant dense<0.000000e+00> : vector<8x512xf32>
    %719 = tpu.matmul %718, %387, %cst_305 {dimension_numbers = #tpu.dot_dimension_numbers<[1], [0], [0], [1], [0, 0, 1, 1], [], []>} : vector<8x128xbf16>, vector<128x512xbf16>, vector<8x512xf32> -> vector<8x512xf32>
    %720 = arith.addf %716, %719 : vector<8x512xf32>
    %721 = vector.extract_strided_slice %720 {offsets = [0, 0], sizes = [8, 128], strides = [1, 1]} : vector<8x512xf32> to vector<8x128xf32>
    %722 = arith.negf %721 : vector<8x128xf32>
    %723 = math.exp %722 : vector<8x128xf32>
    %cst_306 = arith.constant 1.000000e+00 : f32
    %724 = vector.broadcast %cst_306 : f32 to vector<8x128xf32>
    %725 = arith.addf %724, %723 : vector<8x128xf32>
    %726 = arith.divf %724, %725 : vector<8x128xf32>
    %727 = vector.extract_strided_slice %720 {offsets = [0, 128], sizes = [8, 128], strides = [1, 1]} : vector<8x512xf32> to vector<8x128xf32>
    %728 = arith.negf %727 : vector<8x128xf32>
    %729 = math.exp %728 : vector<8x128xf32>
    %cst_307 = arith.constant 1.000000e+00 : f32
    %730 = vector.broadcast %cst_307 : f32 to vector<8x128xf32>
    %731 = arith.addf %730, %729 : vector<8x128xf32>
    %732 = arith.divf %730, %731 : vector<8x128xf32>
    %733 = vector.extract_strided_slice %720 {offsets = [0, 256], sizes = [8, 128], strides = [1, 1]} : vector<8x512xf32> to vector<8x128xf32>
    %734 = math.tanh %733 : vector<8x128xf32>
    %735 = vector.extract_strided_slice %720 {offsets = [0, 384], sizes = [8, 128], strides = [1, 1]} : vector<8x512xf32> to vector<8x128xf32>
    %736 = arith.negf %735 : vector<8x128xf32>
    %737 = math.exp %736 : vector<8x128xf32>
    %cst_308 = arith.constant 1.000000e+00 : f32
    %738 = vector.broadcast %cst_308 : f32 to vector<8x128xf32>
    %739 = arith.addf %738, %737 : vector<8x128xf32>
    %740 = arith.divf %738, %739 : vector<8x128xf32>
    %c0_309 = arith.constant 0 : index
    %c0_310 = arith.constant 0 : index
    %741 = vector.load %arg10[%c0_309, %c0_310] : memref<8x128xf32, #tpu.memory_space<vmem>>, vector<8x128xf32>
    %742 = arith.mulf %732, %741 : vector<8x128xf32>
    %743 = arith.mulf %726, %734 : vector<8x128xf32>
    %744 = arith.addf %742, %743 : vector<8x128xf32>
    %745 = math.tanh %744 : vector<8x128xf32>
    %746 = arith.mulf %740, %745 : vector<8x128xf32>
    %c0_311 = arith.constant 0 : index
    %c0_312 = arith.constant 0 : index
    %747 = vector.load %arg10[%c0_311, %c0_312] : memref<8x128xf32, #tpu.memory_space<vmem>>, vector<8x128xf32>
    tpu.vector_store %arg10[%c0_311, %c0_312], %744 {strides = array<i32>} : memref<8x128xf32, #tpu.memory_space<vmem>>, vector<8x128xf32>,
    %c0_313 = arith.constant 0 : index
    %c0_314 = arith.constant 0 : index
    %748 = vector.load %arg9[%c0_313, %c0_314] : memref<8x128xf32, #tpu.memory_space<vmem>>, vector<8x128xf32>
    tpu.vector_store %arg9[%c0_313, %c0_314], %746 {strides = array<i32>} : memref<8x128xf32, #tpu.memory_space<vmem>>, vector<8x128xf32>,
    %749 = arith.truncf %746 : vector<8x128xf32> to vector<8x128xbf16>
    %750 = arith.index_cast %713 : i32 to index
    %c0_315 = arith.constant 0 : index
    %751 = vector.load %arg7[%750, %c0_315] : memref<72x128xbf16, #tpu.memory_space<vmem>>, vector<8x128xbf16>
    tpu.vector_store %arg7[%750, %c0_315], %749 {strides = array<i32>} : memref<72x128xbf16, #tpu.memory_space<vmem>>, vector<8x128xbf16>,
    %c9_i32_316 = arith.constant 9 : i32
    %c0_317 = arith.constant 0 : index
    %c0_318 = arith.constant 0 : index
    %752 = vector.load %arg7[%c0_317, %c0_318] : memref<72x128xbf16, #tpu.memory_space<vmem>>, vector<72x128xbf16>
    %c0_319 = arith.constant 0 : index
    %c0_320 = arith.constant 0 : index
    %c0_321 = arith.constant 0 : index
    %753 = vector.load %arg6[%c0_319, %c0_320, %c0_321] : memref<1x72x128xbf16, #tpu.memory_space<vmem>>, vector<1x72x128xbf16>
    %754 = vector.shape_cast %753 : vector<1x72x128xbf16> to vector<72x128xbf16>
    %755 = vector.shape_cast %752 : vector<72x128xbf16> to vector<1x72x128xbf16>
    tpu.vector_store %arg6[%c0_319, %c0_320, %c0_321], %755 {strides = array<i32>} : memref<1x72x128xbf16, #tpu.memory_space<vmem>>, vector<1x72x128xbf16>,
    return
  }
  func.func @transform_0(%arg0: i32) -> (i32, i32, i32) {
    %c0_i32 = arith.constant 0 : i32
    %c0_i32_0 = arith.constant 0 : i32
    %c0_i32_1 = arith.constant 0 : i32
    return %arg0, %c0_i32, %c0_i32_0 : i32, i32, i32
  }
  func.func @transform_1(%arg0: i32) -> (i32, i32) {
    %c0_i32 = arith.constant 0 : i32
    %c0_i32_0 = arith.constant 0 : i32
    %c0_i32_1 = arith.constant 0 : i32
    return %c0_i32, %c0_i32_0 : i32, i32
  }
  func.func @transform_2(%arg0: i32) -> (i32, i32, i32) {
    %c0_i32 = arith.constant 0 : i32
    %c0_i32_0 = arith.constant 0 : i32
    %c0_i32_1 = arith.constant 0 : i32
    %c0_i32_2 = arith.constant 0 : i32
    return %c0_i32, %c0_i32_0, %c0_i32_1 : i32, i32, i32
  }
  func.func @transform_3(%arg0: i32) -> (i32, i32, i32) {
    %c0_i32 = arith.constant 0 : i32
    %c0_i32_0 = arith.constant 0 : i32
    %c0_i32_1 = arith.constant 0 : i32
    %c0_i32_2 = arith.constant 0 : i32
    return %c0_i32, %c0_i32_0, %c0_i32_1 : i32, i32, i32
  }
  func.func @transform_4(%arg0: i32) -> (i32, i32, i32) {
    %c0_i32 = arith.constant 0 : i32
    %c0_i32_0 = arith.constant 0 : i32
    %c0_i32_1 = arith.constant 0 : i32
    %c0_i32_2 = arith.constant 0 : i32
    return %c0_i32, %c0_i32_0, %c0_i32_1 : i32, i32, i32
  }
  func.func @transform_5(%arg0: i32) -> (i32, i32, i32) {
    %c0_i32 = arith.constant 0 : i32
    %c0_i32_0 = arith.constant 0 : i32
    %c0_i32_1 = arith.constant 0 : i32
    return %arg0, %c0_i32, %c0_i32_0 : i32, i32, i32
  }
}

</mosaic_0001>

<llo_original>
// kernel: decoder_rnn_forward.3
$region0: #{decoder_rnn_forward.3}
  #allocation0 [shape = 'u32[]', space=smem, size = 0x4, offset = 0x4, fixed_abs, tag = 'smem constant byte address 0x4 - core index']
  #allocation1 [shape = 'u32[72,128]{1,0:T(1,128)}', space=vmem, size = 0x9000, scoped, tag = 'internal scratch']
  %s0 = inlined_call_operand.vmem [shape: bf16[72,128], index: 0, kind: input, shape index: {}]
  %s1 = inlined_call_operand.vmem [shape: bf16[128,128], index: 1, kind: input, shape index: {}]
  %s2 = inlined_call_operand.vmem [shape: f32[1,128], index: 2, kind: input, shape index: {}]
  %s3 = inlined_call_operand.vmem [shape: f32[72,128], index: 3, kind: output, shape index: {}]
  %s4 = sld [smem:[#allocation0]]
  $region22: #{decoder_rnn_forward.3} parent=0
    _
  %s6 = ssub.s32 1, %s4
  %s7 = scalar_select 0, %s6, %s4
  // Predicated region
  $region2: #{decoder_rnn_forward.3} parent=0 // pred_check
    _
  $region3: #{decoder_rnn_forward.3} parent=0 // pred_check_branch
    %9 = sbr.rel (0) target = $region5
  $region4: #{decoder_rnn_forward.3} parent=0 // pred_region
    _
  $region5: #{decoder_rnn_forward.3} parent=0 // pred_fallthru
    _
  // Predicated region
  $region6: #{decoder_rnn_forward.3} parent=0 // pred_check
    _
  $region7: #{decoder_rnn_forward.3} parent=0 // pred_check_branch
    %11 = sbr.rel (0) target = $region9
  $region8: #{decoder_rnn_forward.3} parent=0 // pred_region
    _
  $region9: #{decoder_rnn_forward.3} parent=0 // pred_fallthru
    _
  // Predicated region
  $region10: #{decoder_rnn_forward.3} parent=0 // pred_check
    _
  $region11: #{decoder_rnn_forward.3} parent=0 // pred_check_branch
    %13 = sbr.rel (0) target = $region13
  $region12: #{decoder_rnn_forward.3} parent=0 // pred_region
    _
  $region13: #{decoder_rnn_forward.3} parent=0 // pred_fallthru
    _
  %v14 = vld [vmem:[%s0] sm:$0xf]
  %v15 = vld [vmem:[%s0 + $0x4] sm:$0xf]
  %v16 = vld [vmem:[%s0 + $0x8] sm:$0xf]
  %v17 = vld [vmem:[%s0 + $0xc] sm:$0xf]
  %v18 = vld [vmem:[%s0 + $0x10] sm:$0xf]
  %v19 = vld [vmem:[%s0 + $0x14] sm:$0xf]
  %v20 = vld [vmem:[%s0 + $0x18] sm:$0xf]
  %v21 = vld [vmem:[%s0 + $0x1c] sm:$0xf]
  %v22 = vld [vmem:[%s0 + $0x20] sm:$0xf]
  %v23 = vld [vmem:[%s1] sm:$0xf]
  %v24 = vld [vmem:[%s1 + $0x4] sm:$0xf]
  %v25 = vld [vmem:[%s1 + $0x8] sm:$0xf]
  %v26 = vld [vmem:[%s1 + $0xc] sm:$0xf]
  %v27 = vld [vmem:[%s1 + $0x10] sm:$0xf]
  %v28 = vld [vmem:[%s1 + $0x14] sm:$0xf]
  %v29 = vld [vmem:[%s1 + $0x18] sm:$0xf]
  %v30 = vld [vmem:[%s1 + $0x1c] sm:$0xf]
  %v31 = vld [vmem:[%s1 + $0x20] sm:$0xf]
  %v32 = vld [vmem:[%s1 + $0x24] sm:$0xf]
  %v33 = vld [vmem:[%s1 + $0x28] sm:$0xf]
  %v34 = vld [vmem:[%s1 + $0x2c] sm:$0xf]
  %v35 = vld [vmem:[%s1 + $0x30] sm:$0xf]
  %v36 = vld [vmem:[%s1 + $0x34] sm:$0xf]
  %v37 = vld [vmem:[%s1 + $0x38] sm:$0xf]
  %v38 = vld [vmem:[%s1 + $0x3c] sm:$0xf]
  %v39 = vld [vmem:[%s2] sm:$0x1]
  %v41 = vperm.slane %v39, 0
  %v52 = vunpack.c.l.b16 %v14
  %v53 = vunpack.c.l.b16 %v15
  %v54 = vunpack.c.l.b16 %v16
  %v55 = vunpack.c.l.b16 %v17
  %v56 = vunpack.c.l.b16 %v18
  %v57 = vunpack.c.l.b16 %v19
  %v58 = vunpack.c.l.b16 %v20
  %v59 = vunpack.c.l.b16 %v21
  %v60 = vunpack.c.l.b16 %v22
  %v61 = vpack.c.b16 %v53, %v52
  %v62 = vpack.c.b16 %v55, %v54
  %v63 = vpack.c.b16 %v57, %v56
  %v64 = vpack.c.b16 %v59, %v58
  %v65 = vpack.c.b16 %v60, %v60
  %v87 = vunpack.c.l.b16 %v23
  %v88 = vunpack.c.l.b16 %v24
  %v89 = vunpack.c.l.b16 %v25
  %v90 = vunpack.c.l.b16 %v26
  %v91 = vunpack.c.l.b16 %v27
  %v92 = vunpack.c.l.b16 %v28
  %v93 = vunpack.c.l.b16 %v29
  %v94 = vunpack.c.l.b16 %v30
  %v95 = vunpack.c.l.b16 %v31
  %v96 = vunpack.c.l.b16 %v32
  %v97 = vunpack.c.l.b16 %v33
  %v98 = vunpack.c.l.b16 %v34
  %v99 = vunpack.c.l.b16 %v35
  %v100 = vunpack.c.l.b16 %v36
  %v101 = vunpack.c.l.b16 %v37
  %v102 = vunpack.c.l.b16 %v38
  %v103 = vpack.c.b16 %v88, %v87
  %v104 = vpack.c.b16 %v90, %v89
  %v105 = vpack.c.b16 %v92, %v91
  %v106 = vpack.c.b16 %v94, %v93
  %v107 = vpack.c.b16 %v96, %v95
  %v108 = vpack.c.b16 %v98, %v97
  %v109 = vpack.c.b16 %v100, %v99
  %v110 = vpack.c.b16 %v102, %v101
  %119 = vmatpush.bf16.msra.mxu0 %v110
  %120 = vmatpush.bf16.msra.mxu0 %v109
  %121 = vmatpush.bf16.msra.mxu0 %v108
  %122 = vmatpush.bf16.msra.mxu0 %v107
  %123 = vmatpush.bf16.msra.mxu0 %v106
  %124 = vmatpush.bf16.msra.mxu0 %v105
  %125 = vmatpush.bf16.msra.mxu0 %v104
  %126 = vmatpush.bf16.msra.mxu0 %v103
  %127 = vmatmul.bf16.gmra.mxu0 %v61
  %v128 = vpop.f32.mrf.mxu0
  %v129 = vadd.f32 %v41, %v128
  %v130 = vpop.f32.mrf.mxu0
  %v131 = vadd.f32 %v41, %v130
  %132 = vmatmul.bf16.gmra.mxu0 %v62
  %v133 = vpop.f32.mrf.mxu0
  %v134 = vadd.f32 %v41, %v133
  %v135 = vpop.f32.mrf.mxu0
  %v136 = vadd.f32 %v41, %v135
  %137 = vmatmul.bf16.gmra.mxu0 %v63
  %v138 = vpop.f32.mrf.mxu0
  %v139 = vadd.f32 %v41, %v138
  %v140 = vpop.f32.mrf.mxu0
  %v141 = vadd.f32 %v41, %v140
  %142 = vmatmul.bf16.gmra.mxu0 %v64
  %v143 = vpop.f32.mrf.mxu0
  %v144 = vadd.f32 %v41, %v143
  %v145 = vpop.f32.mrf.mxu0
  %v146 = vadd.f32 %v41, %v145
  %147 = vmatmul.bf16.gmra.mxu0 %v65
  %v148 = vpop.f32.mrf.mxu0
  %v149 = vadd.f32 %v41, %v148
  %v150 = vpop.f32.mrf.mxu0
  %151 = vdwg.mxu0
  %152 = vst [vmem:[%s3] sm:$0xff] %v129
  %153 = vst [vmem:[%s3 + $0x8] sm:$0xff] %v131
  %154 = vst [vmem:[%s3 + $0x10] sm:$0xff] %v134
  %155 = vst [vmem:[%s3 + $0x18] sm:$0xff] %v136
  %156 = vst [vmem:[%s3 + $0x20] sm:$0xff] %v139
  %157 = vst [vmem:[%s3 + $0x28] sm:$0xff] %v141
  %158 = vst [vmem:[%s3 + $0x30] sm:$0xff] %v144
  %159 = vst [vmem:[%s3 + $0x38] sm:$0xff] %v146
  %160 = vst [vmem:[%s3 + $0x40] sm:$0xff] %v149
  // Predicated region
  $region14: #{decoder_rnn_forward.3} parent=0 // pred_check
    _
  $region15: #{decoder_rnn_forward.3} parent=0 // pred_check_branch
    %162 = sbr.rel (0) target = $region17
  $region16: #{decoder_rnn_forward.3} parent=0 // pred_region
    _
  $region17: #{decoder_rnn_forward.3} parent=0 // pred_fallthru
    _
  // Predicated region
  $region18: #{decoder_rnn_forward.3} parent=0 // pred_check
    _
  $region19: #{decoder_rnn_forward.3} parent=0 // pred_check_branch
    %164 = sbr.rel (0) target = $region21
  $region20: #{decoder_rnn_forward.3} parent=0 // pred_region
    _
  $region21: #{decoder_rnn_forward.3} parent=0 // pred_fallthru
    _

// kernel: decoder_rnn_forward.2
$region0: #{decoder_rnn_forward.2}
  #allocation0 [shape = 'u32[]', space=smem, size = 0x4, offset = 0x4, fixed_abs, tag = 'smem constant byte address 0x4 - core index']
  #allocation1 [shape = 'u32[72,128]{1,0:T(1,128)}', space=vmem, size = 0x9000, scoped, tag = 'internal scratch']
  #allocation2 [shape = 'bf16[72,128]{1,0:T(8,128)(2,1)}', space=vmem, size = 0x4800, scoped, tag = 'scratch operand']
  #allocation3 [shape = 'bf16[72,512]{1,0:T(8,128)(2,1)}', space=vmem, size = 0x12000, scoped, tag = 'scratch operand']
  #allocation4 [shape = 'f32[8,128]{1,0:T(8,128)}', space=vmem, size = 0x1000, scoped, tag = 'scratch operand']
  #allocation5 [shape = 'f32[8,128]{1,0:T(8,128)}', space=vmem, size = 0x1000, scoped, tag = 'scratch operand']
  %s0 = inlined_call_operand.vmem [shape: bf16[1,72,128], index: 0, kind: input, shape index: {}]
  %s1 = inlined_call_operand.vmem [shape: bf16[128,512], index: 1, kind: input, shape index: {}]
  %s2 = inlined_call_operand.hbm [shape: bf16[1,128,512], index: 2, kind: input, shape index: {}]
  %s3 = inlined_call_operand.hbm [shape: bf16[2,128,512], index: 3, kind: input, shape index: {}]
  %s4 = inlined_call_operand.vmem [shape: f32[2,1,512], index: 4, kind: input, shape index: {}]
  %s5 = inlined_call_operand.vmem [shape: bf16[1,72,128], index: 5, kind: output, shape index: {}]
  %s6 = sld [smem:[#allocation0]]
  $region38: #{decoder_rnn_forward.2} parent=0
    _
  %s8 = ssub.s32 1, %s6
  %s9 = scalar_select 0, %s8, %s6
  $region1: #{decoder_rnn_forward.2} parent=0
    #allocation6 [shape = 'u8[131072]{0}', space=vmem, size = 0x20000, scoped, tag = 'input window, operand 2, single buffered']
    #allocation7 [shape = 's32[1]{0}', space=sflag, size = 0x4, scoped, tag = 'scoped memory for decoder_rnn_forward.2']
    #allocation8 [shape = 'u8[262144]{0}', space=vmem, size = 0x40000, scoped, tag = 'input window, operand 3, single buffered']
    #allocation9 [shape = 's32[1]{0}', space=sflag, size = 0x4, scoped, tag = 'scoped memory for decoder_rnn_forward.2']
    %10 = vsyncpa [#allocation7], 0
    %11 = vsyncpa [#allocation9], 0
    // Predicated region
    $region2: #{decoder_rnn_forward.2} parent=1 // pred_check
      _
    $region3: #{decoder_rnn_forward.2} parent=1 // pred_check_branch
      %13 = sbr.rel (0) target = $region5
    $region4: #{decoder_rnn_forward.2} parent=1 // pred_region
      _
    $region5: #{decoder_rnn_forward.2} parent=1 // pred_fallthru
      _
    // Predicated region
    $region6: #{decoder_rnn_forward.2} parent=1 // pred_check
      _
    $region7: #{decoder_rnn_forward.2} parent=1 // pred_check_branch
      %15 = sbr.rel (0) target = $region9
    $region8: #{decoder_rnn_forward.2} parent=1 // pred_region
      _
    $region9: #{decoder_rnn_forward.2} parent=1 // pred_fallthru
      _
    // Predicated region
    $region10: #{decoder_rnn_forward.2} parent=1 // pred_check
      _
    $region11: #{decoder_rnn_forward.2} parent=1 // pred_check_branch
      %17 = sbr.rel (0) target = $region13
    $region12: #{decoder_rnn_forward.2} parent=1 // pred_region
      %19 = vsyncadd [#allocation7], 0
      %s20 = sshll.u32 %s2, 4
      %s21 = int_to_ptr.hbm [resolvable:$true] %s20
      %s22 = sshll.u32 [#allocation6], 4
      %s23 = int_to_ptr.vmem [resolvable:$true] %s22
      %28 = dma.hbm_to_vmem [thread:$0]  %s21, 4096, %s23, [#allocation7], 256, 256, 16
    $region13: #{decoder_rnn_forward.2} parent=1 // pred_fallthru
      _
    // Predicated region
    $region14: #{decoder_rnn_forward.2} parent=1 // pred_check
      _
    $region15: #{decoder_rnn_forward.2} parent=1 // pred_check_branch
      %30 = sbr.rel (0) target = $region17
    $region16: #{decoder_rnn_forward.2} parent=1 // pred_region
      %32 = vsyncadd [#allocation9], 0
      %s33 = sshll.u32 %s3, 4
      %s34 = int_to_ptr.hbm [resolvable:$true] %s33
      %s35 = sshll.u32 [#allocation8], 4
      %s36 = int_to_ptr.vmem [resolvable:$true] %s35
      %41 = dma.hbm_to_vmem [thread:$0]  %s34, 8192, %s36, [#allocation9], 256, 256, 16
    $region17: #{decoder_rnn_forward.2} parent=1 // pred_fallthru
      _
    // Predicated region
    $region18: #{decoder_rnn_forward.2} parent=1 // pred_check
      _
    $region19: #{decoder_rnn_forward.2} parent=1 // pred_check_branch
      %43 = sbr.rel (0) target = $region21
    $region20: #{decoder_rnn_forward.2} parent=1 // pred_region
      _
    $region21: #{decoder_rnn_forward.2} parent=1 // pred_fallthru
      _
    // Predicated region
    $region22: #{decoder_rnn_forward.2} parent=1 // pred_check
      _
    $region23: #{decoder_rnn_forward.2} parent=1 // pred_check_branch
      %45 = sbr.rel (0) target = $region25
    $region24: #{decoder_rnn_forward.2} parent=1 // pred_region
      %47 = dma.done [#allocation7], 4096
    $region25: #{decoder_rnn_forward.2} parent=1 // pred_fallthru
      _
    // Predicated region
    $region26: #{decoder_rnn_forward.2} parent=1 // pred_check
      _
    $region27: #{decoder_rnn_forward.2} parent=1 // pred_check_branch
      %49 = sbr.rel (0) target = $region29
    $region28: #{decoder_rnn_forward.2} parent=1 // pred_region
      %51 = dma.done [#allocation9], 8192
    $region29: #{decoder_rnn_forward.2} parent=1 // pred_fallthru
      _
    %v52 = vld [vmem:[%s0] sm:$0xf]
    %v53 = vld [vmem:[%s0 + $0x4] sm:$0xf]
    %v54 = vld [vmem:[%s0 + $0x8] sm:$0xf]
    %v55 = vld [vmem:[%s0 + $0xc] sm:$0xf]
    %v56 = vld [vmem:[%s0 + $0x10] sm:$0xf]
    %v57 = vld [vmem:[%s0 + $0x14] sm:$0xf]
    %v58 = vld [vmem:[%s0 + $0x18] sm:$0xf]
    %v59 = vld [vmem:[%s0 + $0x1c] sm:$0xf]
    %v60 = vld [vmem:[%s0 + $0x20] sm:$0xf]
    %v61 = vld [vmem:[%s1] sm:$0xff]
    %v62 = vld [vmem:[%s1 + $0x8] sm:$0xff]
    %v63 = vld [vmem:[%s1 + $0x10] sm:$0xff]
    %v64 = vld [vmem:[%s1 + $0x18] sm:$0xff]
    %v65 = vld [vmem:[%s1 + $0x20] sm:$0xff]
    %v66 = vld [vmem:[%s1 + $0x28] sm:$0xff]
    %v67 = vld [vmem:[%s1 + $0x30] sm:$0xff]
    %v68 = vld [vmem:[%s1 + $0x38] sm:$0xff]
    %v69 = vld [vmem:[%s1 + $0x40] sm:$0xff]
    %v70 = vld [vmem:[%s1 + $0x48] sm:$0xff]
    %v71 = vld [vmem:[%s1 + $0x50] sm:$0xff]
    %v72 = vld [vmem:[%s1 + $0x58] sm:$0xff]
    %v73 = vld [vmem:[%s1 + $0x60] sm:$0xff]
    %v74 = vld [vmem:[%s1 + $0x68] sm:$0xff]
    %v75 = vld [vmem:[%s1 + $0x70] sm:$0xff]
    %v76 = vld [vmem:[%s1 + $0x78] sm:$0xff]
    %v77 = vld [vmem:[%s1 + $0x80] sm:$0xff]
    %v78 = vld [vmem:[%s1 + $0x88] sm:$0xff]
    %v79 = vld [vmem:[%s1 + $0x90] sm:$0xff]
    %v80 = vld [vmem:[%s1 + $0x98] sm:$0xff]
    %v81 = vld [vmem:[%s1 + $0xa0] sm:$0xff]
    %v82 = vld [vmem:[%s1 + $0xa8] sm:$0xff]
    %v83 = vld [vmem:[%s1 + $0xb0] sm:$0xff]
    %v84 = vld [vmem:[%s1 + $0xb8] sm:$0xff]
    %v85 = vld [vmem:[%s1 + $0xc0] sm:$0xff]
    %v86 = vld [vmem:[%s1 + $0xc8] sm:$0xff]
    %v87 = vld [vmem:[%s1 + $0xd0] sm:$0xff]
    %v88 = vld [vmem:[%s1 + $0xd8] sm:$0xff]
    %v89 = vld [vmem:[%s1 + $0xe0] sm:$0xff]
    %v90 = vld [vmem:[%s1 + $0xe8] sm:$0xff]
    %v91 = vld [vmem:[%s1 + $0xf0] sm:$0xff]
    %v92 = vld [vmem:[%s1 + $0xf8] sm:$0xff]
    %v93 = vld [vmem:[%s4] sm:$0xf]
    %v95 = vperm.slane %v93, 0
    %v96 = vperm.slane %v93, 1
    %v97 = vperm.slane %v93, 2
    %v98 = vperm.slane %v93, 3
    %v112 = vunpack.c.l.b16 %v52
    %v113 = vunpack.c.l.b16 %v53
    %v114 = vunpack.c.l.b16 %v54
    %v115 = vunpack.c.l.b16 %v55
    %v116 = vunpack.c.l.b16 %v56
    %v117 = vunpack.c.l.b16 %v57
    %v118 = vunpack.c.l.b16 %v58
    %v119 = vunpack.c.l.b16 %v59
    %v120 = vunpack.c.l.b16 %v60
    %v121 = vpack.c.b16 %v113, %v112
    %v122 = vpack.c.b16 %v115, %v114
    %v123 = vpack.c.b16 %v117, %v116
    %v124 = vpack.c.b16 %v119, %v118
    %v125 = vpack.c.b16 %v120, %v120
    %v163 = vunpack.c.l.b16 %v61
    %v164 = vunpack.c.h.b16 %v61
    %v165 = vunpack.c.l.b16 %v62
    %v166 = vunpack.c.h.b16 %v62
    %v167 = vunpack.c.l.b16 %v63
    %v168 = vunpack.c.h.b16 %v63
    %v169 = vunpack.c.l.b16 %v64
    %v170 = vunpack.c.h.b16 %v64
    %v171 = vunpack.c.l.b16 %v65
    %v172 = vunpack.c.h.b16 %v65
    %v173 = vunpack.c.l.b16 %v66
    %v174 = vunpack.c.h.b16 %v66
    %v175 = vunpack.c.l.b16 %v67
    %v176 = vunpack.c.h.b16 %v67
    %v177 = vunpack.c.l.b16 %v68
    %v178 = vunpack.c.h.b16 %v68
    %v179 = vunpack.c.l.b16 %v69
    %v180 = vunpack.c.h.b16 %v69
    %v181 = vunpack.c.l.b16 %v70
    %v182 = vunpack.c.h.b16 %v70
    %v183 = vunpack.c.l.b16 %v71
    %v184 = vunpack.c.h.b16 %v71
    %v185 = vunpack.c.l.b16 %v72
    %v186 = vunpack.c.h.b16 %v72
    %v187 = vunpack.c.l.b16 %v73
    %v188 = vunpack.c.h.b16 %v73
    %v189 = vunpack.c.l.b16 %v74
    %v190 = vunpack.c.h.b16 %v74
    %v191 = vunpack.c.l.b16 %v75
    %v192 = vunpack.c.h.b16 %v75
    %v193 = vunpack.c.l.b16 %v76
    %v194 = vunpack.c.h.b16 %v76
    %v195 = vunpack.c.l.b16 %v77
    %v196 = vunpack.c.h.b16 %v77
    %v197 = vunpack.c.l.b16 %v78
    %v198 = vunpack.c.h.b16 %v78
    %v199 = vunpack.c.l.b16 %v79
    %v200 = vunpack.c.h.b16 %v79
    %v201 = vunpack.c.l.b16 %v80
    %v202 = vunpack.c.h.b16 %v80
    %v203 = vunpack.c.l.b16 %v81
    %v204 = vunpack.c.h.b16 %v81
    %v205 = vunpack.c.l.b16 %v82
    %v206 = vunpack.c.h.b16 %v82
    %v207 = vunpack.c.l.b16 %v83
    %v208 = vunpack.c.h.b16 %v83
    %v209 = vunpack.c.l.b16 %v84
    %v210 = vunpack.c.h.b16 %v84
    %v211 = vunpack.c.l.b16 %v85
    %v212 = vunpack.c.h.b16 %v85
    %v213 = vunpack.c.l.b16 %v86
    %v214 = vunpack.c.h.b16 %v86
    %v215 = vunpack.c.l.b16 %v87
    %v216 = vunpack.c.h.b16 %v87
    %v217 = vunpack.c.l.b16 %v88
    %v218 = vunpack.c.h.b16 %v88
    %v219 = vunpack.c.l.b16 %v89
    %v220 = vunpack.c.h.b16 %v89
    %v221 = vunpack.c.l.b16 %v90
    %v222 = vunpack.c.h.b16 %v90
    %v223 = vunpack.c.l.b16 %v91
    %v224 = vunpack.c.h.b16 %v91
    %v225 = vunpack.c.l.b16 %v92
    %v226 = vunpack.c.h.b16 %v92
    %v227 = vpack.c.b16 %v167, %v163
    %v228 = vpack.c.b16 %v168, %v164
    %v229 = vpack.c.b16 %v169, %v165
    %v230 = vpack.c.b16 %v170, %v166
    %v231 = vpack.c.b16 %v175, %v171
    %v232 = vpack.c.b16 %v176, %v172
    %v233 = vpack.c.b16 %v177, %v173
    %v234 = vpack.c.b16 %v178, %v174
    %v235 = vpack.c.b16 %v183, %v179
    %v236 = vpack.c.b16 %v184, %v180
    %v237 = vpack.c.b16 %v185, %v181
    %v238 = vpack.c.b16 %v186, %v182
    %v239 = vpack.c.b16 %v191, %v187
    %v240 = vpack.c.b16 %v192, %v188
    %v241 = vpack.c.b16 %v193, %v189
    %v242 = vpack.c.b16 %v194, %v190
    %v243 = vpack.c.b16 %v199, %v195
    %v244 = vpack.c.b16 %v200, %v196
    %v245 = vpack.c.b16 %v201, %v197
    %v246 = vpack.c.b16 %v202, %v198
    %v247 = vpack.c.b16 %v207, %v203
    %v248 = vpack.c.b16 %v208, %v204
    %v249 = vpack.c.b16 %v209, %v205
    %v250 = vpack.c.b16 %v210, %v206
    %v251 = vpack.c.b16 %v215, %v211
    %v252 = vpack.c.b16 %v216, %v212
    %v253 = vpack.c.b16 %v217, %v213
    %v254 = vpack.c.b16 %v218, %v214
    %v255 = vpack.c.b16 %v223, %v219
    %v256 = vpack.c.b16 %v224, %v220
    %v257 = vpack.c.b16 %v225, %v221
    %v258 = vpack.c.b16 %v226, %v222
    %291 = vmatpush.bf16.msra.mxu0 %v255
    %292 = vmatpush.bf16.msra.mxu0 %v251
    %293 = vmatpush.bf16.msra.mxu0 %v247
    %294 = vmatpush.bf16.msra.mxu0 %v243
    %295 = vmatpush.bf16.msra.mxu0 %v239
    %296 = vmatpush.bf16.msra.mxu0 %v235
    %297 = vmatpush.bf16.msra.mxu0 %v231
    %298 = vmatpush.bf16.msra.mxu0 %v227
    %299 = vmatmul.bf16.gmra.mxu0 %v121
    %v300 = vpop.f32.mrf.mxu0
    %v301 = vadd.f32 %v95, %v300
    %v302 = vpop.f32.mrf.mxu0
    %v303 = vadd.f32 %v95, %v302
    %304 = vmatmul.bf16.gmra.mxu0 %v122
    %v305 = vpop.f32.mrf.mxu0
    %v306 = vadd.f32 %v95, %v305
    %v307 = vpop.f32.mrf.mxu0
    %v308 = vadd.f32 %v95, %v307
    %309 = vmatmul.bf16.gmra.mxu0 %v123
    %v310 = vpop.f32.mrf.mxu0
    %v311 = vadd.f32 %v95, %v310
    %v312 = vpop.f32.mrf.mxu0
    %v313 = vadd.f32 %v95, %v312
    %314 = vmatmul.bf16.gmra.mxu0 %v124
    %v315 = vpop.f32.mrf.mxu0
    %v316 = vadd.f32 %v95, %v315
    %v317 = vpop.f32.mrf.mxu0
    %v318 = vadd.f32 %v95, %v317
    %319 = vmatmul.bf16.gmra.mxu0 %v125
    %v320 = vpop.f32.mrf.mxu0
    %v321 = vadd.f32 %v95, %v320
    %v322 = vpop.f32.mrf.mxu0
    %323 = vdwg.mxu0
    %324 = vmatpush.bf16.msra.mxu0 %v256
    %325 = vmatpush.bf16.msra.mxu0 %v252
    %326 = vmatpush.bf16.msra.mxu0 %v248
    %327 = vmatpush.bf16.msra.mxu0 %v244
    %328 = vmatpush.bf16.msra.mxu0 %v240
    %329 = vmatpush.bf16.msra.mxu0 %v236
    %330 = vmatpush.bf16.msra.mxu0 %v232
    %331 = vmatpush.bf16.msra.mxu0 %v228
    %332 = vmatmul.bf16.gmra.mxu0 %v121
    %v333 = vpop.f32.mrf.mxu0
    %v334 = vadd.f32 %v96, %v333
    %v335 = vpop.f32.mrf.mxu0
    %v336 = vadd.f32 %v96, %v335
    %337 = vmatmul.bf16.gmra.mxu0 %v122
    %v338 = vpop.f32.mrf.mxu0
    %v339 = vadd.f32 %v96, %v338
    %v340 = vpop.f32.mrf.mxu0
    %v341 = vadd.f32 %v96, %v340
    %342 = vmatmul.bf16.gmra.mxu0 %v123
    %v343 = vpop.f32.mrf.mxu0
    %v344 = vadd.f32 %v96, %v343
    %v345 = vpop.f32.mrf.mxu0
    %v346 = vadd.f32 %v96, %v345
    %347 = vmatmul.bf16.gmra.mxu0 %v124
    %v348 = vpop.f32.mrf.mxu0
    %v349 = vadd.f32 %v96, %v348
    %v350 = vpop.f32.mrf.mxu0
    %v351 = vadd.f32 %v96, %v350
    %352 = vmatmul.bf16.gmra.mxu0 %v125
    %v353 = vpop.f32.mrf.mxu0
    %v354 = vadd.f32 %v96, %v353
    %v355 = vpop.f32.mrf.mxu0
    %356 = vdwg.mxu0
    %357 = vmatpush.bf16.msra.mxu0 %v257
    %358 = vmatpush.bf16.msra.mxu0 %v253
    %359 = vmatpush.bf16.msra.mxu0 %v249
    %360 = vmatpush.bf16.msra.mxu0 %v245
    %361 = vmatpush.bf16.msra.mxu0 %v241
    %362 = vmatpush.bf16.msra.mxu0 %v237
    %363 = vmatpush.bf16.msra.mxu0 %v233
    %364 = vmatpush.bf16.msra.mxu0 %v229
    %365 = vmatmul.bf16.gmra.mxu0 %v121
    %v366 = vpop.f32.mrf.mxu0
    %v367 = vadd.f32 %v97, %v366
    %v368 = vpop.f32.mrf.mxu0
    %v369 = vadd.f32 %v97, %v368
    %370 = vmatmul.bf16.gmra.mxu0 %v122
    %v371 = vpop.f32.mrf.mxu0
    %v372 = vadd.f32 %v97, %v371
    %v373 = vpop.f32.mrf.mxu0
    %v374 = vadd.f32 %v97, %v373
    %375 = vmatmul.bf16.gmra.mxu0 %v123
    %v376 = vpop.f32.mrf.mxu0
    %v377 = vadd.f32 %v97, %v376
    %v378 = vpop.f32.mrf.mxu0
    %v379 = vadd.f32 %v97, %v378
    %380 = vmatmul.bf16.gmra.mxu0 %v124
    %v381 = vpop.f32.mrf.mxu0
    %v382 = vadd.f32 %v97, %v381
    %v383 = vpop.f32.mrf.mxu0
    %v384 = vadd.f32 %v97, %v383
    %385 = vmatmul.bf16.gmra.mxu0 %v125
    %v386 = vpop.f32.mrf.mxu0
    %v387 = vadd.f32 %v97, %v386
    %v388 = vpop.f32.mrf.mxu0
    %389 = vdwg.mxu0
    %390 = vmatpush.bf16.msra.mxu0 %v258
    %391 = vmatpush.bf16.msra.mxu0 %v254
    %392 = vmatpush.bf16.msra.mxu0 %v250
    %393 = vmatpush.bf16.msra.mxu0 %v246
    %394 = vmatpush.bf16.msra.mxu0 %v242
    %395 = vmatpush.bf16.msra.mxu0 %v238
    %396 = vmatpush.bf16.msra.mxu0 %v234
    %397 = vmatpush.bf16.msra.mxu0 %v230
    %398 = vmatmul.bf16.gmra.mxu0 %v121
    %v399 = vpop.f32.mrf.mxu0
    %v400 = vadd.f32 %v98, %v399
    %v401 = vpop.f32.mrf.mxu0
    %v402 = vadd.f32 %v98, %v401
    %403 = vmatmul.bf16.gmra.mxu0 %v122
    %v404 = vpop.f32.mrf.mxu0
    %v405 = vadd.f32 %v98, %v404
    %v406 = vpop.f32.mrf.mxu0
    %v407 = vadd.f32 %v98, %v406
    %408 = vmatmul.bf16.gmra.mxu0 %v123
    %v409 = vpop.f32.mrf.mxu0
    %v410 = vadd.f32 %v98, %v409
    %v411 = vpop.f32.mrf.mxu0
    %v412 = vadd.f32 %v98, %v411
    %413 = vmatmul.bf16.gmra.mxu0 %v124
    %v414 = vpop.f32.mrf.mxu0
    %v415 = vadd.f32 %v98, %v414
    %v416 = vpop.f32.mrf.mxu0
    %v417 = vadd.f32 %v98, %v416
    %418 = vmatmul.bf16.gmra.mxu0 %v125
    %v419 = vpop.f32.mrf.mxu0
    %v420 = vadd.f32 %v98, %v419
    %v421 = vpop.f32.mrf.mxu0
    %422 = vdwg.mxu0
    %v423 = vpack.c.bf16 %v334, %v301
    %v424 = vpack.c.bf16 %v400, %v367
    %v425 = vpack.c.bf16 %v336, %v303
    %v426 = vpack.c.bf16 %v402, %v369
    %v427 = vpack.c.bf16 %v339, %v306
    %v428 = vpack.c.bf16 %v405, %v372
    %v429 = vpack.c.bf16 %v341, %v308
    %v430 = vpack.c.bf16 %v407, %v374
    %v431 = vpack.c.bf16 %v344, %v311
    %v432 = vpack.c.bf16 %v410, %v377
    %v433 = vpack.c.bf16 %v346, %v313
    %v434 = vpack.c.bf16 %v412, %v379
    %v435 = vpack.c.bf16 %v349, %v316
    %v436 = vpack.c.bf16 %v415, %v382
    %v437 = vpack.c.bf16 %v351, %v318
    %v438 = vpack.c.bf16 %v417, %v384
    %v439 = vpack.c.bf16 %v354, %v321
    %v440 = vpack.c.bf16 %v420, %v387
    %441 = vst [vmem:[#allocation3] sm:$0xff] %v423
    %442 = vst [vmem:[#allocation3 + $0x8] sm:$0xff] %v424
    %443 = vst [vmem:[#allocation3 + $0x10] sm:$0xff] %v425
    %444 = vst [vmem:[#allocation3 + $0x18] sm:$0xff] %v426
    %445 = vst [vmem:[#allocation3 + $0x20] sm:$0xff] %v427
    %446 = vst [vmem:[#allocation3 + $0x28] sm:$0xff] %v428
    %447 = vst [vmem:[#allocation3 + $0x30] sm:$0xff] %v429
    %448 = vst [vmem:[#allocation3 + $0x38] sm:$0xff] %v430
    %449 = vst [vmem:[#allocation3 + $0x40] sm:$0xff] %v431
    %450 = vst [vmem:[#allocation3 + $0x48] sm:$0xff] %v432
    %451 = vst [vmem:[#allocation3 + $0x50] sm:$0xff] %v433
    %452 = vst [vmem:[#allocation3 + $0x58] sm:$0xff] %v434
    %453 = vst [vmem:[#allocation3 + $0x60] sm:$0xff] %v435
    %454 = vst [vmem:[#allocation3 + $0x68] sm:$0xff] %v436
    %455 = vst [vmem:[#allocation3 + $0x70] sm:$0xff] %v437
    %456 = vst [vmem:[#allocation3 + $0x78] sm:$0xff] %v438
    %457 = vst [vmem:[#allocation3 + $0x80] sm:$0xff] %v439
    %458 = vst [vmem:[#allocation3 + $0x88] sm:$0xff] %v440
    %v459 = vld [vmem:[#allocation8] sm:$0xff]
    %v460 = vld [vmem:[#allocation8 + $0x8] sm:$0xff]
    %v461 = vld [vmem:[#allocation8 + $0x10] sm:$0xff]
    %v462 = vld [vmem:[#allocation8 + $0x18] sm:$0xff]
    %v463 = vld [vmem:[#allocation8 + $0x20] sm:$0xff]
    %v464 = vld [vmem:[#allocation8 + $0x28] sm:$0xff]
    %v465 = vld [vmem:[#allocation8 + $0x30] sm:$0xff]
    %v466 = vld [vmem:[#allocation8 + $0x38] sm:$0xff]
    %v467 = vld [vmem:[#allocation8 + $0x40] sm:$0xff]
    %v468 = vld [vmem:[#allocation8 + $0x48] sm:$0xff]
    %v469 = vld [vmem:[#allocation8 + $0x50] sm:$0xff]
    %v470 = vld [vmem:[#allocation8 + $0x58] sm:$0xff]
    %v471 = vld [vmem:[#allocation8 + $0x60] sm:$0xff]
    %v472 = vld [vmem:[#allocation8 + $0x68] sm:$0xff]
    %v473 = vld [vmem:[#allocation8 + $0x70] sm:$0xff]
    %v474 = vld [vmem:[#allocation8 + $0x78] sm:$0xff]
    %v475 = vld [vmem:[#allocation8 + $0x80] sm:$0xff]
    %v476 = vld [vmem:[#allocation8 + $0x88] sm:$0xff]
    %v477 = vld [vmem:[#allocation8 + $0x90] sm:$0xff]
    %v478 = vld [vmem:[#allocation8 + $0x98] sm:$0xff]
    %v479 = vld [vmem:[#allocation8 + $0xa0] sm:$0xff]
    %v480 = vld [vmem:[#allocation8 + $0xa8] sm:$0xff]
    %v481 = vld [vmem:[#allocation8 + $0xb0] sm:$0xff]
    %v482 = vld [vmem:[#allocation8 + $0xb8] sm:$0xff]
    %v483 = vld [vmem:[#allocation8 + $0xc0] sm:$0xff]
    %v484 = vld [vmem:[#allocation8 + $0xc8] sm:$0xff]
    %v485 = vld [vmem:[#allocation8 + $0xd0] sm:$0xff]
    %v486 = vld [vmem:[#allocation8 + $0xd8] sm:$0xff]
    %v487 = vld [vmem:[#allocation8 + $0xe0] sm:$0xff]
    %v488 = vld [vmem:[#allocation8 + $0xe8] sm:$0xff]
    %v489 = vld [vmem:[#allocation8 + $0xf0] sm:$0xff]
    %v490 = vld [vmem:[#allocation8 + $0xf8] sm:$0xff]
    %491 = vst [vmem:[#allocation4] sm:$0xff] 0.0
    %492 = vst [vmem:[#allocation5] sm:$0xff] 0.0
    %s493 = smul.u32 0, 4
    %s494 = smul.addr %s493, 4
    %s495 = scalar_lea.vmem [#allocation3], %s494
    %v496 = vld [vmem:[%s495] sm:$0xff]
    %v497 = vld [vmem:[%s495 + $0x8] sm:$0xff]
    %v498 = vunpack.c.l.bf16 %v496
    %v499 = vunpack.c.h.bf16 %v496
    %v500 = vunpack.c.l.bf16 %v497
    %v501 = vunpack.c.h.bf16 %v497
    %v502 = vld [vmem:[#allocation4] sm:$0xff]
    %v503 = vpack.c.bf16 %v502, %v502
    %v536 = vunpack.c.l.b16 %v459
    %v537 = vunpack.c.h.b16 %v459
    %v538 = vunpack.c.l.b16 %v460
    %v539 = vunpack.c.h.b16 %v460
    %v540 = vunpack.c.l.b16 %v461
    %v541 = vunpack.c.h.b16 %v461
    %v542 = vunpack.c.l.b16 %v462
    %v543 = vunpack.c.h.b16 %v462
    %v544 = vunpack.c.l.b16 %v463
    %v545 = vunpack.c.h.b16 %v463
    %v546 = vunpack.c.l.b16 %v464
    %v547 = vunpack.c.h.b16 %v464
    %v548 = vunpack.c.l.b16 %v465
    %v549 = vunpack.c.h.b16 %v465
    %v550 = vunpack.c.l.b16 %v466
    %v551 = vunpack.c.h.b16 %v466
    %v552 = vunpack.c.l.b16 %v467
    %v553 = vunpack.c.h.b16 %v467
    %v554 = vunpack.c.l.b16 %v468
    %v555 = vunpack.c.h.b16 %v468
    %v556 = vunpack.c.l.b16 %v469
    %v557 = vunpack.c.h.b16 %v469
    %v558 = vunpack.c.l.b16 %v470
    %v559 = vunpack.c.h.b16 %v470
    %v560 = vunpack.c.l.b16 %v471
    %v561 = vunpack.c.h.b16 %v471
    %v562 = vunpack.c.l.b16 %v472
    %v563 = vunpack.c.h.b16 %v472
    %v564 = vunpack.c.l.b16 %v473
    %v565 = vunpack.c.h.b16 %v473
    %v566 = vunpack.c.l.b16 %v474
    %v567 = vunpack.c.h.b16 %v474
    %v568 = vunpack.c.l.b16 %v475
    %v569 = vunpack.c.h.b16 %v475
    %v570 = vunpack.c.l.b16 %v476
    %v571 = vunpack.c.h.b16 %v476
    %v572 = vunpack.c.l.b16 %v477
    %v573 = vunpack.c.h.b16 %v477
    %v574 = vunpack.c.l.b16 %v478
    %v575 = vunpack.c.h.b16 %v478
    %v576 = vunpack.c.l.b16 %v479
    %v577 = vunpack.c.h.b16 %v479
    %v578 = vunpack.c.l.b16 %v480
    %v579 = vunpack.c.h.b16 %v480
    %v580 = vunpack.c.l.b16 %v481
    %v581 = vunpack.c.h.b16 %v481
    %v582 = vunpack.c.l.b16 %v482
    %v583 = vunpack.c.h.b16 %v482
    %v584 = vunpack.c.l.b16 %v483
    %v585 = vunpack.c.h.b16 %v483
    %v586 = vunpack.c.l.b16 %v484
    %v587 = vunpack.c.h.b16 %v484
    %v588 = vunpack.c.l.b16 %v485
    %v589 = vunpack.c.h.b16 %v485
    %v590 = vunpack.c.l.b16 %v486
    %v591 = vunpack.c.h.b16 %v486
    %v592 = vunpack.c.l.b16 %v487
    %v593 = vunpack.c.h.b16 %v487
    %v594 = vunpack.c.l.b16 %v488
    %v595 = vunpack.c.h.b16 %v488
    %v596 = vunpack.c.l.b16 %v489
    %v597 = vunpack.c.h.b16 %v489
    %v598 = vunpack.c.l.b16 %v490
    %v599 = vunpack.c.h.b16 %v490
    %v600 = vpack.c.b16 %v540, %v536
    %v601 = vpack.c.b16 %v541, %v537
    %v602 = vpack.c.b16 %v542, %v538
    %v603 = vpack.c.b16 %v543, %v539
    %v604 = vpack.c.b16 %v548, %v544
    %v605 = vpack.c.b16 %v549, %v545
    %v606 = vpack.c.b16 %v550, %v546
    %v607 = vpack.c.b16 %v551, %v547
    %v608 = vpack.c.b16 %v556, %v552
    %v609 = vpack.c.b16 %v557, %v553
    %v610 = vpack.c.b16 %v558, %v554
    %v611 = vpack.c.b16 %v559, %v555
    %v612 = vpack.c.b16 %v564, %v560
    %v613 = vpack.c.b16 %v565, %v561
    %v614 = vpack.c.b16 %v566, %v562
    %v615 = vpack.c.b16 %v567, %v563
    %v616 = vpack.c.b16 %v572, %v568
    %v617 = vpack.c.b16 %v573, %v569
    %v618 = vpack.c.b16 %v574, %v570
    %v619 = vpack.c.b16 %v575, %v571
    %v620 = vpack.c.b16 %v580, %v576
    %v621 = vpack.c.b16 %v581, %v577
    %v622 = vpack.c.b16 %v582, %v578
    %v623 = vpack.c.b16 %v583, %v579
    %v624 = vpack.c.b16 %v588, %v584
    %v625 = vpack.c.b16 %v589, %v585
    %v626 = vpack.c.b16 %v590, %v586
    %v627 = vpack.c.b16 %v591, %v587
    %v628 = vpack.c.b16 %v596, %v592
    %v629 = vpack.c.b16 %v597, %v593
    %v630 = vpack.c.b16 %v598, %v594
    %v631 = vpack.c.b16 %v599, %v595
    %664 = vmatpush.bf16.msra.mxu0 %v628
    %665 = vmatpush.bf16.msra.mxu0 %v624
    %666 = vmatpush.bf16.msra.mxu0 %v620
    %667 = vmatpush.bf16.msra.mxu0 %v616
    %668 = vmatpush.bf16.msra.mxu0 %v612
    %669 = vmatpush.bf16.msra.mxu0 %v608
    %670 = vmatpush.bf16.msra.mxu0 %v604
    %671 = vmatpush.bf16.msra.mxu0 %v600
    %672 = vmatmul.bf16.gmra.mxu0 %v503
    %v673 = vpop.f32.mrf.mxu0
    %v674 = vadd.f32 0.0, %v673
    %v675 = vpop.f32.mrf.mxu0
    %676 = vdwg.mxu0
    %677 = vmatpush.bf16.msra.mxu0 %v629
    %678 = vmatpush.bf16.msra.mxu0 %v625
    %679 = vmatpush.bf16.msra.mxu0 %v621
    %680 = vmatpush.bf16.msra.mxu0 %v617
    %681 = vmatpush.bf16.msra.mxu0 %v613
    %682 = vmatpush.bf16.msra.mxu0 %v609
    %683 = vmatpush.bf16.msra.mxu0 %v605
    %684 = vmatpush.bf16.msra.mxu0 %v601
    %685 = vmatmul.bf16.gmra.mxu0 %v503
    %v686 = vpop.f32.mrf.mxu0
    %v687 = vadd.f32 0.0, %v686
    %v688 = vpop.f32.mrf.mxu0
    %689 = vdwg.mxu0
    %690 = vmatpush.bf16.msra.mxu0 %v630
    %691 = vmatpush.bf16.msra.mxu0 %v626
    %692 = vmatpush.bf16.msra.mxu0 %v622
    %693 = vmatpush.bf16.msra.mxu0 %v618
    %694 = vmatpush.bf16.msra.mxu0 %v614
    %695 = vmatpush.bf16.msra.mxu0 %v610
    %696 = vmatpush.bf16.msra.mxu0 %v606
    %697 = vmatpush.bf16.msra.mxu0 %v602
    %698 = vmatmul.bf16.gmra.mxu0 %v503
    %v699 = vpop.f32.mrf.mxu0
    %v700 = vadd.f32 0.0, %v699
    %v701 = vpop.f32.mrf.mxu0
    %702 = vdwg.mxu0
    %703 = vmatpush.bf16.msra.mxu0 %v631
    %704 = vmatpush.bf16.msra.mxu0 %v627
    %705 = vmatpush.bf16.msra.mxu0 %v623
    %706 = vmatpush.bf16.msra.mxu0 %v619
    %707 = vmatpush.bf16.msra.mxu0 %v615
    %708 = vmatpush.bf16.msra.mxu0 %v611
    %709 = vmatpush.bf16.msra.mxu0 %v607
    %710 = vmatpush.bf16.msra.mxu0 %v603
    %711 = vmatmul.bf16.gmra.mxu0 %v503
    %v712 = vpop.f32.mrf.mxu0
    %v713 = vadd.f32 0.0, %v712
    %v714 = vpop.f32.mrf.mxu0
    %715 = vdwg.mxu0
    %v716 = vadd.f32 %v498, %v674
    %v717 = vadd.f32 %v499, %v687
    %v718 = vadd.f32 %v500, %v700
    %v719 = vadd.f32 %v501, %v713
    %v720 = vxor.u32 %v716, 2147483648
    %v721 = vmul.f32 %v720, 1.442695
    %v722 = vpow.pop %v721
    %v723 = vadd.f32 %v722, 1.0
    %v724 = vrcp.pop %v723
    %v725 = vmul.f32 %v723, %v724
    %v726 = vsub.f32 1.0, %v725
    %v727 = vmul.f32 %v724, %v726
    %v728 = vadd.f32 %v724, %v727
    %vm729 = vweird.f32 %v723
    %vm730 = vweird.f32 %v724
    %vm731 = vmor %vm729, %vm730
    %v732 = vsel %vm731, %v724, %v728
    %v733 = vand.u32 2147483647, %v723
    %vm734 = vcmp.eq.f32.partialorder %v733, 8.507059e+37
    %v735 = vand.u32 %v723, 2147483648
    %v736 = vor.u32 1.1754944e-38, %v735
    %v737 = vsel %vm734, %v736, %v732
    %v738 = vmul.f32 1.0, %v737
    %v739 = vxor.u32 %v717, 2147483648
    %v740 = vmul.f32 %v739, 1.442695
    %v741 = vpow.pop %v740
    %v742 = vadd.f32 %v741, 1.0
    %v743 = vrcp.pop %v742
    %v744 = vmul.f32 %v742, %v743
    %v745 = vsub.f32 1.0, %v744
    %v746 = vmul.f32 %v743, %v745
    %v747 = vadd.f32 %v743, %v746
    %vm748 = vweird.f32 %v742
    %vm749 = vweird.f32 %v743
    %vm750 = vmor %vm748, %vm749
    %v751 = vsel %vm750, %v743, %v747
    %v752 = vand.u32 2147483647, %v742
    %vm753 = vcmp.eq.f32.partialorder %v752, 8.507059e+37
    %v754 = vand.u32 %v742, 2147483648
    %v755 = vor.u32 1.1754944e-38, %v754
    %v756 = vsel %vm753, %v755, %v751
    %v757 = vmul.f32 1.0, %v756
    %v758 = vtanh.pop %v718
    %v759 = vxor.u32 %v719, 2147483648
    %v760 = vmul.f32 %v759, 1.442695
    %v761 = vpow.pop %v760
    %v762 = vadd.f32 %v761, 1.0
    %v763 = vrcp.pop %v762
    %v764 = vmul.f32 %v762, %v763
    %v765 = vsub.f32 1.0, %v764
    %v766 = vmul.f32 %v763, %v765
    %v767 = vadd.f32 %v763, %v766
    %vm768 = vweird.f32 %v762
    %vm769 = vweird.f32 %v763
    %vm770 = vmor %vm768, %vm769
    %v771 = vsel %vm770, %v763, %v767
    %v772 = vand.u32 2147483647, %v762
    %vm773 = vcmp.eq.f32.partialorder %v772, 8.507059e+37
    %v774 = vand.u32 %v762, 2147483648
    %v775 = vor.u32 1.1754944e-38, %v774
    %v776 = vsel %vm773, %v775, %v771
    %v777 = vmul.f32 1.0, %v776
    %v778 = vld [vmem:[#allocation5] sm:$0xff]
    %v779 = vmul.f32 %v757, %v778
    %v780 = vmul.f32 %v738, %v758
    %v781 = vadd.f32 %v779, %v780
    %v782 = vtanh.pop %v781
    %v783 = vmul.f32 %v777, %v782
    %784 = vst [vmem:[#allocation5] sm:$0xff] %v781
    %785 = vst [vmem:[#allocation4] sm:$0xff] %v783
    %v786 = vpack.c.bf16 %v783, %v783
    %787 = vst [vmem:[#allocation2] sm:$0xf] %v786
    %s788 = smul.u32 1, 4
    %s789 = smul.addr %s788, 4
    %s790 = scalar_lea.vmem [#allocation3], %s789
    %v791 = vld [vmem:[%s790] sm:$0xff]
    %v792 = vld [vmem:[%s790 + $0x8] sm:$0xff]
    %v793 = vunpack.c.l.bf16 %v791
    %v794 = vunpack.c.h.bf16 %v791
    %v795 = vunpack.c.l.bf16 %v792
    %v796 = vunpack.c.h.bf16 %v792
    %v797 = vld [vmem:[#allocation4] sm:$0xff]
    %v798 = vpack.c.bf16 %v797, %v797
    %799 = vmatpush.bf16.msra.mxu0 %v628
    %800 = vmatpush.bf16.msra.mxu0 %v624
    %801 = vmatpush.bf16.msra.mxu0 %v620
    %802 = vmatpush.bf16.msra.mxu0 %v616
    %803 = vmatpush.bf16.msra.mxu0 %v612
    %804 = vmatpush.bf16.msra.mxu0 %v608
    %805 = vmatpush.bf16.msra.mxu0 %v604
    %806 = vmatpush.bf16.msra.mxu0 %v600
    %807 = vmatmul.bf16.gmra.mxu0 %v798
    %v808 = vpop.f32.mrf.mxu0
    %v809 = vadd.f32 0.0, %v808
    %v810 = vpop.f32.mrf.mxu0
    %811 = vdwg.mxu0
    %812 = vmatpush.bf16.msra.mxu0 %v629
    %813 = vmatpush.bf16.msra.mxu0 %v625
    %814 = vmatpush.bf16.msra.mxu0 %v621
    %815 = vmatpush.bf16.msra.mxu0 %v617
    %816 = vmatpush.bf16.msra.mxu0 %v613
    %817 = vmatpush.bf16.msra.mxu0 %v609
    %818 = vmatpush.bf16.msra.mxu0 %v605
    %819 = vmatpush.bf16.msra.mxu0 %v601
    %820 = vmatmul.bf16.gmra.mxu0 %v798
    %v821 = vpop.f32.mrf.mxu0
    %v822 = vadd.f32 0.0, %v821
    %v823 = vpop.f32.mrf.mxu0
    %824 = vdwg.mxu0
    %825 = vmatpush.bf16.msra.mxu0 %v630
    %826 = vmatpush.bf16.msra.mxu0 %v626
    %827 = vmatpush.bf16.msra.mxu0 %v622
    %828 = vmatpush.bf16.msra.mxu0 %v618
    %829 = vmatpush.bf16.msra.mxu0 %v614
    %830 = vmatpush.bf16.msra.mxu0 %v610
    %831 = vmatpush.bf16.msra.mxu0 %v606
    %832 = vmatpush.bf16.msra.mxu0 %v602
    %833 = vmatmul.bf16.gmra.mxu0 %v798
    %v834 = vpop.f32.mrf.mxu0
    %v835 = vadd.f32 0.0, %v834
    %v836 = vpop.f32.mrf.mxu0
    %837 = vdwg.mxu0
    %838 = vmatpush.bf16.msra.mxu0 %v631
    %839 = vmatpush.bf16.msra.mxu0 %v627
    %840 = vmatpush.bf16.msra.mxu0 %v623
    %841 = vmatpush.bf16.msra.mxu0 %v619
    %842 = vmatpush.bf16.msra.mxu0 %v615
    %843 = vmatpush.bf16.msra.mxu0 %v611
    %844 = vmatpush.bf16.msra.mxu0 %v607
    %845 = vmatpush.bf16.msra.mxu0 %v603
    %846 = vmatmul.bf16.gmra.mxu0 %v798
    %v847 = vpop.f32.mrf.mxu0
    %v848 = vadd.f32 0.0, %v847
    %v849 = vpop.f32.mrf.mxu0
    %850 = vdwg.mxu0
    %v851 = vadd.f32 %v793, %v809
    %v852 = vadd.f32 %v794, %v822
    %v853 = vadd.f32 %v795, %v835
    %v854 = vadd.f32 %v796, %v848
    %v855 = vxor.u32 %v851, 2147483648
    %v856 = vmul.f32 %v855, 1.442695
    %v857 = vpow.pop %v856
    %v858 = vadd.f32 %v857, 1.0
    %v859 = vrcp.pop %v858
    %v860 = vmul.f32 %v858, %v859
    %v861 = vsub.f32 1.0, %v860
    %v862 = vmul.f32 %v859, %v861
    %v863 = vadd.f32 %v859, %v862
    %vm864 = vweird.f32 %v858
    %vm865 = vweird.f32 %v859
    %vm866 = vmor %vm864, %vm865
    %v867 = vsel %vm866, %v859, %v863
    %v868 = vand.u32 2147483647, %v858
    %vm869 = vcmp.eq.f32.partialorder %v868, 8.507059e+37
    %v870 = vand.u32 %v858, 2147483648
    %v871 = vor.u32 1.1754944e-38, %v870
    %v872 = vsel %vm869, %v871, %v867
    %v873 = vmul.f32 1.0, %v872
    %v874 = vxor.u32 %v852, 2147483648
    %v875 = vmul.f32 %v874, 1.442695
    %v876 = vpow.pop %v875
    %v877 = vadd.f32 %v876, 1.0
    %v878 = vrcp.pop %v877
    %v879 = vmul.f32 %v877, %v878
    %v880 = vsub.f32 1.0, %v879
    %v881 = vmul.f32 %v878, %v880
    %v882 = vadd.f32 %v878, %v881
    %vm883 = vweird.f32 %v877
    %vm884 = vweird.f32 %v878
    %vm885 = vmor %vm883, %vm884
    %v886 = vsel %vm885, %v878, %v882
    %v887 = vand.u32 2147483647, %v877
    %vm888 = vcmp.eq.f32.partialorder %v887, 8.507059e+37
    %v889 = vand.u32 %v877, 2147483648
    %v890 = vor.u32 1.1754944e-38, %v889
    %v891 = vsel %vm888, %v890, %v886
    %v892 = vmul.f32 1.0, %v891
    %v893 = vtanh.pop %v853
    %v894 = vxor.u32 %v854, 2147483648
    %v895 = vmul.f32 %v894, 1.442695
    %v896 = vpow.pop %v895
    %v897 = vadd.f32 %v896, 1.0
    %v898 = vrcp.pop %v897
    %v899 = vmul.f32 %v897, %v898
    %v900 = vsub.f32 1.0, %v899
    %v901 = vmul.f32 %v898, %v900
    %v902 = vadd.f32 %v898, %v901
    %vm903 = vweird.f32 %v897
    %vm904 = vweird.f32 %v898
    %vm905 = vmor %vm903, %vm904
    %v906 = vsel %vm905, %v898, %v902
    %v907 = vand.u32 2147483647, %v897
    %vm908 = vcmp.eq.f32.partialorder %v907, 8.507059e+37
    %v909 = vand.u32 %v897, 2147483648
    %v910 = vor.u32 1.1754944e-38, %v909
    %v911 = vsel %vm908, %v910, %v906
    %v912 = vmul.f32 1.0, %v911
    %v913 = vld [vmem:[#allocation5] sm:$0xff]
    %v914 = vmul.f32 %v892, %v913
    %v915 = vmul.f32 %v873, %v893
    %v916 = vadd.f32 %v914, %v915
    %v917 = vtanh.pop %v916
    %v918 = vmul.f32 %v912, %v917
    %919 = vst [vmem:[#allocation5] sm:$0xff] %v916
    %920 = vst [vmem:[#allocation4] sm:$0xff] %v918
    %v921 = vpack.c.bf16 %v918, %v918
    %s922 = scalar_lea.vmem [#allocation2], 4
    %923 = vst [vmem:[%s922] sm:$0xf] %v921
    %s924 = smul.u32 2, 4
    %s925 = smul.addr %s924, 4
    %s926 = scalar_lea.vmem [#allocation3], %s925
    %v927 = vld [vmem:[%s926] sm:$0xff]
    %v928 = vld [vmem:[%s926 + $0x8] sm:$0xff]
    %v929 = vunpack.c.l.bf16 %v927
    %v930 = vunpack.c.h.bf16 %v927
    %v931 = vunpack.c.l.bf16 %v928
    %v932 = vunpack.c.h.bf16 %v928
    %v933 = vld [vmem:[#allocation4] sm:$0xff]
    %v934 = vpack.c.bf16 %v933, %v933
    %935 = vmatpush.bf16.msra.mxu0 %v628
    %936 = vmatpush.bf16.msra.mxu0 %v624
    %937 = vmatpush.bf16.msra.mxu0 %v620
    %938 = vmatpush.bf16.msra.mxu0 %v616
    %939 = vmatpush.bf16.msra.mxu0 %v612
    %940 = vmatpush.bf16.msra.mxu0 %v608
    %941 = vmatpush.bf16.msra.mxu0 %v604
    %942 = vmatpush.bf16.msra.mxu0 %v600
    %943 = vmatmul.bf16.gmra.mxu0 %v934
    %v944 = vpop.f32.mrf.mxu0
    %v945 = vadd.f32 0.0, %v944
    %v946 = vpop.f32.mrf.mxu0
    %947 = vdwg.mxu0
    %948 = vmatpush.bf16.msra.mxu0 %v629
    %949 = vmatpush.bf16.msra.mxu0 %v625
    %950 = vmatpush.bf16.msra.mxu0 %v621
    %951 = vmatpush.bf16.msra.mxu0 %v617
    %952 = vmatpush.bf16.msra.mxu0 %v613
    %953 = vmatpush.bf16.msra.mxu0 %v609
    %954 = vmatpush.bf16.msra.mxu0 %v605
    %955 = vmatpush.bf16.msra.mxu0 %v601
    %956 = vmatmul.bf16.gmra.mxu0 %v934
    %v957 = vpop.f32.mrf.mxu0
    %v958 = vadd.f32 0.0, %v957
    %v959 = vpop.f32.mrf.mxu0
    %960 = vdwg.mxu0
    %961 = vmatpush.bf16.msra.mxu0 %v630
    %962 = vmatpush.bf16.msra.mxu0 %v626
    %963 = vmatpush.bf16.msra.mxu0 %v622
    %964 = vmatpush.bf16.msra.mxu0 %v618
    %965 = vmatpush.bf16.msra.mxu0 %v614
    %966 = vmatpush.bf16.msra.mxu0 %v610
    %967 = vmatpush.bf16.msra.mxu0 %v606
    %968 = vmatpush.bf16.msra.mxu0 %v602
    %969 = vmatmul.bf16.gmra.mxu0 %v934
    %v970 = vpop.f32.mrf.mxu0
    %v971 = vadd.f32 0.0, %v970
    %v972 = vpop.f32.mrf.mxu0
    %973 = vdwg.mxu0
    %974 = vmatpush.bf16.msra.mxu0 %v631
    %975 = vmatpush.bf16.msra.mxu0 %v627
    %976 = vmatpush.bf16.msra.mxu0 %v623
    %977 = vmatpush.bf16.msra.mxu0 %v619
    %978 = vmatpush.bf16.msra.mxu0 %v615
    %979 = vmatpush.bf16.msra.mxu0 %v611
    %980 = vmatpush.bf16.msra.mxu0 %v607
    %981 = vmatpush.bf16.msra.mxu0 %v603
    %982 = vmatmul.bf16.gmra.mxu0 %v934
    %v983 = vpop.f32.mrf.mxu0
    %v984 = vadd.f32 0.0, %v983
    %v985 = vpop.f32.mrf.mxu0
    %986 = vdwg.mxu0
    %v987 = vadd.f32 %v929, %v945
    %v988 = vadd.f32 %v930, %v958
    %v989 = vadd.f32 %v931, %v971
    %v990 = vadd.f32 %v932, %v984
    %v991 = vxor.u32 %v987, 2147483648
    %v992 = vmul.f32 %v991, 1.442695
    %v993 = vpow.pop %v992
    %v994 = vadd.f32 %v993, 1.0
    %v995 = vrcp.pop %v994
    %v996 = vmul.f32 %v994, %v995
    %v997 = vsub.f32 1.0, %v996
    %v998 = vmul.f32 %v995, %v997
    %v999 = vadd.f32 %v995, %v998
    %vm1000 = vweird.f32 %v994
    %vm1001 = vweird.f32 %v995
    %vm1002 = vmor %vm1000, %vm1001
    %v1003 = vsel %vm1002, %v995, %v999
    %v1004 = vand.u32 2147483647, %v994
    %vm1005 = vcmp.eq.f32.partialorder %v1004, 8.507059e+37
    %v1006 = vand.u32 %v994, 2147483648
    %v1007 = vor.u32 1.1754944e-38, %v1006
    %v1008 = vsel %vm1005, %v1007, %v1003
    %v1009 = vmul.f32 1.0, %v1008
    %v1010 = vxor.u32 %v988, 2147483648
    %v1011 = vmul.f32 %v1010, 1.442695
    %v1012 = vpow.pop %v1011
    %v1013 = vadd.f32 %v1012, 1.0
    %v1014 = vrcp.pop %v1013
    %v1015 = vmul.f32 %v1013, %v1014
    %v1016 = vsub.f32 1.0, %v1015
    %v1017 = vmul.f32 %v1014, %v1016
    %v1018 = vadd.f32 %v1014, %v1017
    %vm1019 = vweird.f32 %v1013
    %vm1020 = vweird.f32 %v1014
    %vm1021 = vmor %vm1019, %vm1020
    %v1022 = vsel %vm1021, %v1014, %v1018
    %v1023 = vand.u32 2147483647, %v1013
    %vm1024 = vcmp.eq.f32.partialorder %v1023, 8.507059e+37
    %v1025 = vand.u32 %v1013, 2147483648
    %v1026 = vor.u32 1.1754944e-38, %v1025
    %v1027 = vsel %vm1024, %v1026, %v1022
    %v1028 = vmul.f32 1.0, %v1027
    %v1029 = vtanh.pop %v989
    %v1030 = vxor.u32 %v990, 2147483648
    %v1031 = vmul.f32 %v1030, 1.442695
    %v1032 = vpow.pop %v1031
    %v1033 = vadd.f32 %v1032, 1.0
    %v1034 = vrcp.pop %v1033
    %v1035 = vmul.f32 %v1033, %v1034
    %v1036 = vsub.f32 1.0, %v1035
    %v1037 = vmul.f32 %v1034, %v1036
    %v1038 = vadd.f32 %v1034, %v1037
    %vm1039 = vweird.f32 %v1033
    %vm1040 = vweird.f32 %v1034
    %vm1041 = vmor %vm1039, %vm1040
    %v1042 = vsel %vm1041, %v1034, %v1038
    %v1043 = vand.u32 2147483647, %v1033
    %vm1044 = vcmp.eq.f32.partialorder %v1043, 8.507059e+37
    %v1045 = vand.u32 %v1033, 2147483648
    %v1046 = vor.u32 1.1754944e-38, %v1045
    %v1047 = vsel %vm1044, %v1046, %v1042
    %v1048 = vmul.f32 1.0, %v1047
    %v1049 = vld [vmem:[#allocation5] sm:$0xff]
    %v1050 = vmul.f32 %v1028, %v1049
    %v1051 = vmul.f32 %v1009, %v1029
    %v1052 = vadd.f32 %v1050, %v1051
    %v1053 = vtanh.pop %v1052
    %v1054 = vmul.f32 %v1048, %v1053
    %1055 = vst [vmem:[#allocation5] sm:$0xff] %v1052
    %1056 = vst [vmem:[#allocation4] sm:$0xff] %v1054
    %v1057 = vpack.c.bf16 %v1054, %v1054
    %s1058 = scalar_lea.vmem [#allocation2], 8
    %1059 = vst [vmem:[%s1058] sm:$0xf] %v1057
    %s1060 = smul.u32 3, 4
    %s1061 = smul.addr %s1060, 4
    %s1062 = scalar_lea.vmem [#allocation3], %s1061
    %v1063 = vld [vmem:[%s1062] sm:$0xff]
    %v1064 = vld [vmem:[%s1062 + $0x8] sm:$0xff]
    %v1065 = vunpack.c.l.bf16 %v1063
    %v1066 = vunpack.c.h.bf16 %v1063
    %v1067 = vunpack.c.l.bf16 %v1064
    %v1068 = vunpack.c.h.bf16 %v1064
    %v1069 = vld [vmem:[#allocation4] sm:$0xff]
    %v1070 = vpack.c.bf16 %v1069, %v1069
    %1071 = vmatpush.bf16.msra.mxu0 %v628
    %1072 = vmatpush.bf16.msra.mxu0 %v624
    %1073 = vmatpush.bf16.msra.mxu0 %v620
    %1074 = vmatpush.bf16.msra.mxu0 %v616
    %1075 = vmatpush.bf16.msra.mxu0 %v612
    %1076 = vmatpush.bf16.msra.mxu0 %v608
    %1077 = vmatpush.bf16.msra.mxu0 %v604
    %1078 = vmatpush.bf16.msra.mxu0 %v600
    %1079 = vmatmul.bf16.gmra.mxu0 %v1070
    %v1080 = vpop.f32.mrf.mxu0
    %v1081 = vadd.f32 0.0, %v1080
    %v1082 = vpop.f32.mrf.mxu0
    %1083 = vdwg.mxu0
    %1084 = vmatpush.bf16.msra.mxu0 %v629
    %1085 = vmatpush.bf16.msra.mxu0 %v625
    %1086 = vmatpush.bf16.msra.mxu0 %v621
    %1087 = vmatpush.bf16.msra.mxu0 %v617
    %1088 = vmatpush.bf16.msra.mxu0 %v613
    %1089 = vmatpush.bf16.msra.mxu0 %v609
    %1090 = vmatpush.bf16.msra.mxu0 %v605
    %1091 = vmatpush.bf16.msra.mxu0 %v601
    %1092 = vmatmul.bf16.gmra.mxu0 %v1070
    %v1093 = vpop.f32.mrf.mxu0
    %v1094 = vadd.f32 0.0, %v1093
    %v1095 = vpop.f32.mrf.mxu0
    %1096 = vdwg.mxu0
    %1097 = vmatpush.bf16.msra.mxu0 %v630
    %1098 = vmatpush.bf16.msra.mxu0 %v626
    %1099 = vmatpush.bf16.msra.mxu0 %v622
    %1100 = vmatpush.bf16.msra.mxu0 %v618
    %1101 = vmatpush.bf16.msra.mxu0 %v614
    %1102 = vmatpush.bf16.msra.mxu0 %v610
    %1103 = vmatpush.bf16.msra.mxu0 %v606
    %1104 = vmatpush.bf16.msra.mxu0 %v602
    %1105 = vmatmul.bf16.gmra.mxu0 %v1070
    %v1106 = vpop.f32.mrf.mxu0
    %v1107 = vadd.f32 0.0, %v1106
    %v1108 = vpop.f32.mrf.mxu0
    %1109 = vdwg.mxu0
    %1110 = vmatpush.bf16.msra.mxu0 %v631
    %1111 = vmatpush.bf16.msra.mxu0 %v627
    %1112 = vmatpush.bf16.msra.mxu0 %v623
    %1113 = vmatpush.bf16.msra.mxu0 %v619
    %1114 = vmatpush.bf16.msra.mxu0 %v615
    %1115 = vmatpush.bf16.msra.mxu0 %v611
    %1116 = vmatpush.bf16.msra.mxu0 %v607
    %1117 = vmatpush.bf16.msra.mxu0 %v603
    %1118 = vmatmul.bf16.gmra.mxu0 %v1070
    %v1119 = vpop.f32.mrf.mxu0
    %v1120 = vadd.f32 0.0, %v1119
    %v1121 = vpop.f32.mrf.mxu0
    %1122 = vdwg.mxu0
    %v1123 = vadd.f32 %v1065, %v1081
    %v1124 = vadd.f32 %v1066, %v1094
    %v1125 = vadd.f32 %v1067, %v1107
    %v1126 = vadd.f32 %v1068, %v1120
    %v1127 = vxor.u32 %v1123, 2147483648
    %v1128 = vmul.f32 %v1127, 1.442695
    %v1129 = vpow.pop %v1128
    %v1130 = vadd.f32 %v1129, 1.0
    %v1131 = vrcp.pop %v1130
    %v1132 = vmul.f32 %v1130, %v1131
    %v1133 = vsub.f32 1.0, %v1132
    %v1134 = vmul.f32 %v1131, %v1133
    %v1135 = vadd.f32 %v1131, %v1134
    %vm1136 = vweird.f32 %v1130
    %vm1137 = vweird.f32 %v1131
    %vm1138 = vmor %vm1136, %vm1137
    %v1139 = vsel %vm1138, %v1131, %v1135
    %v1140 = vand.u32 2147483647, %v1130
    %vm1141 = vcmp.eq.f32.partialorder %v1140, 8.507059e+37
    %v1142 = vand.u32 %v1130, 2147483648
    %v1143 = vor.u32 1.1754944e-38, %v1142
    %v1144 = vsel %vm1141, %v1143, %v1139
    %v1145 = vmul.f32 1.0, %v1144
    %v1146 = vxor.u32 %v1124, 2147483648
    %v1147 = vmul.f32 %v1146, 1.442695
    %v1148 = vpow.pop %v1147
    %v1149 = vadd.f32 %v1148, 1.0
    %v1150 = vrcp.pop %v1149
    %v1151 = vmul.f32 %v1149, %v1150
    %v1152 = vsub.f32 1.0, %v1151
    %v1153 = vmul.f32 %v1150, %v1152
    %v1154 = vadd.f32 %v1150, %v1153
    %vm1155 = vweird.f32 %v1149
    %vm1156 = vweird.f32 %v1150
    %vm1157 = vmor %vm1155, %vm1156
    %v1158 = vsel %vm1157, %v1150, %v1154
    %v1159 = vand.u32 2147483647, %v1149
    %vm1160 = vcmp.eq.f32.partialorder %v1159, 8.507059e+37
    %v1161 = vand.u32 %v1149, 2147483648
    %v1162 = vor.u32 1.1754944e-38, %v1161
    %v1163 = vsel %vm1160, %v1162, %v1158
    %v1164 = vmul.f32 1.0, %v1163
    %v1165 = vtanh.pop %v1125
    %v1166 = vxor.u32 %v1126, 2147483648
    %v1167 = vmul.f32 %v1166, 1.442695
    %v1168 = vpow.pop %v1167
    %v1169 = vadd.f32 %v1168, 1.0
    %v1170 = vrcp.pop %v1169
    %v1171 = vmul.f32 %v1169, %v1170
    %v1172 = vsub.f32 1.0, %v1171
    %v1173 = vmul.f32 %v1170, %v1172
    %v1174 = vadd.f32 %v1170, %v1173
    %vm1175 = vweird.f32 %v1169
    %vm1176 = vweird.f32 %v1170
    %vm1177 = vmor %vm1175, %vm1176
    %v1178 = vsel %vm1177, %v1170, %v1174
    %v1179 = vand.u32 2147483647, %v1169
    %vm1180 = vcmp.eq.f32.partialorder %v1179, 8.507059e+37
    %v1181 = vand.u32 %v1169, 2147483648
    %v1182 = vor.u32 1.1754944e-38, %v1181
    %v1183 = vsel %vm1180, %v1182, %v1178
    %v1184 = vmul.f32 1.0, %v1183
    %v1185 = vld [vmem:[#allocation5] sm:$0xff]
    %v1186 = vmul.f32 %v1164, %v1185
    %v1187 = vmul.f32 %v1145, %v1165
    %v1188 = vadd.f32 %v1186, %v1187
    %v1189 = vtanh.pop %v1188
    %v1190 = vmul.f32 %v1184, %v1189
    %1191 = vst [vmem:[#allocation5] sm:$0xff] %v1188
    %1192 = vst [vmem:[#allocation4] sm:$0xff] %v1190
    %v1193 = vpack.c.bf16 %v1190, %v1190
    %s1194 = scalar_lea.vmem [#allocation2], 12
    %1195 = vst [vmem:[%s1194] sm:$0xf] %v1193
    %s1196 = smul.u32 4, 4
    %s1197 = smul.addr %s1196, 4
    %s1198 = scalar_lea.vmem [#allocation3], %s1197
    %v1199 = vld [vmem:[%s1198] sm:$0xff]
    %v1200 = vld [vmem:[%s1198 + $0x8] sm:$0xff]
    %v1201 = vunpack.c.l.bf16 %v1199
    %v1202 = vunpack.c.h.bf16 %v1199
    %v1203 = vunpack.c.l.bf16 %v1200
    %v1204 = vunpack.c.h.bf16 %v1200
    %v1205 = vld [vmem:[#allocation4] sm:$0xff]
    %v1206 = vpack.c.bf16 %v1205, %v1205
    %1207 = vmatpush.bf16.msra.mxu0 %v628
    %1208 = vmatpush.bf16.msra.mxu0 %v624
    %1209 = vmatpush.bf16.msra.mxu0 %v620
    %1210 = vmatpush.bf16.msra.mxu0 %v616
    %1211 = vmatpush.bf16.msra.mxu0 %v612
    %1212 = vmatpush.bf16.msra.mxu0 %v608
    %1213 = vmatpush.bf16.msra.mxu0 %v604
    %1214 = vmatpush.bf16.msra.mxu0 %v600
    %1215 = vmatmul.bf16.gmra.mxu0 %v1206
    %v1216 = vpop.f32.mrf.mxu0
    %v1217 = vadd.f32 0.0, %v1216
    %v1218 = vpop.f32.mrf.mxu0
    %1219 = vdwg.mxu0
    %1220 = vmatpush.bf16.msra.mxu0 %v629
    %1221 = vmatpush.bf16.msra.mxu0 %v625
    %1222 = vmatpush.bf16.msra.mxu0 %v621
    %1223 = vmatpush.bf16.msra.mxu0 %v617
    %1224 = vmatpush.bf16.msra.mxu0 %v613
    %1225 = vmatpush.bf16.msra.mxu0 %v609
    %1226 = vmatpush.bf16.msra.mxu0 %v605
    %1227 = vmatpush.bf16.msra.mxu0 %v601
    %1228 = vmatmul.bf16.gmra.mxu0 %v1206
    %v1229 = vpop.f32.mrf.mxu0
    %v1230 = vadd.f32 0.0, %v1229
    %v1231 = vpop.f32.mrf.mxu0
    %1232 = vdwg.mxu0
    %1233 = vmatpush.bf16.msra.mxu0 %v630
    %1234 = vmatpush.bf16.msra.mxu0 %v626
    %1235 = vmatpush.bf16.msra.mxu0 %v622
    %1236 = vmatpush.bf16.msra.mxu0 %v618
    %1237 = vmatpush.bf16.msra.mxu0 %v614
    %1238 = vmatpush.bf16.msra.mxu0 %v610
    %1239 = vmatpush.bf16.msra.mxu0 %v606
    %1240 = vmatpush.bf16.msra.mxu0 %v602
    %1241 = vmatmul.bf16.gmra.mxu0 %v1206
    %v1242 = vpop.f32.mrf.mxu0
    %v1243 = vadd.f32 0.0, %v1242
    %v1244 = vpop.f32.mrf.mxu0
    %1245 = vdwg.mxu0
    %1246 = vmatpush.bf16.msra.mxu0 %v631
    %1247 = vmatpush.bf16.msra.mxu0 %v627
    %1248 = vmatpush.bf16.msra.mxu0 %v623
    %1249 = vmatpush.bf16.msra.mxu0 %v619
    %1250 = vmatpush.bf16.msra.mxu0 %v615
    %1251 = vmatpush.bf16.msra.mxu0 %v611
    %1252 = vmatpush.bf16.msra.mxu0 %v607
    %1253 = vmatpush.bf16.msra.mxu0 %v603
    %1254 = vmatmul.bf16.gmra.mxu0 %v1206
    %v1255 = vpop.f32.mrf.mxu0
    %v1256 = vadd.f32 0.0, %v1255
    %v1257 = vpop.f32.mrf.mxu0
    %1258 = vdwg.mxu0
    %v1259 = vadd.f32 %v1201, %v1217
    %v1260 = vadd.f32 %v1202, %v1230
    %v1261 = vadd.f32 %v1203, %v1243
    %v1262 = vadd.f32 %v1204, %v1256
    %v1263 = vxor.u32 %v1259, 2147483648
    %v1264 = vmul.f32 %v1263, 1.442695
    %v1265 = vpow.pop %v1264
    %v1266 = vadd.f32 %v1265, 1.0
    %v1267 = vrcp.pop %v1266
    %v1268 = vmul.f32 %v1266, %v1267
    %v1269 = vsub.f32 1.0, %v1268
    %v1270 = vmul.f32 %v1267, %v1269
    %v1271 = vadd.f32 %v1267, %v1270
    %vm1272 = vweird.f32 %v1266
    %vm1273 = vweird.f32 %v1267
    %vm1274 = vmor %vm1272, %vm1273
    %v1275 = vsel %vm1274, %v1267, %v1271
    %v1276 = vand.u32 2147483647, %v1266
    %vm1277 = vcmp.eq.f32.partialorder %v1276, 8.507059e+37
    %v1278 = vand.u32 %v1266, 2147483648
    %v1279 = vor.u32 1.1754944e-38, %v1278
    %v1280 = vsel %vm1277, %v1279, %v1275
    %v1281 = vmul.f32 1.0, %v1280
    %v1282 = vxor.u32 %v1260, 2147483648
    %v1283 = vmul.f32 %v1282, 1.442695
    %v1284 = vpow.pop %v1283
    %v1285 = vadd.f32 %v1284, 1.0
    %v1286 = vrcp.pop %v1285
    %v1287 = vmul.f32 %v1285, %v1286
    %v1288 = vsub.f32 1.0, %v1287
    %v1289 = vmul.f32 %v1286, %v1288
    %v1290 = vadd.f32 %v1286, %v1289
    %vm1291 = vweird.f32 %v1285
    %vm1292 = vweird.f32 %v1286
    %vm1293 = vmor %vm1291, %vm1292
    %v1294 = vsel %vm1293, %v1286, %v1290
    %v1295 = vand.u32 2147483647, %v1285
    %vm1296 = vcmp.eq.f32.partialorder %v1295, 8.507059e+37
    %v1297 = vand.u32 %v1285, 2147483648
    %v1298 = vor.u32 1.1754944e-38, %v1297
    %v1299 = vsel %vm1296, %v1298, %v1294
    %v1300 = vmul.f32 1.0, %v1299
    %v1301 = vtanh.pop %v1261
    %v1302 = vxor.u32 %v1262, 2147483648
    %v1303 = vmul.f32 %v1302, 1.442695
    %v1304 = vpow.pop %v1303
    %v1305 = vadd.f32 %v1304, 1.0
    %v1306 = vrcp.pop %v1305
    %v1307 = vmul.f32 %v1305, %v1306
    %v1308 = vsub.f32 1.0, %v1307
    %v1309 = vmul.f32 %v1306, %v1308
    %v1310 = vadd.f32 %v1306, %v1309
    %vm1311 = vweird.f32 %v1305
    %vm1312 = vweird.f32 %v1306
    %vm1313 = vmor %vm1311, %vm1312
    %v1314 = vsel %vm1313, %v1306, %v1310
    %v1315 = vand.u32 2147483647, %v1305
    %vm1316 = vcmp.eq.f32.partialorder %v1315, 8.507059e+37
    %v1317 = vand.u32 %v1305, 2147483648
    %v1318 = vor.u32 1.1754944e-38, %v1317
    %v1319 = vsel %vm1316, %v1318, %v1314
    %v1320 = vmul.f32 1.0, %v1319
    %v1321 = vld [vmem:[#allocation5] sm:$0xff]
    %v1322 = vmul.f32 %v1300, %v1321
    %v1323 = vmul.f32 %v1281, %v1301
    %v1324 = vadd.f32 %v1322, %v1323
    %v1325 = vtanh.pop %v1324
    %v1326 = vmul.f32 %v1320, %v1325
    %1327 = vst [vmem:[#allocation5] sm:$0xff] %v1324
    %1328 = vst [vmem:[#allocation4] sm:$0xff] %v1326
    %v1329 = vpack.c.bf16 %v1326, %v1326
    %s1330 = scalar_lea.vmem [#allocation2], 16
    %1331 = vst [vmem:[%s1330] sm:$0xf] %v1329
    %s1332 = smul.u32 5, 4
    %s1333 = smul.addr %s1332, 4
    %s1334 = scalar_lea.vmem [#allocation3], %s1333
    %v1335 = vld [vmem:[%s1334] sm:$0xff]
    %v1336 = vld [vmem:[%s1334 + $0x8] sm:$0xff]
    %v1337 = vunpack.c.l.bf16 %v1335
    %v1338 = vunpack.c.h.bf16 %v1335
    %v1339 = vunpack.c.l.bf16 %v1336
    %v1340 = vunpack.c.h.bf16 %v1336
    %v1341 = vld [vmem:[#allocation4] sm:$0xff]
    %v1342 = vpack.c.bf16 %v1341, %v1341
    %1343 = vmatpush.bf16.msra.mxu0 %v628
    %1344 = vmatpush.bf16.msra.mxu0 %v624
    %1345 = vmatpush.bf16.msra.mxu0 %v620
    %1346 = vmatpush.bf16.msra.mxu0 %v616
    %1347 = vmatpush.bf16.msra.mxu0 %v612
    %1348 = vmatpush.bf16.msra.mxu0 %v608
    %1349 = vmatpush.bf16.msra.mxu0 %v604
    %1350 = vmatpush.bf16.msra.mxu0 %v600
    %1351 = vmatmul.bf16.gmra.mxu0 %v1342
    %v1352 = vpop.f32.mrf.mxu0
    %v1353 = vadd.f32 0.0, %v1352
    %v1354 = vpop.f32.mrf.mxu0
    %1355 = vdwg.mxu0
    %1356 = vmatpush.bf16.msra.mxu0 %v629
    %1357 = vmatpush.bf16.msra.mxu0 %v625
    %1358 = vmatpush.bf16.msra.mxu0 %v621
    %1359 = vmatpush.bf16.msra.mxu0 %v617
    %1360 = vmatpush.bf16.msra.mxu0 %v613
    %1361 = vmatpush.bf16.msra.mxu0 %v609
    %1362 = vmatpush.bf16.msra.mxu0 %v605
    %1363 = vmatpush.bf16.msra.mxu0 %v601
    %1364 = vmatmul.bf16.gmra.mxu0 %v1342
    %v1365 = vpop.f32.mrf.mxu0
    %v1366 = vadd.f32 0.0, %v1365
    %v1367 = vpop.f32.mrf.mxu0
    %1368 = vdwg.mxu0
    %1369 = vmatpush.bf16.msra.mxu0 %v630
    %1370 = vmatpush.bf16.msra.mxu0 %v626
    %1371 = vmatpush.bf16.msra.mxu0 %v622
    %1372 = vmatpush.bf16.msra.mxu0 %v618
    %1373 = vmatpush.bf16.msra.mxu0 %v614
    %1374 = vmatpush.bf16.msra.mxu0 %v610
    %1375 = vmatpush.bf16.msra.mxu0 %v606
    %1376 = vmatpush.bf16.msra.mxu0 %v602
    %1377 = vmatmul.bf16.gmra.mxu0 %v1342
    %v1378 = vpop.f32.mrf.mxu0
    %v1379 = vadd.f32 0.0, %v1378
    %v1380 = vpop.f32.mrf.mxu0
    %1381 = vdwg.mxu0
    %1382 = vmatpush.bf16.msra.mxu0 %v631
    %1383 = vmatpush.bf16.msra.mxu0 %v627
    %1384 = vmatpush.bf16.msra.mxu0 %v623
    %1385 = vmatpush.bf16.msra.mxu0 %v619
    %1386 = vmatpush.bf16.msra.mxu0 %v615
    %1387 = vmatpush.bf16.msra.mxu0 %v611
    %1388 = vmatpush.bf16.msra.mxu0 %v607
    %1389 = vmatpush.bf16.msra.mxu0 %v603
    %1390 = vmatmul.bf16.gmra.mxu0 %v1342
    %v1391 = vpop.f32.mrf.mxu0
    %v1392 = vadd.f32 0.0, %v1391
    %v1393 = vpop.f32.mrf.mxu0
    %1394 = vdwg.mxu0
    %v1395 = vadd.f32 %v1337, %v1353
    %v1396 = vadd.f32 %v1338, %v1366
    %v1397 = vadd.f32 %v1339, %v1379
    %v1398 = vadd.f32 %v1340, %v1392
    %v1399 = vxor.u32 %v1395, 2147483648
    %v1400 = vmul.f32 %v1399, 1.442695
    %v1401 = vpow.pop %v1400
    %v1402 = vadd.f32 %v1401, 1.0
    %v1403 = vrcp.pop %v1402
    %v1404 = vmul.f32 %v1402, %v1403
    %v1405 = vsub.f32 1.0, %v1404
    %v1406 = vmul.f32 %v1403, %v1405
    %v1407 = vadd.f32 %v1403, %v1406
    %vm1408 = vweird.f32 %v1402
    %vm1409 = vweird.f32 %v1403
    %vm1410 = vmor %vm1408, %vm1409
    %v1411 = vsel %vm1410, %v1403, %v1407
    %v1412 = vand.u32 2147483647, %v1402
    %vm1413 = vcmp.eq.f32.partialorder %v1412, 8.507059e+37
    %v1414 = vand.u32 %v1402, 2147483648
    %v1415 = vor.u32 1.1754944e-38, %v1414
    %v1416 = vsel %vm1413, %v1415, %v1411
    %v1417 = vmul.f32 1.0, %v1416
    %v1418 = vxor.u32 %v1396, 2147483648
    %v1419 = vmul.f32 %v1418, 1.442695
    %v1420 = vpow.pop %v1419
    %v1421 = vadd.f32 %v1420, 1.0
    %v1422 = vrcp.pop %v1421
    %v1423 = vmul.f32 %v1421, %v1422
    %v1424 = vsub.f32 1.0, %v1423
    %v1425 = vmul.f32 %v1422, %v1424
    %v1426 = vadd.f32 %v1422, %v1425
    %vm1427 = vweird.f32 %v1421
    %vm1428 = vweird.f32 %v1422
    %vm1429 = vmor %vm1427, %vm1428
    %v1430 = vsel %vm1429, %v1422, %v1426
    %v1431 = vand.u32 2147483647, %v1421
    %vm1432 = vcmp.eq.f32.partialorder %v1431, 8.507059e+37
    %v1433 = vand.u32 %v1421, 2147483648
    %v1434 = vor.u32 1.1754944e-38, %v1433
    %v1435 = vsel %vm1432, %v1434, %v1430
    %v1436 = vmul.f32 1.0, %v1435
    %v1437 = vtanh.pop %v1397
    %v1438 = vxor.u32 %v1398, 2147483648
    %v1439 = vmul.f32 %v1438, 1.442695
    %v1440 = vpow.pop %v1439
    %v1441 = vadd.f32 %v1440, 1.0
    %v1442 = vrcp.pop %v1441
    %v1443 = vmul.f32 %v1441, %v1442
    %v1444 = vsub.f32 1.0, %v1443
    %v1445 = vmul.f32 %v1442, %v1444
    %v1446 = vadd.f32 %v1442, %v1445
    %vm1447 = vweird.f32 %v1441
    %vm1448 = vweird.f32 %v1442
    %vm1449 = vmor %vm1447, %vm1448
    %v1450 = vsel %vm1449, %v1442, %v1446
    %v1451 = vand.u32 2147483647, %v1441
    %vm1452 = vcmp.eq.f32.partialorder %v1451, 8.507059e+37
    %v1453 = vand.u32 %v1441, 2147483648
    %v1454 = vor.u32 1.1754944e-38, %v1453
    %v1455 = vsel %vm1452, %v1454, %v1450
    %v1456 = vmul.f32 1.0, %v1455
    %v1457 = vld [vmem:[#allocation5] sm:$0xff]
    %v1458 = vmul.f32 %v1436, %v1457
    %v1459 = vmul.f32 %v1417, %v1437
    %v1460 = vadd.f32 %v1458, %v1459
    %v1461 = vtanh.pop %v1460
    %v1462 = vmul.f32 %v1456, %v1461
    %1463 = vst [vmem:[#allocation5] sm:$0xff] %v1460
    %1464 = vst [vmem:[#allocation4] sm:$0xff] %v1462
    %v1465 = vpack.c.bf16 %v1462, %v1462
    %s1466 = scalar_lea.vmem [#allocation2], 20
    %1467 = vst [vmem:[%s1466] sm:$0xf] %v1465
    %s1468 = smul.u32 6, 4
    %s1469 = smul.addr %s1468, 4
    %s1470 = scalar_lea.vmem [#allocation3], %s1469
    %v1471 = vld [vmem:[%s1470] sm:$0xff]
    %v1472 = vld [vmem:[%s1470 + $0x8] sm:$0xff]
    %v1473 = vunpack.c.l.bf16 %v1471
    %v1474 = vunpack.c.h.bf16 %v1471
    %v1475 = vunpack.c.l.bf16 %v1472
    %v1476 = vunpack.c.h.bf16 %v1472
    %v1477 = vld [vmem:[#allocation4] sm:$0xff]
    %v1478 = vpack.c.bf16 %v1477, %v1477
    %1479 = vmatpush.bf16.msra.mxu0 %v628
    %1480 = vmatpush.bf16.msra.mxu0 %v624
    %1481 = vmatpush.bf16.msra.mxu0 %v620
    %1482 = vmatpush.bf16.msra.mxu0 %v616
    %1483 = vmatpush.bf16.msra.mxu0 %v612
    %1484 = vmatpush.bf16.msra.mxu0 %v608
    %1485 = vmatpush.bf16.msra.mxu0 %v604
    %1486 = vmatpush.bf16.msra.mxu0 %v600
    %1487 = vmatmul.bf16.gmra.mxu0 %v1478
    %v1488 = vpop.f32.mrf.mxu0
    %v1489 = vadd.f32 0.0, %v1488
    %v1490 = vpop.f32.mrf.mxu0
    %1491 = vdwg.mxu0
    %1492 = vmatpush.bf16.msra.mxu0 %v629
    %1493 = vmatpush.bf16.msra.mxu0 %v625
    %1494 = vmatpush.bf16.msra.mxu0 %v621
    %1495 = vmatpush.bf16.msra.mxu0 %v617
    %1496 = vmatpush.bf16.msra.mxu0 %v613
    %1497 = vmatpush.bf16.msra.mxu0 %v609
    %1498 = vmatpush.bf16.msra.mxu0 %v605
    %1499 = vmatpush.bf16.msra.mxu0 %v601
    %1500 = vmatmul.bf16.gmra.mxu0 %v1478
    %v1501 = vpop.f32.mrf.mxu0
    %v1502 = vadd.f32 0.0, %v1501
    %v1503 = vpop.f32.mrf.mxu0
    %1504 = vdwg.mxu0
    %1505 = vmatpush.bf16.msra.mxu0 %v630
    %1506 = vmatpush.bf16.msra.mxu0 %v626
    %1507 = vmatpush.bf16.msra.mxu0 %v622
    %1508 = vmatpush.bf16.msra.mxu0 %v618
    %1509 = vmatpush.bf16.msra.mxu0 %v614
    %1510 = vmatpush.bf16.msra.mxu0 %v610
    %1511 = vmatpush.bf16.msra.mxu0 %v606
    %1512 = vmatpush.bf16.msra.mxu0 %v602
    %1513 = vmatmul.bf16.gmra.mxu0 %v1478
    %v1514 = vpop.f32.mrf.mxu0
    %v1515 = vadd.f32 0.0, %v1514
    %v1516 = vpop.f32.mrf.mxu0
    %1517 = vdwg.mxu0
    %1518 = vmatpush.bf16.msra.mxu0 %v631
    %1519 = vmatpush.bf16.msra.mxu0 %v627
    %1520 = vmatpush.bf16.msra.mxu0 %v623
    %1521 = vmatpush.bf16.msra.mxu0 %v619
    %1522 = vmatpush.bf16.msra.mxu0 %v615
    %1523 = vmatpush.bf16.msra.mxu0 %v611
    %1524 = vmatpush.bf16.msra.mxu0 %v607
    %1525 = vmatpush.bf16.msra.mxu0 %v603
    %1526 = vmatmul.bf16.gmra.mxu0 %v1478
    %v1527 = vpop.f32.mrf.mxu0
    %v1528 = vadd.f32 0.0, %v1527
    %v1529 = vpop.f32.mrf.mxu0
    %1530 = vdwg.mxu0
    %v1531 = vadd.f32 %v1473, %v1489
    %v1532 = vadd.f32 %v1474, %v1502
    %v1533 = vadd.f32 %v1475, %v1515
    %v1534 = vadd.f32 %v1476, %v1528
    %v1535 = vxor.u32 %v1531, 2147483648
    %v1536 = vmul.f32 %v1535, 1.442695
    %v1537 = vpow.pop %v1536
    %v1538 = vadd.f32 %v1537, 1.0
    %v1539 = vrcp.pop %v1538
    %v1540 = vmul.f32 %v1538, %v1539
    %v1541 = vsub.f32 1.0, %v1540
    %v1542 = vmul.f32 %v1539, %v1541
    %v1543 = vadd.f32 %v1539, %v1542
    %vm1544 = vweird.f32 %v1538
    %vm1545 = vweird.f32 %v1539
    %vm1546 = vmor %vm1544, %vm1545
    %v1547 = vsel %vm1546, %v1539, %v1543
    %v1548 = vand.u32 2147483647, %v1538
    %vm1549 = vcmp.eq.f32.partialorder %v1548, 8.507059e+37
    %v1550 = vand.u32 %v1538, 2147483648
    %v1551 = vor.u32 1.1754944e-38, %v1550
    %v1552 = vsel %vm1549, %v1551, %v1547
    %v1553 = vmul.f32 1.0, %v1552
    %v1554 = vxor.u32 %v1532, 2147483648
    %v1555 = vmul.f32 %v1554, 1.442695
    %v1556 = vpow.pop %v1555
    %v1557 = vadd.f32 %v1556, 1.0
    %v1558 = vrcp.pop %v1557
    %v1559 = vmul.f32 %v1557, %v1558
    %v1560 = vsub.f32 1.0, %v1559
    %v1561 = vmul.f32 %v1558, %v1560
    %v1562 = vadd.f32 %v1558, %v1561
    %vm1563 = vweird.f32 %v1557
    %vm1564 = vweird.f32 %v1558
    %vm1565 = vmor %vm1563, %vm1564
    %v1566 = vsel %vm1565, %v1558, %v1562
    %v1567 = vand.u32 2147483647, %v1557
    %vm1568 = vcmp.eq.f32.partialorder %v1567, 8.507059e+37
    %v1569 = vand.u32 %v1557, 2147483648
    %v1570 = vor.u32 1.1754944e-38, %v1569
    %v1571 = vsel %vm1568, %v1570, %v1566
    %v1572 = vmul.f32 1.0, %v1571
    %v1573 = vtanh.pop %v1533
    %v1574 = vxor.u32 %v1534, 2147483648
    %v1575 = vmul.f32 %v1574, 1.442695
    %v1576 = vpow.pop %v1575
    %v1577 = vadd.f32 %v1576, 1.0
    %v1578 = vrcp.pop %v1577
    %v1579 = vmul.f32 %v1577, %v1578
    %v1580 = vsub.f32 1.0, %v1579
    %v1581 = vmul.f32 %v1578, %v1580
    %v1582 = vadd.f32 %v1578, %v1581
    %vm1583 = vweird.f32 %v1577
    %vm1584 = vweird.f32 %v1578
    %vm1585 = vmor %vm1583, %vm1584
    %v1586 = vsel %vm1585, %v1578, %v1582
    %v1587 = vand.u32 2147483647, %v1577
    %vm1588 = vcmp.eq.f32.partialorder %v1587, 8.507059e+37
    %v1589 = vand.u32 %v1577, 2147483648
    %v1590 = vor.u32 1.1754944e-38, %v1589
    %v1591 = vsel %vm1588, %v1590, %v1586
    %v1592 = vmul.f32 1.0, %v1591
    %v1593 = vld [vmem:[#allocation5] sm:$0xff]
    %v1594 = vmul.f32 %v1572, %v1593
    %v1595 = vmul.f32 %v1553, %v1573
    %v1596 = vadd.f32 %v1594, %v1595
    %v1597 = vtanh.pop %v1596
    %v1598 = vmul.f32 %v1592, %v1597
    %1599 = vst [vmem:[#allocation5] sm:$0xff] %v1596
    %1600 = vst [vmem:[#allocation4] sm:$0xff] %v1598
    %v1601 = vpack.c.bf16 %v1598, %v1598
    %s1602 = scalar_lea.vmem [#allocation2], 24
    %1603 = vst [vmem:[%s1602] sm:$0xf] %v1601
    %s1604 = smul.u32 7, 4
    %s1605 = smul.addr %s1604, 4
    %s1606 = scalar_lea.vmem [#allocation3], %s1605
    %v1607 = vld [vmem:[%s1606] sm:$0xff]
    %v1608 = vld [vmem:[%s1606 + $0x8] sm:$0xff]
    %v1609 = vunpack.c.l.bf16 %v1607
    %v1610 = vunpack.c.h.bf16 %v1607
    %v1611 = vunpack.c.l.bf16 %v1608
    %v1612 = vunpack.c.h.bf16 %v1608
    %v1613 = vld [vmem:[#allocation4] sm:$0xff]
    %v1614 = vpack.c.bf16 %v1613, %v1613
    %1615 = vmatpush.bf16.msra.mxu0 %v628
    %1616 = vmatpush.bf16.msra.mxu0 %v624
    %1617 = vmatpush.bf16.msra.mxu0 %v620
    %1618 = vmatpush.bf16.msra.mxu0 %v616
    %1619 = vmatpush.bf16.msra.mxu0 %v612
    %1620 = vmatpush.bf16.msra.mxu0 %v608
    %1621 = vmatpush.bf16.msra.mxu0 %v604
    %1622 = vmatpush.bf16.msra.mxu0 %v600
    %1623 = vmatmul.bf16.gmra.mxu0 %v1614
    %v1624 = vpop.f32.mrf.mxu0
    %v1625 = vadd.f32 0.0, %v1624
    %v1626 = vpop.f32.mrf.mxu0
    %1627 = vdwg.mxu0
    %1628 = vmatpush.bf16.msra.mxu0 %v629
    %1629 = vmatpush.bf16.msra.mxu0 %v625
    %1630 = vmatpush.bf16.msra.mxu0 %v621
    %1631 = vmatpush.bf16.msra.mxu0 %v617
    %1632 = vmatpush.bf16.msra.mxu0 %v613
    %1633 = vmatpush.bf16.msra.mxu0 %v609
    %1634 = vmatpush.bf16.msra.mxu0 %v605
    %1635 = vmatpush.bf16.msra.mxu0 %v601
    %1636 = vmatmul.bf16.gmra.mxu0 %v1614
    %v1637 = vpop.f32.mrf.mxu0
    %v1638 = vadd.f32 0.0, %v1637
    %v1639 = vpop.f32.mrf.mxu0
    %1640 = vdwg.mxu0
    %1641 = vmatpush.bf16.msra.mxu0 %v630
    %1642 = vmatpush.bf16.msra.mxu0 %v626
    %1643 = vmatpush.bf16.msra.mxu0 %v622
    %1644 = vmatpush.bf16.msra.mxu0 %v618
    %1645 = vmatpush.bf16.msra.mxu0 %v614
    %1646 = vmatpush.bf16.msra.mxu0 %v610
    %1647 = vmatpush.bf16.msra.mxu0 %v606
    %1648 = vmatpush.bf16.msra.mxu0 %v602
    %1649 = vmatmul.bf16.gmra.mxu0 %v1614
    %v1650 = vpop.f32.mrf.mxu0
    %v1651 = vadd.f32 0.0, %v1650
    %v1652 = vpop.f32.mrf.mxu0
    %1653 = vdwg.mxu0
    %1654 = vmatpush.bf16.msra.mxu0 %v631
    %1655 = vmatpush.bf16.msra.mxu0 %v627
    %1656 = vmatpush.bf16.msra.mxu0 %v623
    %1657 = vmatpush.bf16.msra.mxu0 %v619
    %1658 = vmatpush.bf16.msra.mxu0 %v615
    %1659 = vmatpush.bf16.msra.mxu0 %v611
    %1660 = vmatpush.bf16.msra.mxu0 %v607
    %1661 = vmatpush.bf16.msra.mxu0 %v603
    %1662 = vmatmul.bf16.gmra.mxu0 %v1614
    %v1663 = vpop.f32.mrf.mxu0
    %v1664 = vadd.f32 0.0, %v1663
    %v1665 = vpop.f32.mrf.mxu0
    %1666 = vdwg.mxu0
    %v1667 = vadd.f32 %v1609, %v1625
    %v1668 = vadd.f32 %v1610, %v1638
    %v1669 = vadd.f32 %v1611, %v1651
    %v1670 = vadd.f32 %v1612, %v1664
    %v1671 = vxor.u32 %v1667, 2147483648
    %v1672 = vmul.f32 %v1671, 1.442695
    %v1673 = vpow.pop %v1672
    %v1674 = vadd.f32 %v1673, 1.0
    %v1675 = vrcp.pop %v1674
    %v1676 = vmul.f32 %v1674, %v1675
    %v1677 = vsub.f32 1.0, %v1676
    %v1678 = vmul.f32 %v1675, %v1677
    %v1679 = vadd.f32 %v1675, %v1678
    %vm1680 = vweird.f32 %v1674
    %vm1681 = vweird.f32 %v1675
    %vm1682 = vmor %vm1680, %vm1681
    %v1683 = vsel %vm1682, %v1675, %v1679
    %v1684 = vand.u32 2147483647, %v1674
    %vm1685 = vcmp.eq.f32.partialorder %v1684, 8.507059e+37
    %v1686 = vand.u32 %v1674, 2147483648
    %v1687 = vor.u32 1.1754944e-38, %v1686
    %v1688 = vsel %vm1685, %v1687, %v1683
    %v1689 = vmul.f32 1.0, %v1688
    %v1690 = vxor.u32 %v1668, 2147483648
    %v1691 = vmul.f32 %v1690, 1.442695
    %v1692 = vpow.pop %v1691
    %v1693 = vadd.f32 %v1692, 1.0
    %v1694 = vrcp.pop %v1693
    %v1695 = vmul.f32 %v1693, %v1694
    %v1696 = vsub.f32 1.0, %v1695
    %v1697 = vmul.f32 %v1694, %v1696
    %v1698 = vadd.f32 %v1694, %v1697
    %vm1699 = vweird.f32 %v1693
    %vm1700 = vweird.f32 %v1694
    %vm1701 = vmor %vm1699, %vm1700
    %v1702 = vsel %vm1701, %v1694, %v1698
    %v1703 = vand.u32 2147483647, %v1693
    %vm1704 = vcmp.eq.f32.partialorder %v1703, 8.507059e+37
    %v1705 = vand.u32 %v1693, 2147483648
    %v1706 = vor.u32 1.1754944e-38, %v1705
    %v1707 = vsel %vm1704, %v1706, %v1702
    %v1708 = vmul.f32 1.0, %v1707
    %v1709 = vtanh.pop %v1669
    %v1710 = vxor.u32 %v1670, 2147483648
    %v1711 = vmul.f32 %v1710, 1.442695
    %v1712 = vpow.pop %v1711
    %v1713 = vadd.f32 %v1712, 1.0
    %v1714 = vrcp.pop %v1713
    %v1715 = vmul.f32 %v1713, %v1714
    %v1716 = vsub.f32 1.0, %v1715
    %v1717 = vmul.f32 %v1714, %v1716
    %v1718 = vadd.f32 %v1714, %v1717
    %vm1719 = vweird.f32 %v1713
    %vm1720 = vweird.f32 %v1714
    %vm1721 = vmor %vm1719, %vm1720
    %v1722 = vsel %vm1721, %v1714, %v1718
    %v1723 = vand.u32 2147483647, %v1713
    %vm1724 = vcmp.eq.f32.partialorder %v1723, 8.507059e+37
    %v1725 = vand.u32 %v1713, 2147483648
    %v1726 = vor.u32 1.1754944e-38, %v1725
    %v1727 = vsel %vm1724, %v1726, %v1722
    %v1728 = vmul.f32 1.0, %v1727
    %v1729 = vld [vmem:[#allocation5] sm:$0xff]
    %v1730 = vmul.f32 %v1708, %v1729
    %v1731 = vmul.f32 %v1689, %v1709
    %v1732 = vadd.f32 %v1730, %v1731
    %v1733 = vtanh.pop %v1732
    %v1734 = vmul.f32 %v1728, %v1733
    %1735 = vst [vmem:[#allocation5] sm:$0xff] %v1732
    %1736 = vst [vmem:[#allocation4] sm:$0xff] %v1734
    %v1737 = vpack.c.bf16 %v1734, %v1734
    %s1738 = scalar_lea.vmem [#allocation2], 28
    %1739 = vst [vmem:[%s1738] sm:$0xf] %v1737
    %s1740 = smul.u32 8, 4
    %s1741 = smul.addr %s1740, 4
    %s1742 = scalar_lea.vmem [#allocation3], %s1741
    %v1743 = vld [vmem:[%s1742] sm:$0xff]
    %v1744 = vld [vmem:[%s1742 + $0x8] sm:$0xff]
    %v1745 = vunpack.c.l.bf16 %v1743
    %v1746 = vunpack.c.h.bf16 %v1743
    %v1747 = vunpack.c.l.bf16 %v1744
    %v1748 = vunpack.c.h.bf16 %v1744
    %v1749 = vld [vmem:[#allocation4] sm:$0xff]
    %v1750 = vpack.c.bf16 %v1749, %v1749
    %1751 = vmatpush.bf16.msra.mxu0 %v628
    %1752 = vmatpush.bf16.msra.mxu0 %v624
    %1753 = vmatpush.bf16.msra.mxu0 %v620
    %1754 = vmatpush.bf16.msra.mxu0 %v616
    %1755 = vmatpush.bf16.msra.mxu0 %v612
    %1756 = vmatpush.bf16.msra.mxu0 %v608
    %1757 = vmatpush.bf16.msra.mxu0 %v604
    %1758 = vmatpush.bf16.msra.mxu0 %v600
    %1759 = vmatmul.bf16.gmra.mxu0 %v1750
    %v1760 = vpop.f32.mrf.mxu0
    %v1761 = vadd.f32 0.0, %v1760
    %v1762 = vpop.f32.mrf.mxu0
    %1763 = vdwg.mxu0
    %1764 = vmatpush.bf16.msra.mxu0 %v629
    %1765 = vmatpush.bf16.msra.mxu0 %v625
    %1766 = vmatpush.bf16.msra.mxu0 %v621
    %1767 = vmatpush.bf16.msra.mxu0 %v617
    %1768 = vmatpush.bf16.msra.mxu0 %v613
    %1769 = vmatpush.bf16.msra.mxu0 %v609
    %1770 = vmatpush.bf16.msra.mxu0 %v605
    %1771 = vmatpush.bf16.msra.mxu0 %v601
    %1772 = vmatmul.bf16.gmra.mxu0 %v1750
    %v1773 = vpop.f32.mrf.mxu0
    %v1774 = vadd.f32 0.0, %v1773
    %v1775 = vpop.f32.mrf.mxu0
    %1776 = vdwg.mxu0
    %1777 = vmatpush.bf16.msra.mxu0 %v630
    %1778 = vmatpush.bf16.msra.mxu0 %v626
    %1779 = vmatpush.bf16.msra.mxu0 %v622
    %1780 = vmatpush.bf16.msra.mxu0 %v618
    %1781 = vmatpush.bf16.msra.mxu0 %v614
    %1782 = vmatpush.bf16.msra.mxu0 %v610
    %1783 = vmatpush.bf16.msra.mxu0 %v606
    %1784 = vmatpush.bf16.msra.mxu0 %v602
    %1785 = vmatmul.bf16.gmra.mxu0 %v1750
    %v1786 = vpop.f32.mrf.mxu0
    %v1787 = vadd.f32 0.0, %v1786
    %v1788 = vpop.f32.mrf.mxu0
    %1789 = vdwg.mxu0
    %1790 = vmatpush.bf16.msra.mxu0 %v631
    %1791 = vmatpush.bf16.msra.mxu0 %v627
    %1792 = vmatpush.bf16.msra.mxu0 %v623
    %1793 = vmatpush.bf16.msra.mxu0 %v619
    %1794 = vmatpush.bf16.msra.mxu0 %v615
    %1795 = vmatpush.bf16.msra.mxu0 %v611
    %1796 = vmatpush.bf16.msra.mxu0 %v607
    %1797 = vmatpush.bf16.msra.mxu0 %v603
    %1798 = vmatmul.bf16.gmra.mxu0 %v1750
    %v1799 = vpop.f32.mrf.mxu0
    %v1800 = vadd.f32 0.0, %v1799
    %v1801 = vpop.f32.mrf.mxu0
    %1802 = vdwg.mxu0
    %v1803 = vadd.f32 %v1745, %v1761
    %v1804 = vadd.f32 %v1746, %v1774
    %v1805 = vadd.f32 %v1747, %v1787
    %v1806 = vadd.f32 %v1748, %v1800
    %v1807 = vxor.u32 %v1803, 2147483648
    %v1808 = vmul.f32 %v1807, 1.442695
    %v1809 = vpow.pop %v1808
    %v1810 = vadd.f32 %v1809, 1.0
    %v1811 = vrcp.pop %v1810
    %v1812 = vmul.f32 %v1810, %v1811
    %v1813 = vsub.f32 1.0, %v1812
    %v1814 = vmul.f32 %v1811, %v1813
    %v1815 = vadd.f32 %v1811, %v1814
    %vm1816 = vweird.f32 %v1810
    %vm1817 = vweird.f32 %v1811
    %vm1818 = vmor %vm1816, %vm1817
    %v1819 = vsel %vm1818, %v1811, %v1815
    %v1820 = vand.u32 2147483647, %v1810
    %vm1821 = vcmp.eq.f32.partialorder %v1820, 8.507059e+37
    %v1822 = vand.u32 %v1810, 2147483648
    %v1823 = vor.u32 1.1754944e-38, %v1822
    %v1824 = vsel %vm1821, %v1823, %v1819
    %v1825 = vmul.f32 1.0, %v1824
    %v1826 = vxor.u32 %v1804, 2147483648
    %v1827 = vmul.f32 %v1826, 1.442695
    %v1828 = vpow.pop %v1827
    %v1829 = vadd.f32 %v1828, 1.0
    %v1830 = vrcp.pop %v1829
    %v1831 = vmul.f32 %v1829, %v1830
    %v1832 = vsub.f32 1.0, %v1831
    %v1833 = vmul.f32 %v1830, %v1832
    %v1834 = vadd.f32 %v1830, %v1833
    %vm1835 = vweird.f32 %v1829
    %vm1836 = vweird.f32 %v1830
    %vm1837 = vmor %vm1835, %vm1836
    %v1838 = vsel %vm1837, %v1830, %v1834
    %v1839 = vand.u32 2147483647, %v1829
    %vm1840 = vcmp.eq.f32.partialorder %v1839, 8.507059e+37
    %v1841 = vand.u32 %v1829, 2147483648
    %v1842 = vor.u32 1.1754944e-38, %v1841
    %v1843 = vsel %vm1840, %v1842, %v1838
    %v1844 = vmul.f32 1.0, %v1843
    %v1845 = vtanh.pop %v1805
    %v1846 = vxor.u32 %v1806, 2147483648
    %v1847 = vmul.f32 %v1846, 1.442695
    %v1848 = vpow.pop %v1847
    %v1849 = vadd.f32 %v1848, 1.0
    %v1850 = vrcp.pop %v1849
    %v1851 = vmul.f32 %v1849, %v1850
    %v1852 = vsub.f32 1.0, %v1851
    %v1853 = vmul.f32 %v1850, %v1852
    %v1854 = vadd.f32 %v1850, %v1853
    %vm1855 = vweird.f32 %v1849
    %vm1856 = vweird.f32 %v1850
    %vm1857 = vmor %vm1855, %vm1856
    %v1858 = vsel %vm1857, %v1850, %v1854
    %v1859 = vand.u32 2147483647, %v1849
    %vm1860 = vcmp.eq.f32.partialorder %v1859, 8.507059e+37
    %v1861 = vand.u32 %v1849, 2147483648
    %v1862 = vor.u32 1.1754944e-38, %v1861
    %v1863 = vsel %vm1860, %v1862, %v1858
    %v1864 = vmul.f32 1.0, %v1863
    %v1865 = vld [vmem:[#allocation5] sm:$0xff]
    %v1866 = vmul.f32 %v1844, %v1865
    %v1867 = vmul.f32 %v1825, %v1845
    %v1868 = vadd.f32 %v1866, %v1867
    %v1869 = vtanh.pop %v1868
    %v1870 = vmul.f32 %v1864, %v1869
    %1871 = vst [vmem:[#allocation5] sm:$0xff] %v1868
    %1872 = vst [vmem:[#allocation4] sm:$0xff] %v1870
    %v1873 = vpack.c.bf16 %v1870, %v1870
    %s1874 = scalar_lea.vmem [#allocation2], 32
    %1875 = vst [vmem:[%s1874] sm:$0xf] %v1873
    %v1876 = vld [vmem:[#allocation2] sm:$0xf]
    %v1877 = vld [vmem:[#allocation2 + $0x4] sm:$0xf]
    %v1878 = vld [vmem:[#allocation2 + $0x8] sm:$0xf]
    %v1879 = vld [vmem:[#allocation2 + $0xc] sm:$0xf]
    %v1880 = vld [vmem:[#allocation2 + $0x10] sm:$0xf]
    %v1881 = vld [vmem:[#allocation2 + $0x14] sm:$0xf]
    %v1882 = vld [vmem:[#allocation2 + $0x18] sm:$0xf]
    %v1883 = vld [vmem:[#allocation2 + $0x1c] sm:$0xf]
    %v1884 = vld [vmem:[#allocation2 + $0x20] sm:$0xf]
    %v1885 = vld [vmem:[#allocation6] sm:$0xff]
    %v1886 = vld [vmem:[#allocation6 + $0x8] sm:$0xff]
    %v1887 = vld [vmem:[#allocation6 + $0x10] sm:$0xff]
    %v1888 = vld [vmem:[#allocation6 + $0x18] sm:$0xff]
    %v1889 = vld [vmem:[#allocation6 + $0x20] sm:$0xff]
    %v1890 = vld [vmem:[#allocation6 + $0x28] sm:$0xff]
    %v1891 = vld [vmem:[#allocation6 + $0x30] sm:$0xff]
    %v1892 = vld [vmem:[#allocation6 + $0x38] sm:$0xff]
    %v1893 = vld [vmem:[#allocation6 + $0x40] sm:$0xff]
    %v1894 = vld [vmem:[#allocation6 + $0x48] sm:$0xff]
    %v1895 = vld [vmem:[#allocation6 + $0x50] sm:$0xff]
    %v1896 = vld [vmem:[#allocation6 + $0x58] sm:$0xff]
    %v1897 = vld [vmem:[#allocation6 + $0x60] sm:$0xff]
    %v1898 = vld [vmem:[#allocation6 + $0x68] sm:$0xff]
    %v1899 = vld [vmem:[#allocation6 + $0x70] sm:$0xff]
    %v1900 = vld [vmem:[#allocation6 + $0x78] sm:$0xff]
    %v1901 = vld [vmem:[#allocation6 + $0x80] sm:$0xff]
    %v1902 = vld [vmem:[#allocation6 + $0x88] sm:$0xff]
    %v1903 = vld [vmem:[#allocation6 + $0x90] sm:$0xff]
    %v1904 = vld [vmem:[#allocation6 + $0x98] sm:$0xff]
    %v1905 = vld [vmem:[#allocation6 + $0xa0] sm:$0xff]
    %v1906 = vld [vmem:[#allocation6 + $0xa8] sm:$0xff]
    %v1907 = vld [vmem:[#allocation6 + $0xb0] sm:$0xff]
    %v1908 = vld [vmem:[#allocation6 + $0xb8] sm:$0xff]
    %v1909 = vld [vmem:[#allocation6 + $0xc0] sm:$0xff]
    %v1910 = vld [vmem:[#allocation6 + $0xc8] sm:$0xff]
    %v1911 = vld [vmem:[#allocation6 + $0xd0] sm:$0xff]
    %v1912 = vld [vmem:[#allocation6 + $0xd8] sm:$0xff]
    %v1913 = vld [vmem:[#allocation6 + $0xe0] sm:$0xff]
    %v1914 = vld [vmem:[#allocation6 + $0xe8] sm:$0xff]
    %v1915 = vld [vmem:[#allocation6 + $0xf0] sm:$0xff]
    %v1916 = vld [vmem:[#allocation6 + $0xf8] sm:$0xff]
    %s1917 = scalar_lea.vmem %s4, 4
    %v1918 = vld [vmem:[%s1917] sm:$0xf]
    %v1920 = vperm.slane %v1918, 0
    %v1921 = vperm.slane %v1918, 1
    %v1922 = vperm.slane %v1918, 2
    %v1923 = vperm.slane %v1918, 3
    %v1937 = vunpack.c.l.b16 %v1876
    %v1938 = vunpack.c.l.b16 %v1877
    %v1939 = vunpack.c.l.b16 %v1878
    %v1940 = vunpack.c.l.b16 %v1879
    %v1941 = vunpack.c.l.b16 %v1880
    %v1942 = vunpack.c.l.b16 %v1881
    %v1943 = vunpack.c.l.b16 %v1882
    %v1944 = vunpack.c.l.b16 %v1883
    %v1945 = vunpack.c.l.b16 %v1884
    %v1946 = vpack.c.b16 %v1938, %v1937
    %v1947 = vpack.c.b16 %v1940, %v1939
    %v1948 = vpack.c.b16 %v1942, %v1941
    %v1949 = vpack.c.b16 %v1944, %v1943
    %v1950 = vpack.c.b16 %v1945, %v1945
    %v1988 = vunpack.c.l.b16 %v1885
    %v1989 = vunpack.c.h.b16 %v1885
    %v1990 = vunpack.c.l.b16 %v1886
    %v1991 = vunpack.c.h.b16 %v1886
    %v1992 = vunpack.c.l.b16 %v1887
    %v1993 = vunpack.c.h.b16 %v1887
    %v1994 = vunpack.c.l.b16 %v1888
    %v1995 = vunpack.c.h.b16 %v1888
    %v1996 = vunpack.c.l.b16 %v1889
    %v1997 = vunpack.c.h.b16 %v1889
    %v1998 = vunpack.c.l.b16 %v1890
    %v1999 = vunpack.c.h.b16 %v1890
    %v2000 = vunpack.c.l.b16 %v1891
    %v2001 = vunpack.c.h.b16 %v1891
    %v2002 = vunpack.c.l.b16 %v1892
    %v2003 = vunpack.c.h.b16 %v1892
    %v2004 = vunpack.c.l.b16 %v1893
    %v2005 = vunpack.c.h.b16 %v1893
    %v2006 = vunpack.c.l.b16 %v1894
    %v2007 = vunpack.c.h.b16 %v1894
    %v2008 = vunpack.c.l.b16 %v1895
    %v2009 = vunpack.c.h.b16 %v1895
    %v2010 = vunpack.c.l.b16 %v1896
    %v2011 = vunpack.c.h.b16 %v1896
    %v2012 = vunpack.c.l.b16 %v1897
    %v2013 = vunpack.c.h.b16 %v1897
    %v2014 = vunpack.c.l.b16 %v1898
    %v2015 = vunpack.c.h.b16 %v1898
    %v2016 = vunpack.c.l.b16 %v1899
    %v2017 = vunpack.c.h.b16 %v1899
    %v2018 = vunpack.c.l.b16 %v1900
    %v2019 = vunpack.c.h.b16 %v1900
    %v2020 = vunpack.c.l.b16 %v1901
    %v2021 = vunpack.c.h.b16 %v1901
    %v2022 = vunpack.c.l.b16 %v1902
    %v2023 = vunpack.c.h.b16 %v1902
    %v2024 = vunpack.c.l.b16 %v1903
    %v2025 = vunpack.c.h.b16 %v1903
    %v2026 = vunpack.c.l.b16 %v1904
    %v2027 = vunpack.c.h.b16 %v1904
    %v2028 = vunpack.c.l.b16 %v1905
    %v2029 = vunpack.c.h.b16 %v1905
    %v2030 = vunpack.c.l.b16 %v1906
    %v2031 = vunpack.c.h.b16 %v1906
    %v2032 = vunpack.c.l.b16 %v1907
    %v2033 = vunpack.c.h.b16 %v1907
    %v2034 = vunpack.c.l.b16 %v1908
    %v2035 = vunpack.c.h.b16 %v1908
    %v2036 = vunpack.c.l.b16 %v1909
    %v2037 = vunpack.c.h.b16 %v1909
    %v2038 = vunpack.c.l.b16 %v1910
    %v2039 = vunpack.c.h.b16 %v1910
    %v2040 = vunpack.c.l.b16 %v1911
    %v2041 = vunpack.c.h.b16 %v1911
    %v2042 = vunpack.c.l.b16 %v1912
    %v2043 = vunpack.c.h.b16 %v1912
    %v2044 = vunpack.c.l.b16 %v1913
    %v2045 = vunpack.c.h.b16 %v1913
    %v2046 = vunpack.c.l.b16 %v1914
    %v2047 = vunpack.c.h.b16 %v1914
    %v2048 = vunpack.c.l.b16 %v1915
    %v2049 = vunpack.c.h.b16 %v1915
    %v2050 = vunpack.c.l.b16 %v1916
    %v2051 = vunpack.c.h.b16 %v1916
    %v2052 = vpack.c.b16 %v1992, %v1988
    %v2053 = vpack.c.b16 %v1993, %v1989
    %v2054 = vpack.c.b16 %v1994, %v1990
    %v2055 = vpack.c.b16 %v1995, %v1991
    %v2056 = vpack.c.b16 %v2000, %v1996
    %v2057 = vpack.c.b16 %v2001, %v1997
    %v2058 = vpack.c.b16 %v2002, %v1998
    %v2059 = vpack.c.b16 %v2003, %v1999
    %v2060 = vpack.c.b16 %v2008, %v2004
    %v2061 = vpack.c.b16 %v2009, %v2005
    %v2062 = vpack.c.b16 %v2010, %v2006
    %v2063 = vpack.c.b16 %v2011, %v2007
    %v2064 = vpack.c.b16 %v2016, %v2012
    %v2065 = vpack.c.b16 %v2017, %v2013
    %v2066 = vpack.c.b16 %v2018, %v2014
    %v2067 = vpack.c.b16 %v2019, %v2015
    %v2068 = vpack.c.b16 %v2024, %v2020
    %v2069 = vpack.c.b16 %v2025, %v2021
    %v2070 = vpack.c.b16 %v2026, %v2022
    %v2071 = vpack.c.b16 %v2027, %v2023
    %v2072 = vpack.c.b16 %v2032, %v2028
    %v2073 = vpack.c.b16 %v2033, %v2029
    %v2074 = vpack.c.b16 %v2034, %v2030
    %v2075 = vpack.c.b16 %v2035, %v2031
    %v2076 = vpack.c.b16 %v2040, %v2036
    %v2077 = vpack.c.b16 %v2041, %v2037
    %v2078 = vpack.c.b16 %v2042, %v2038
    %v2079 = vpack.c.b16 %v2043, %v2039
    %v2080 = vpack.c.b16 %v2048, %v2044
    %v2081 = vpack.c.b16 %v2049, %v2045
    %v2082 = vpack.c.b16 %v2050, %v2046
    %v2083 = vpack.c.b16 %v2051, %v2047
    %2116 = vmatpush.bf16.msra.mxu0 %v2080
    %2117 = vmatpush.bf16.msra.mxu0 %v2076
    %2118 = vmatpush.bf16.msra.mxu0 %v2072
    %2119 = vmatpush.bf16.msra.mxu0 %v2068
    %2120 = vmatpush.bf16.msra.mxu0 %v2064
    %2121 = vmatpush.bf16.msra.mxu0 %v2060
    %2122 = vmatpush.bf16.msra.mxu0 %v2056
    %2123 = vmatpush.bf16.msra.mxu0 %v2052
    %2124 = vmatmul.bf16.gmra.mxu0 %v1946
    %v2125 = vpop.f32.mrf.mxu0
    %v2126 = vadd.f32 %v1920, %v2125
    %v2127 = vpop.f32.mrf.mxu0
    %v2128 = vadd.f32 %v1920, %v2127
    %2129 = vmatmul.bf16.gmra.mxu0 %v1947
    %v2130 = vpop.f32.mrf.mxu0
    %v2131 = vadd.f32 %v1920, %v2130
    %v2132 = vpop.f32.mrf.mxu0
    %v2133 = vadd.f32 %v1920, %v2132
    %2134 = vmatmul.bf16.gmra.mxu0 %v1948
    %v2135 = vpop.f32.mrf.mxu0
    %v2136 = vadd.f32 %v1920, %v2135
    %v2137 = vpop.f32.mrf.mxu0
    %v2138 = vadd.f32 %v1920, %v2137
    %2139 = vmatmul.bf16.gmra.mxu0 %v1949
    %v2140 = vpop.f32.mrf.mxu0
    %v2141 = vadd.f32 %v1920, %v2140
    %v2142 = vpop.f32.mrf.mxu0
    %v2143 = vadd.f32 %v1920, %v2142
    %2144 = vmatmul.bf16.gmra.mxu0 %v1950
    %v2145 = vpop.f32.mrf.mxu0
    %v2146 = vadd.f32 %v1920, %v2145
    %v2147 = vpop.f32.mrf.mxu0
    %2148 = vdwg.mxu0
    %2149 = vmatpush.bf16.msra.mxu0 %v2081
    %2150 = vmatpush.bf16.msra.mxu0 %v2077
    %2151 = vmatpush.bf16.msra.mxu0 %v2073
    %2152 = vmatpush.bf16.msra.mxu0 %v2069
    %2153 = vmatpush.bf16.msra.mxu0 %v2065
    %2154 = vmatpush.bf16.msra.mxu0 %v2061
    %2155 = vmatpush.bf16.msra.mxu0 %v2057
    %2156 = vmatpush.bf16.msra.mxu0 %v2053
    %2157 = vmatmul.bf16.gmra.mxu0 %v1946
    %v2158 = vpop.f32.mrf.mxu0
    %v2159 = vadd.f32 %v1921, %v2158
    %v2160 = vpop.f32.mrf.mxu0
    %v2161 = vadd.f32 %v1921, %v2160
    %2162 = vmatmul.bf16.gmra.mxu0 %v1947
    %v2163 = vpop.f32.mrf.mxu0
    %v2164 = vadd.f32 %v1921, %v2163
    %v2165 = vpop.f32.mrf.mxu0
    %v2166 = vadd.f32 %v1921, %v2165
    %2167 = vmatmul.bf16.gmra.mxu0 %v1948
    %v2168 = vpop.f32.mrf.mxu0
    %v2169 = vadd.f32 %v1921, %v2168
    %v2170 = vpop.f32.mrf.mxu0
    %v2171 = vadd.f32 %v1921, %v2170
    %2172 = vmatmul.bf16.gmra.mxu0 %v1949
    %v2173 = vpop.f32.mrf.mxu0
    %v2174 = vadd.f32 %v1921, %v2173
    %v2175 = vpop.f32.mrf.mxu0
    %v2176 = vadd.f32 %v1921, %v2175
    %2177 = vmatmul.bf16.gmra.mxu0 %v1950
    %v2178 = vpop.f32.mrf.mxu0
    %v2179 = vadd.f32 %v1921, %v2178
    %v2180 = vpop.f32.mrf.mxu0
    %2181 = vdwg.mxu0
    %2182 = vmatpush.bf16.msra.mxu0 %v2082
    %2183 = vmatpush.bf16.msra.mxu0 %v2078
    %2184 = vmatpush.bf16.msra.mxu0 %v2074
    %2185 = vmatpush.bf16.msra.mxu0 %v2070
    %2186 = vmatpush.bf16.msra.mxu0 %v2066
    %2187 = vmatpush.bf16.msra.mxu0 %v2062
    %2188 = vmatpush.bf16.msra.mxu0 %v2058
    %2189 = vmatpush.bf16.msra.mxu0 %v2054
    %2190 = vmatmul.bf16.gmra.mxu0 %v1946
    %v2191 = vpop.f32.mrf.mxu0
    %v2192 = vadd.f32 %v1922, %v2191
    %v2193 = vpop.f32.mrf.mxu0
    %v2194 = vadd.f32 %v1922, %v2193
    %2195 = vmatmul.bf16.gmra.mxu0 %v1947
    %v2196 = vpop.f32.mrf.mxu0
    %v2197 = vadd.f32 %v1922, %v2196
    %v2198 = vpop.f32.mrf.mxu0
    %v2199 = vadd.f32 %v1922, %v2198
    %2200 = vmatmul.bf16.gmra.mxu0 %v1948
    %v2201 = vpop.f32.mrf.mxu0
    %v2202 = vadd.f32 %v1922, %v2201
    %v2203 = vpop.f32.mrf.mxu0
    %v2204 = vadd.f32 %v1922, %v2203
    %2205 = vmatmul.bf16.gmra.mxu0 %v1949
    %v2206 = vpop.f32.mrf.mxu0
    %v2207 = vadd.f32 %v1922, %v2206
    %v2208 = vpop.f32.mrf.mxu0
    %v2209 = vadd.f32 %v1922, %v2208
    %2210 = vmatmul.bf16.gmra.mxu0 %v1950
    %v2211 = vpop.f32.mrf.mxu0
    %v2212 = vadd.f32 %v1922, %v2211
    %v2213 = vpop.f32.mrf.mxu0
    %2214 = vdwg.mxu0
    %2215 = vmatpush.bf16.msra.mxu0 %v2083
    %2216 = vmatpush.bf16.msra.mxu0 %v2079
    %2217 = vmatpush.bf16.msra.mxu0 %v2075
    %2218 = vmatpush.bf16.msra.mxu0 %v2071
    %2219 = vmatpush.bf16.msra.mxu0 %v2067
    %2220 = vmatpush.bf16.msra.mxu0 %v2063
    %2221 = vmatpush.bf16.msra.mxu0 %v2059
    %2222 = vmatpush.bf16.msra.mxu0 %v2055
    %2223 = vmatmul.bf16.gmra.mxu0 %v1946
    %v2224 = vpop.f32.mrf.mxu0
    %v2225 = vadd.f32 %v1923, %v2224
    %v2226 = vpop.f32.mrf.mxu0
    %v2227 = vadd.f32 %v1923, %v2226
    %2228 = vmatmul.bf16.gmra.mxu0 %v1947
    %v2229 = vpop.f32.mrf.mxu0
    %v2230 = vadd.f32 %v1923, %v2229
    %v2231 = vpop.f32.mrf.mxu0
    %v2232 = vadd.f32 %v1923, %v2231
    %2233 = vmatmul.bf16.gmra.mxu0 %v1948
    %v2234 = vpop.f32.mrf.mxu0
    %v2235 = vadd.f32 %v1923, %v2234
    %v2236 = vpop.f32.mrf.mxu0
    %v2237 = vadd.f32 %v1923, %v2236
    %2238 = vmatmul.bf16.gmra.mxu0 %v1949
    %v2239 = vpop.f32.mrf.mxu0
    %v2240 = vadd.f32 %v1923, %v2239
    %v2241 = vpop.f32.mrf.mxu0
    %v2242 = vadd.f32 %v1923, %v2241
    %2243 = vmatmul.bf16.gmra.mxu0 %v1950
    %v2244 = vpop.f32.mrf.mxu0
    %v2245 = vadd.f32 %v1923, %v2244
    %v2246 = vpop.f32.mrf.mxu0
    %2247 = vdwg.mxu0
    %v2248 = vpack.c.bf16 %v2159, %v2126
    %v2249 = vpack.c.bf16 %v2225, %v2192
    %v2250 = vpack.c.bf16 %v2161, %v2128
    %v2251 = vpack.c.bf16 %v2227, %v2194
    %v2252 = vpack.c.bf16 %v2164, %v2131
    %v2253 = vpack.c.bf16 %v2230, %v2197
    %v2254 = vpack.c.bf16 %v2166, %v2133
    %v2255 = vpack.c.bf16 %v2232, %v2199
    %v2256 = vpack.c.bf16 %v2169, %v2136
    %v2257 = vpack.c.bf16 %v2235, %v2202
    %v2258 = vpack.c.bf16 %v2171, %v2138
    %v2259 = vpack.c.bf16 %v2237, %v2204
    %v2260 = vpack.c.bf16 %v2174, %v2141
    %v2261 = vpack.c.bf16 %v2240, %v2207
    %v2262 = vpack.c.bf16 %v2176, %v2143
    %v2263 = vpack.c.bf16 %v2242, %v2209
    %v2264 = vpack.c.bf16 %v2179, %v2146
    %v2265 = vpack.c.bf16 %v2245, %v2212
    %2266 = vst [vmem:[#allocation3] sm:$0xff] %v2248
    %2267 = vst [vmem:[#allocation3 + $0x8] sm:$0xff] %v2249
    %2268 = vst [vmem:[#allocation3 + $0x10] sm:$0xff] %v2250
    %2269 = vst [vmem:[#allocation3 + $0x18] sm:$0xff] %v2251
    %2270 = vst [vmem:[#allocation3 + $0x20] sm:$0xff] %v2252
    %2271 = vst [vmem:[#allocation3 + $0x28] sm:$0xff] %v2253
    %2272 = vst [vmem:[#allocation3 + $0x30] sm:$0xff] %v2254
    %2273 = vst [vmem:[#allocation3 + $0x38] sm:$0xff] %v2255
    %2274 = vst [vmem:[#allocation3 + $0x40] sm:$0xff] %v2256
    %2275 = vst [vmem:[#allocation3 + $0x48] sm:$0xff] %v2257
    %2276 = vst [vmem:[#allocation3 + $0x50] sm:$0xff] %v2258
    %2277 = vst [vmem:[#allocation3 + $0x58] sm:$0xff] %v2259
    %2278 = vst [vmem:[#allocation3 + $0x60] sm:$0xff] %v2260
    %2279 = vst [vmem:[#allocation3 + $0x68] sm:$0xff] %v2261
    %2280 = vst [vmem:[#allocation3 + $0x70] sm:$0xff] %v2262
    %2281 = vst [vmem:[#allocation3 + $0x78] sm:$0xff] %v2263
    %2282 = vst [vmem:[#allocation3 + $0x80] sm:$0xff] %v2264
    %2283 = vst [vmem:[#allocation3 + $0x88] sm:$0xff] %v2265
    %s2284 = scalar_lea.vmem [#allocation8], 256
    %v2285 = vld [vmem:[%s2284] sm:$0xff]
    %v2286 = vld [vmem:[%s2284 + $0x8] sm:$0xff]
    %v2287 = vld [vmem:[%s2284 + $0x10] sm:$0xff]
    %v2288 = vld [vmem:[%s2284 + $0x18] sm:$0xff]
    %v2289 = vld [vmem:[%s2284 + $0x20] sm:$0xff]
    %v2290 = vld [vmem:[%s2284 + $0x28] sm:$0xff]
    %v2291 = vld [vmem:[%s2284 + $0x30] sm:$0xff]
    %v2292 = vld [vmem:[%s2284 + $0x38] sm:$0xff]
    %v2293 = vld [vmem:[%s2284 + $0x40] sm:$0xff]
    %v2294 = vld [vmem:[%s2284 + $0x48] sm:$0xff]
    %v2295 = vld [vmem:[%s2284 + $0x50] sm:$0xff]
    %v2296 = vld [vmem:[%s2284 + $0x58] sm:$0xff]
    %v2297 = vld [vmem:[%s2284 + $0x60] sm:$0xff]
    %v2298 = vld [vmem:[%s2284 + $0x68] sm:$0xff]
    %v2299 = vld [vmem:[%s2284 + $0x70] sm:$0xff]
    %v2300 = vld [vmem:[%s2284 + $0x78] sm:$0xff]
    %v2301 = vld [vmem:[%s2284 + $0x80] sm:$0xff]
    %v2302 = vld [vmem:[%s2284 + $0x88] sm:$0xff]
    %v2303 = vld [vmem:[%s2284 + $0x90] sm:$0xff]
    %v2304 = vld [vmem:[%s2284 + $0x98] sm:$0xff]
    %v2305 = vld [vmem:[%s2284 + $0xa0] sm:$0xff]
    %v2306 = vld [vmem:[%s2284 + $0xa8] sm:$0xff]
    %v2307 = vld [vmem:[%s2284 + $0xb0] sm:$0xff]
    %v2308 = vld [vmem:[%s2284 + $0xb8] sm:$0xff]
    %v2309 = vld [vmem:[%s2284 + $0xc0] sm:$0xff]
    %v2310 = vld [vmem:[%s2284 + $0xc8] sm:$0xff]
    %v2311 = vld [vmem:[%s2284 + $0xd0] sm:$0xff]
    %v2312 = vld [vmem:[%s2284 + $0xd8] sm:$0xff]
    %v2313 = vld [vmem:[%s2284 + $0xe0] sm:$0xff]
    %v2314 = vld [vmem:[%s2284 + $0xe8] sm:$0xff]
    %v2315 = vld [vmem:[%s2284 + $0xf0] sm:$0xff]
    %v2316 = vld [vmem:[%s2284 + $0xf8] sm:$0xff]
    %2317 = vst [vmem:[#allocation4] sm:$0xff] 0.0
    %2318 = vst [vmem:[#allocation5] sm:$0xff] 0.0
    %v2319 = vld [vmem:[%s495] sm:$0xff]
    %v2320 = vld [vmem:[%s495 + $0x8] sm:$0xff]
    %v2321 = vunpack.c.l.bf16 %v2319
    %v2322 = vunpack.c.h.bf16 %v2319
    %v2323 = vunpack.c.l.bf16 %v2320
    %v2324 = vunpack.c.h.bf16 %v2320
    %v2325 = vld [vmem:[#allocation4] sm:$0xff]
    %v2326 = vpack.c.bf16 %v2325, %v2325
    %v2359 = vunpack.c.l.b16 %v2285
    %v2360 = vunpack.c.h.b16 %v2285
    %v2361 = vunpack.c.l.b16 %v2286
    %v2362 = vunpack.c.h.b16 %v2286
    %v2363 = vunpack.c.l.b16 %v2287
    %v2364 = vunpack.c.h.b16 %v2287
    %v2365 = vunpack.c.l.b16 %v2288
    %v2366 = vunpack.c.h.b16 %v2288
    %v2367 = vunpack.c.l.b16 %v2289
    %v2368 = vunpack.c.h.b16 %v2289
    %v2369 = vunpack.c.l.b16 %v2290
    %v2370 = vunpack.c.h.b16 %v2290
    %v2371 = vunpack.c.l.b16 %v2291
    %v2372 = vunpack.c.h.b16 %v2291
    %v2373 = vunpack.c.l.b16 %v2292
    %v2374 = vunpack.c.h.b16 %v2292
    %v2375 = vunpack.c.l.b16 %v2293
    %v2376 = vunpack.c.h.b16 %v2293
    %v2377 = vunpack.c.l.b16 %v2294
    %v2378 = vunpack.c.h.b16 %v2294
    %v2379 = vunpack.c.l.b16 %v2295
    %v2380 = vunpack.c.h.b16 %v2295
    %v2381 = vunpack.c.l.b16 %v2296
    %v2382 = vunpack.c.h.b16 %v2296
    %v2383 = vunpack.c.l.b16 %v2297
    %v2384 = vunpack.c.h.b16 %v2297
    %v2385 = vunpack.c.l.b16 %v2298
    %v2386 = vunpack.c.h.b16 %v2298
    %v2387 = vunpack.c.l.b16 %v2299
    %v2388 = vunpack.c.h.b16 %v2299
    %v2389 = vunpack.c.l.b16 %v2300
    %v2390 = vunpack.c.h.b16 %v2300
    %v2391 = vunpack.c.l.b16 %v2301
    %v2392 = vunpack.c.h.b16 %v2301
    %v2393 = vunpack.c.l.b16 %v2302
    %v2394 = vunpack.c.h.b16 %v2302
    %v2395 = vunpack.c.l.b16 %v2303
    %v2396 = vunpack.c.h.b16 %v2303
    %v2397 = vunpack.c.l.b16 %v2304
    %v2398 = vunpack.c.h.b16 %v2304
    %v2399 = vunpack.c.l.b16 %v2305
    %v2400 = vunpack.c.h.b16 %v2305
    %v2401 = vunpack.c.l.b16 %v2306
    %v2402 = vunpack.c.h.b16 %v2306
    %v2403 = vunpack.c.l.b16 %v2307
    %v2404 = vunpack.c.h.b16 %v2307
    %v2405 = vunpack.c.l.b16 %v2308
    %v2406 = vunpack.c.h.b16 %v2308
    %v2407 = vunpack.c.l.b16 %v2309
    %v2408 = vunpack.c.h.b16 %v2309
    %v2409 = vunpack.c.l.b16 %v2310
    %v2410 = vunpack.c.h.b16 %v2310
    %v2411 = vunpack.c.l.b16 %v2311
    %v2412 = vunpack.c.h.b16 %v2311
    %v2413 = vunpack.c.l.b16 %v2312
    %v2414 = vunpack.c.h.b16 %v2312
    %v2415 = vunpack.c.l.b16 %v2313
    %v2416 = vunpack.c.h.b16 %v2313
    %v2417 = vunpack.c.l.b16 %v2314
    %v2418 = vunpack.c.h.b16 %v2314
    %v2419 = vunpack.c.l.b16 %v2315
    %v2420 = vunpack.c.h.b16 %v2315
    %v2421 = vunpack.c.l.b16 %v2316
    %v2422 = vunpack.c.h.b16 %v2316
    %v2423 = vpack.c.b16 %v2363, %v2359
    %v2424 = vpack.c.b16 %v2364, %v2360
    %v2425 = vpack.c.b16 %v2365, %v2361
    %v2426 = vpack.c.b16 %v2366, %v2362
    %v2427 = vpack.c.b16 %v2371, %v2367
    %v2428 = vpack.c.b16 %v2372, %v2368
    %v2429 = vpack.c.b16 %v2373, %v2369
    %v2430 = vpack.c.b16 %v2374, %v2370
    %v2431 = vpack.c.b16 %v2379, %v2375
    %v2432 = vpack.c.b16 %v2380, %v2376
    %v2433 = vpack.c.b16 %v2381, %v2377
    %v2434 = vpack.c.b16 %v2382, %v2378
    %v2435 = vpack.c.b16 %v2387, %v2383
    %v2436 = vpack.c.b16 %v2388, %v2384
    %v2437 = vpack.c.b16 %v2389, %v2385
    %v2438 = vpack.c.b16 %v2390, %v2386
    %v2439 = vpack.c.b16 %v2395, %v2391
    %v2440 = vpack.c.b16 %v2396, %v2392
    %v2441 = vpack.c.b16 %v2397, %v2393
    %v2442 = vpack.c.b16 %v2398, %v2394
    %v2443 = vpack.c.b16 %v2403, %v2399
    %v2444 = vpack.c.b16 %v2404, %v2400
    %v2445 = vpack.c.b16 %v2405, %v2401
    %v2446 = vpack.c.b16 %v2406, %v2402
    %v2447 = vpack.c.b16 %v2411, %v2407
    %v2448 = vpack.c.b16 %v2412, %v2408
    %v2449 = vpack.c.b16 %v2413, %v2409
    %v2450 = vpack.c.b16 %v2414, %v2410
    %v2451 = vpack.c.b16 %v2419, %v2415
    %v2452 = vpack.c.b16 %v2420, %v2416
    %v2453 = vpack.c.b16 %v2421, %v2417
    %v2454 = vpack.c.b16 %v2422, %v2418
    %2487 = vmatpush.bf16.msra.mxu0 %v2451
    %2488 = vmatpush.bf16.msra.mxu0 %v2447
    %2489 = vmatpush.bf16.msra.mxu0 %v2443
    %2490 = vmatpush.bf16.msra.mxu0 %v2439
    %2491 = vmatpush.bf16.msra.mxu0 %v2435
    %2492 = vmatpush.bf16.msra.mxu0 %v2431
    %2493 = vmatpush.bf16.msra.mxu0 %v2427
    %2494 = vmatpush.bf16.msra.mxu0 %v2423
    %2495 = vmatmul.bf16.gmra.mxu0 %v2326
    %v2496 = vpop.f32.mrf.mxu0
    %v2497 = vadd.f32 0.0, %v2496
    %v2498 = vpop.f32.mrf.mxu0
    %2499 = vdwg.mxu0
    %2500 = vmatpush.bf16.msra.mxu0 %v2452
    %2501 = vmatpush.bf16.msra.mxu0 %v2448
    %2502 = vmatpush.bf16.msra.mxu0 %v2444
    %2503 = vmatpush.bf16.msra.mxu0 %v2440
    %2504 = vmatpush.bf16.msra.mxu0 %v2436
    %2505 = vmatpush.bf16.msra.mxu0 %v2432
    %2506 = vmatpush.bf16.msra.mxu0 %v2428
    %2507 = vmatpush.bf16.msra.mxu0 %v2424
    %2508 = vmatmul.bf16.gmra.mxu0 %v2326
    %v2509 = vpop.f32.mrf.mxu0
    %v2510 = vadd.f32 0.0, %v2509
    %v2511 = vpop.f32.mrf.mxu0
    %2512 = vdwg.mxu0
    %2513 = vmatpush.bf16.msra.mxu0 %v2453
    %2514 = vmatpush.bf16.msra.mxu0 %v2449
    %2515 = vmatpush.bf16.msra.mxu0 %v2445
    %2516 = vmatpush.bf16.msra.mxu0 %v2441
    %2517 = vmatpush.bf16.msra.mxu0 %v2437
    %2518 = vmatpush.bf16.msra.mxu0 %v2433
    %2519 = vmatpush.bf16.msra.mxu0 %v2429
    %2520 = vmatpush.bf16.msra.mxu0 %v2425
    %2521 = vmatmul.bf16.gmra.mxu0 %v2326
    %v2522 = vpop.f32.mrf.mxu0
    %v2523 = vadd.f32 0.0, %v2522
    %v2524 = vpop.f32.mrf.mxu0
    %2525 = vdwg.mxu0
    %2526 = vmatpush.bf16.msra.mxu0 %v2454
    %2527 = vmatpush.bf16.msra.mxu0 %v2450
    %2528 = vmatpush.bf16.msra.mxu0 %v2446
    %2529 = vmatpush.bf16.msra.mxu0 %v2442
    %2530 = vmatpush.bf16.msra.mxu0 %v2438
    %2531 = vmatpush.bf16.msra.mxu0 %v2434
    %2532 = vmatpush.bf16.msra.mxu0 %v2430
    %2533 = vmatpush.bf16.msra.mxu0 %v2426
    %2534 = vmatmul.bf16.gmra.mxu0 %v2326
    %v2535 = vpop.f32.mrf.mxu0
    %v2536 = vadd.f32 0.0, %v2535
    %v2537 = vpop.f32.mrf.mxu0
    %2538 = vdwg.mxu0
    %v2539 = vadd.f32 %v2321, %v2497
    %v2540 = vadd.f32 %v2322, %v2510
    %v2541 = vadd.f32 %v2323, %v2523
    %v2542 = vadd.f32 %v2324, %v2536
    %v2543 = vxor.u32 %v2539, 2147483648
    %v2544 = vmul.f32 %v2543, 1.442695
    %v2545 = vpow.pop %v2544
    %v2546 = vadd.f32 %v2545, 1.0
    %v2547 = vrcp.pop %v2546
    %v2548 = vmul.f32 %v2546, %v2547
    %v2549 = vsub.f32 1.0, %v2548
    %v2550 = vmul.f32 %v2547, %v2549
    %v2551 = vadd.f32 %v2547, %v2550
    %vm2552 = vweird.f32 %v2546
    %vm2553 = vweird.f32 %v2547
    %vm2554 = vmor %vm2552, %vm2553
    %v2555 = vsel %vm2554, %v2547, %v2551
    %v2556 = vand.u32 2147483647, %v2546
    %vm2557 = vcmp.eq.f32.partialorder %v2556, 8.507059e+37
    %v2558 = vand.u32 %v2546, 2147483648
    %v2559 = vor.u32 1.1754944e-38, %v2558
    %v2560 = vsel %vm2557, %v2559, %v2555
    %v2561 = vmul.f32 1.0, %v2560
    %v2562 = vxor.u32 %v2540, 2147483648
    %v2563 = vmul.f32 %v2562, 1.442695
    %v2564 = vpow.pop %v2563
    %v2565 = vadd.f32 %v2564, 1.0
    %v2566 = vrcp.pop %v2565
    %v2567 = vmul.f32 %v2565, %v2566
    %v2568 = vsub.f32 1.0, %v2567
    %v2569 = vmul.f32 %v2566, %v2568
    %v2570 = vadd.f32 %v2566, %v2569
    %vm2571 = vweird.f32 %v2565
    %vm2572 = vweird.f32 %v2566
    %vm2573 = vmor %vm2571, %vm2572
    %v2574 = vsel %vm2573, %v2566, %v2570
    %v2575 = vand.u32 2147483647, %v2565
    %vm2576 = vcmp.eq.f32.partialorder %v2575, 8.507059e+37
    %v2577 = vand.u32 %v2565, 2147483648
    %v2578 = vor.u32 1.1754944e-38, %v2577
    %v2579 = vsel %vm2576, %v2578, %v2574
    %v2580 = vmul.f32 1.0, %v2579
    %v2581 = vtanh.pop %v2541
    %v2582 = vxor.u32 %v2542, 2147483648
    %v2583 = vmul.f32 %v2582, 1.442695
    %v2584 = vpow.pop %v2583
    %v2585 = vadd.f32 %v2584, 1.0
    %v2586 = vrcp.pop %v2585
    %v2587 = vmul.f32 %v2585, %v2586
    %v2588 = vsub.f32 1.0, %v2587
    %v2589 = vmul.f32 %v2586, %v2588
    %v2590 = vadd.f32 %v2586, %v2589
    %vm2591 = vweird.f32 %v2585
    %vm2592 = vweird.f32 %v2586
    %vm2593 = vmor %vm2591, %vm2592
    %v2594 = vsel %vm2593, %v2586, %v2590
    %v2595 = vand.u32 2147483647, %v2585
    %vm2596 = vcmp.eq.f32.partialorder %v2595, 8.507059e+37
    %v2597 = vand.u32 %v2585, 2147483648
    %v2598 = vor.u32 1.1754944e-38, %v2597
    %v2599 = vsel %vm2596, %v2598, %v2594
    %v2600 = vmul.f32 1.0, %v2599
    %v2601 = vld [vmem:[#allocation5] sm:$0xff]
    %v2602 = vmul.f32 %v2580, %v2601
    %v2603 = vmul.f32 %v2561, %v2581
    %v2604 = vadd.f32 %v2602, %v2603
    %v2605 = vtanh.pop %v2604
    %v2606 = vmul.f32 %v2600, %v2605
    %2607 = vst [vmem:[#allocation5] sm:$0xff] %v2604
    %2608 = vst [vmem:[#allocation4] sm:$0xff] %v2606
    %v2609 = vpack.c.bf16 %v2606, %v2606
    %2610 = vst [vmem:[#allocation2] sm:$0xf] %v2609
    %v2611 = vld [vmem:[%s790] sm:$0xff]
    %v2612 = vld [vmem:[%s790 + $0x8] sm:$0xff]
    %v2613 = vunpack.c.l.bf16 %v2611
    %v2614 = vunpack.c.h.bf16 %v2611
    %v2615 = vunpack.c.l.bf16 %v2612
    %v2616 = vunpack.c.h.bf16 %v2612
    %v2617 = vld [vmem:[#allocation4] sm:$0xff]
    %v2618 = vpack.c.bf16 %v2617, %v2617
    %2619 = vmatpush.bf16.msra.mxu0 %v2451
    %2620 = vmatpush.bf16.msra.mxu0 %v2447
    %2621 = vmatpush.bf16.msra.mxu0 %v2443
    %2622 = vmatpush.bf16.msra.mxu0 %v2439
    %2623 = vmatpush.bf16.msra.mxu0 %v2435
    %2624 = vmatpush.bf16.msra.mxu0 %v2431
    %2625 = vmatpush.bf16.msra.mxu0 %v2427
    %2626 = vmatpush.bf16.msra.mxu0 %v2423
    %2627 = vmatmul.bf16.gmra.mxu0 %v2618
    %v2628 = vpop.f32.mrf.mxu0
    %v2629 = vadd.f32 0.0, %v2628
    %v2630 = vpop.f32.mrf.mxu0
    %2631 = vdwg.mxu0
    %2632 = vmatpush.bf16.msra.mxu0 %v2452
    %2633 = vmatpush.bf16.msra.mxu0 %v2448
    %2634 = vmatpush.bf16.msra.mxu0 %v2444
    %2635 = vmatpush.bf16.msra.mxu0 %v2440
    %2636 = vmatpush.bf16.msra.mxu0 %v2436
    %2637 = vmatpush.bf16.msra.mxu0 %v2432
    %2638 = vmatpush.bf16.msra.mxu0 %v2428
    %2639 = vmatpush.bf16.msra.mxu0 %v2424
    %2640 = vmatmul.bf16.gmra.mxu0 %v2618
    %v2641 = vpop.f32.mrf.mxu0
    %v2642 = vadd.f32 0.0, %v2641
    %v2643 = vpop.f32.mrf.mxu0
    %2644 = vdwg.mxu0
    %2645 = vmatpush.bf16.msra.mxu0 %v2453
    %2646 = vmatpush.bf16.msra.mxu0 %v2449
    %2647 = vmatpush.bf16.msra.mxu0 %v2445
    %2648 = vmatpush.bf16.msra.mxu0 %v2441
    %2649 = vmatpush.bf16.msra.mxu0 %v2437
    %2650 = vmatpush.bf16.msra.mxu0 %v2433
    %2651 = vmatpush.bf16.msra.mxu0 %v2429
    %2652 = vmatpush.bf16.msra.mxu0 %v2425
    %2653 = vmatmul.bf16.gmra.mxu0 %v2618
    %v2654 = vpop.f32.mrf.mxu0
    %v2655 = vadd.f32 0.0, %v2654
    %v2656 = vpop.f32.mrf.mxu0
    %2657 = vdwg.mxu0
    %2658 = vmatpush.bf16.msra.mxu0 %v2454
    %2659 = vmatpush.bf16.msra.mxu0 %v2450
    %2660 = vmatpush.bf16.msra.mxu0 %v2446
    %2661 = vmatpush.bf16.msra.mxu0 %v2442
    %2662 = vmatpush.bf16.msra.mxu0 %v2438
    %2663 = vmatpush.bf16.msra.mxu0 %v2434
    %2664 = vmatpush.bf16.msra.mxu0 %v2430
    %2665 = vmatpush.bf16.msra.mxu0 %v2426
    %2666 = vmatmul.bf16.gmra.mxu0 %v2618
    %v2667 = vpop.f32.mrf.mxu0
    %v2668 = vadd.f32 0.0, %v2667
    %v2669 = vpop.f32.mrf.mxu0
    %2670 = vdwg.mxu0
    %v2671 = vadd.f32 %v2613, %v2629
    %v2672 = vadd.f32 %v2614, %v2642
    %v2673 = vadd.f32 %v2615, %v2655
    %v2674 = vadd.f32 %v2616, %v2668
    %v2675 = vxor.u32 %v2671, 2147483648
    %v2676 = vmul.f32 %v2675, 1.442695
    %v2677 = vpow.pop %v2676
    %v2678 = vadd.f32 %v2677, 1.0
    %v2679 = vrcp.pop %v2678
    %v2680 = vmul.f32 %v2678, %v2679
    %v2681 = vsub.f32 1.0, %v2680
    %v2682 = vmul.f32 %v2679, %v2681
    %v2683 = vadd.f32 %v2679, %v2682
    %vm2684 = vweird.f32 %v2678
    %vm2685 = vweird.f32 %v2679
    %vm2686 = vmor %vm2684, %vm2685
    %v2687 = vsel %vm2686, %v2679, %v2683
    %v2688 = vand.u32 2147483647, %v2678
    %vm2689 = vcmp.eq.f32.partialorder %v2688, 8.507059e+37
    %v2690 = vand.u32 %v2678, 2147483648
    %v2691 = vor.u32 1.1754944e-38, %v2690
    %v2692 = vsel %vm2689, %v2691, %v2687
    %v2693 = vmul.f32 1.0, %v2692
    %v2694 = vxor.u32 %v2672, 2147483648
    %v2695 = vmul.f32 %v2694, 1.442695
    %v2696 = vpow.pop %v2695
    %v2697 = vadd.f32 %v2696, 1.0
    %v2698 = vrcp.pop %v2697
    %v2699 = vmul.f32 %v2697, %v2698
    %v2700 = vsub.f32 1.0, %v2699
    %v2701 = vmul.f32 %v2698, %v2700
    %v2702 = vadd.f32 %v2698, %v2701
    %vm2703 = vweird.f32 %v2697
    %vm2704 = vweird.f32 %v2698
    %vm2705 = vmor %vm2703, %vm2704
    %v2706 = vsel %vm2705, %v2698, %v2702
    %v2707 = vand.u32 2147483647, %v2697
    %vm2708 = vcmp.eq.f32.partialorder %v2707, 8.507059e+37
    %v2709 = vand.u32 %v2697, 2147483648
    %v2710 = vor.u32 1.1754944e-38, %v2709
    %v2711 = vsel %vm2708, %v2710, %v2706
    %v2712 = vmul.f32 1.0, %v2711
    %v2713 = vtanh.pop %v2673
    %v2714 = vxor.u32 %v2674, 2147483648
    %v2715 = vmul.f32 %v2714, 1.442695
    %v2716 = vpow.pop %v2715
    %v2717 = vadd.f32 %v2716, 1.0
    %v2718 = vrcp.pop %v2717
    %v2719 = vmul.f32 %v2717, %v2718
    %v2720 = vsub.f32 1.0, %v2719
    %v2721 = vmul.f32 %v2718, %v2720
    %v2722 = vadd.f32 %v2718, %v2721
    %vm2723 = vweird.f32 %v2717
    %vm2724 = vweird.f32 %v2718
    %vm2725 = vmor %vm2723, %vm2724
    %v2726 = vsel %vm2725, %v2718, %v2722
    %v2727 = vand.u32 2147483647, %v2717
    %vm2728 = vcmp.eq.f32.partialorder %v2727, 8.507059e+37
    %v2729 = vand.u32 %v2717, 2147483648
    %v2730 = vor.u32 1.1754944e-38, %v2729
    %v2731 = vsel %vm2728, %v2730, %v2726
    %v2732 = vmul.f32 1.0, %v2731
    %v2733 = vld [vmem:[#allocation5] sm:$0xff]
    %v2734 = vmul.f32 %v2712, %v2733
    %v2735 = vmul.f32 %v2693, %v2713
    %v2736 = vadd.f32 %v2734, %v2735
    %v2737 = vtanh.pop %v2736
    %v2738 = vmul.f32 %v2732, %v2737
    %2739 = vst [vmem:[#allocation5] sm:$0xff] %v2736
    %2740 = vst [vmem:[#allocation4] sm:$0xff] %v2738
    %v2741 = vpack.c.bf16 %v2738, %v2738
    %2742 = vst [vmem:[%s922] sm:$0xf] %v2741
    %v2743 = vld [vmem:[%s926] sm:$0xff]
    %v2744 = vld [vmem:[%s926 + $0x8] sm:$0xff]
    %v2745 = vunpack.c.l.bf16 %v2743
    %v2746 = vunpack.c.h.bf16 %v2743
    %v2747 = vunpack.c.l.bf16 %v2744
    %v2748 = vunpack.c.h.bf16 %v2744
    %v2749 = vld [vmem:[#allocation4] sm:$0xff]
    %v2750 = vpack.c.bf16 %v2749, %v2749
    %2751 = vmatpush.bf16.msra.mxu0 %v2451
    %2752 = vmatpush.bf16.msra.mxu0 %v2447
    %2753 = vmatpush.bf16.msra.mxu0 %v2443
    %2754 = vmatpush.bf16.msra.mxu0 %v2439
    %2755 = vmatpush.bf16.msra.mxu0 %v2435
    %2756 = vmatpush.bf16.msra.mxu0 %v2431
    %2757 = vmatpush.bf16.msra.mxu0 %v2427
    %2758 = vmatpush.bf16.msra.mxu0 %v2423
    %2759 = vmatmul.bf16.gmra.mxu0 %v2750
    %v2760 = vpop.f32.mrf.mxu0
    %v2761 = vadd.f32 0.0, %v2760
    %v2762 = vpop.f32.mrf.mxu0
    %2763 = vdwg.mxu0
    %2764 = vmatpush.bf16.msra.mxu0 %v2452
    %2765 = vmatpush.bf16.msra.mxu0 %v2448
    %2766 = vmatpush.bf16.msra.mxu0 %v2444
    %2767 = vmatpush.bf16.msra.mxu0 %v2440
    %2768 = vmatpush.bf16.msra.mxu0 %v2436
    %2769 = vmatpush.bf16.msra.mxu0 %v2432
    %2770 = vmatpush.bf16.msra.mxu0 %v2428
    %2771 = vmatpush.bf16.msra.mxu0 %v2424
    %2772 = vmatmul.bf16.gmra.mxu0 %v2750
    %v2773 = vpop.f32.mrf.mxu0
    %v2774 = vadd.f32 0.0, %v2773
    %v2775 = vpop.f32.mrf.mxu0
    %2776 = vdwg.mxu0
    %2777 = vmatpush.bf16.msra.mxu0 %v2453
    %2778 = vmatpush.bf16.msra.mxu0 %v2449
    %2779 = vmatpush.bf16.msra.mxu0 %v2445
    %2780 = vmatpush.bf16.msra.mxu0 %v2441
    %2781 = vmatpush.bf16.msra.mxu0 %v2437
    %2782 = vmatpush.bf16.msra.mxu0 %v2433
    %2783 = vmatpush.bf16.msra.mxu0 %v2429
    %2784 = vmatpush.bf16.msra.mxu0 %v2425
    %2785 = vmatmul.bf16.gmra.mxu0 %v2750
    %v2786 = vpop.f32.mrf.mxu0
    %v2787 = vadd.f32 0.0, %v2786
    %v2788 = vpop.f32.mrf.mxu0
    %2789 = vdwg.mxu0
    %2790 = vmatpush.bf16.msra.mxu0 %v2454
    %2791 = vmatpush.bf16.msra.mxu0 %v2450
    %2792 = vmatpush.bf16.msra.mxu0 %v2446
    %2793 = vmatpush.bf16.msra.mxu0 %v2442
    %2794 = vmatpush.bf16.msra.mxu0 %v2438
    %2795 = vmatpush.bf16.msra.mxu0 %v2434
    %2796 = vmatpush.bf16.msra.mxu0 %v2430
    %2797 = vmatpush.bf16.msra.mxu0 %v2426
    %2798 = vmatmul.bf16.gmra.mxu0 %v2750
    %v2799 = vpop.f32.mrf.mxu0
    %v2800 = vadd.f32 0.0, %v2799
    %v2801 = vpop.f32.mrf.mxu0
    %2802 = vdwg.mxu0
    %v2803 = vadd.f32 %v2745, %v2761
    %v2804 = vadd.f32 %v2746, %v2774
    %v2805 = vadd.f32 %v2747, %v2787
    %v2806 = vadd.f32 %v2748, %v2800
    %v2807 = vxor.u32 %v2803, 2147483648
    %v2808 = vmul.f32 %v2807, 1.442695
    %v2809 = vpow.pop %v2808
    %v2810 = vadd.f32 %v2809, 1.0
    %v2811 = vrcp.pop %v2810
    %v2812 = vmul.f32 %v2810, %v2811
    %v2813 = vsub.f32 1.0, %v2812
    %v2814 = vmul.f32 %v2811, %v2813
    %v2815 = vadd.f32 %v2811, %v2814
    %vm2816 = vweird.f32 %v2810
    %vm2817 = vweird.f32 %v2811
    %vm2818 = vmor %vm2816, %vm2817
    %v2819 = vsel %vm2818, %v2811, %v2815
    %v2820 = vand.u32 2147483647, %v2810
    %vm2821 = vcmp.eq.f32.partialorder %v2820, 8.507059e+37
    %v2822 = vand.u32 %v2810, 2147483648
    %v2823 = vor.u32 1.1754944e-38, %v2822
    %v2824 = vsel %vm2821, %v2823, %v2819
    %v2825 = vmul.f32 1.0, %v2824
    %v2826 = vxor.u32 %v2804, 2147483648
    %v2827 = vmul.f32 %v2826, 1.442695
    %v2828 = vpow.pop %v2827
    %v2829 = vadd.f32 %v2828, 1.0
    %v2830 = vrcp.pop %v2829
    %v2831 = vmul.f32 %v2829, %v2830
    %v2832 = vsub.f32 1.0, %v2831
    %v2833 = vmul.f32 %v2830, %v2832
    %v2834 = vadd.f32 %v2830, %v2833
    %vm2835 = vweird.f32 %v2829
    %vm2836 = vweird.f32 %v2830
    %vm2837 = vmor %vm2835, %vm2836
    %v2838 = vsel %vm2837, %v2830, %v2834
    %v2839 = vand.u32 2147483647, %v2829
    %vm2840 = vcmp.eq.f32.partialorder %v2839, 8.507059e+37
    %v2841 = vand.u32 %v2829, 2147483648
    %v2842 = vor.u32 1.1754944e-38, %v2841
    %v2843 = vsel %vm2840, %v2842, %v2838
    %v2844 = vmul.f32 1.0, %v2843
    %v2845 = vtanh.pop %v2805
    %v2846 = vxor.u32 %v2806, 2147483648
    %v2847 = vmul.f32 %v2846, 1.442695
    %v2848 = vpow.pop %v2847
    %v2849 = vadd.f32 %v2848, 1.0
    %v2850 = vrcp.pop %v2849
    %v2851 = vmul.f32 %v2849, %v2850
    %v2852 = vsub.f32 1.0, %v2851
    %v2853 = vmul.f32 %v2850, %v2852
    %v2854 = vadd.f32 %v2850, %v2853
    %vm2855 = vweird.f32 %v2849
    %vm2856 = vweird.f32 %v2850
    %vm2857 = vmor %vm2855, %vm2856
    %v2858 = vsel %vm2857, %v2850, %v2854
    %v2859 = vand.u32 2147483647, %v2849
    %vm2860 = vcmp.eq.f32.partialorder %v2859, 8.507059e+37
    %v2861 = vand.u32 %v2849, 2147483648
    %v2862 = vor.u32 1.1754944e-38, %v2861
    %v2863 = vsel %vm2860, %v2862, %v2858
    %v2864 = vmul.f32 1.0, %v2863
    %v2865 = vld [vmem:[#allocation5] sm:$0xff]
    %v2866 = vmul.f32 %v2844, %v2865
    %v2867 = vmul.f32 %v2825, %v2845
    %v2868 = vadd.f32 %v2866, %v2867
    %v2869 = vtanh.pop %v2868
    %v2870 = vmul.f32 %v2864, %v2869
    %2871 = vst [vmem:[#allocation5] sm:$0xff] %v2868
    %2872 = vst [vmem:[#allocation4] sm:$0xff] %v2870
    %v2873 = vpack.c.bf16 %v2870, %v2870
    %2874 = vst [vmem:[%s1058] sm:$0xf] %v2873
    %v2875 = vld [vmem:[%s1062] sm:$0xff]
    %v2876 = vld [vmem:[%s1062 + $0x8] sm:$0xff]
    %v2877 = vunpack.c.l.bf16 %v2875
    %v2878 = vunpack.c.h.bf16 %v2875
    %v2879 = vunpack.c.l.bf16 %v2876
    %v2880 = vunpack.c.h.bf16 %v2876
    %v2881 = vld [vmem:[#allocation4] sm:$0xff]
    %v2882 = vpack.c.bf16 %v2881, %v2881
    %2883 = vmatpush.bf16.msra.mxu0 %v2451
    %2884 = vmatpush.bf16.msra.mxu0 %v2447
    %2885 = vmatpush.bf16.msra.mxu0 %v2443
    %2886 = vmatpush.bf16.msra.mxu0 %v2439
    %2887 = vmatpush.bf16.msra.mxu0 %v2435
    %2888 = vmatpush.bf16.msra.mxu0 %v2431
    %2889 = vmatpush.bf16.msra.mxu0 %v2427
    %2890 = vmatpush.bf16.msra.mxu0 %v2423
    %2891 = vmatmul.bf16.gmra.mxu0 %v2882
    %v2892 = vpop.f32.mrf.mxu0
    %v2893 = vadd.f32 0.0, %v2892
    %v2894 = vpop.f32.mrf.mxu0
    %2895 = vdwg.mxu0
    %2896 = vmatpush.bf16.msra.mxu0 %v2452
    %2897 = vmatpush.bf16.msra.mxu0 %v2448
    %2898 = vmatpush.bf16.msra.mxu0 %v2444
    %2899 = vmatpush.bf16.msra.mxu0 %v2440
    %2900 = vmatpush.bf16.msra.mxu0 %v2436
    %2901 = vmatpush.bf16.msra.mxu0 %v2432
    %2902 = vmatpush.bf16.msra.mxu0 %v2428
    %2903 = vmatpush.bf16.msra.mxu0 %v2424
    %2904 = vmatmul.bf16.gmra.mxu0 %v2882
    %v2905 = vpop.f32.mrf.mxu0
    %v2906 = vadd.f32 0.0, %v2905
    %v2907 = vpop.f32.mrf.mxu0
    %2908 = vdwg.mxu0
    %2909 = vmatpush.bf16.msra.mxu0 %v2453
    %2910 = vmatpush.bf16.msra.mxu0 %v2449
    %2911 = vmatpush.bf16.msra.mxu0 %v2445
    %2912 = vmatpush.bf16.msra.mxu0 %v2441
    %2913 = vmatpush.bf16.msra.mxu0 %v2437
    %2914 = vmatpush.bf16.msra.mxu0 %v2433
    %2915 = vmatpush.bf16.msra.mxu0 %v2429
    %2916 = vmatpush.bf16.msra.mxu0 %v2425
    %2917 = vmatmul.bf16.gmra.mxu0 %v2882
    %v2918 = vpop.f32.mrf.mxu0
    %v2919 = vadd.f32 0.0, %v2918
    %v2920 = vpop.f32.mrf.mxu0
    %2921 = vdwg.mxu0
    %2922 = vmatpush.bf16.msra.mxu0 %v2454
    %2923 = vmatpush.bf16.msra.mxu0 %v2450
    %2924 = vmatpush.bf16.msra.mxu0 %v2446
    %2925 = vmatpush.bf16.msra.mxu0 %v2442
    %2926 = vmatpush.bf16.msra.mxu0 %v2438
    %2927 = vmatpush.bf16.msra.mxu0 %v2434
    %2928 = vmatpush.bf16.msra.mxu0 %v2430
    %2929 = vmatpush.bf16.msra.mxu0 %v2426
    %2930 = vmatmul.bf16.gmra.mxu0 %v2882
    %v2931 = vpop.f32.mrf.mxu0
    %v2932 = vadd.f32 0.0, %v2931
    %v2933 = vpop.f32.mrf.mxu0
    %2934 = vdwg.mxu0
    %v2935 = vadd.f32 %v2877, %v2893
    %v2936 = vadd.f32 %v2878, %v2906
    %v2937 = vadd.f32 %v2879, %v2919
    %v2938 = vadd.f32 %v2880, %v2932
    %v2939 = vxor.u32 %v2935, 2147483648
    %v2940 = vmul.f32 %v2939, 1.442695
    %v2941 = vpow.pop %v2940
    %v2942 = vadd.f32 %v2941, 1.0
    %v2943 = vrcp.pop %v2942
    %v2944 = vmul.f32 %v2942, %v2943
    %v2945 = vsub.f32 1.0, %v2944
    %v2946 = vmul.f32 %v2943, %v2945
    %v2947 = vadd.f32 %v2943, %v2946
    %vm2948 = vweird.f32 %v2942
    %vm2949 = vweird.f32 %v2943
    %vm2950 = vmor %vm2948, %vm2949
    %v2951 = vsel %vm2950, %v2943, %v2947
    %v2952 = vand.u32 2147483647, %v2942
    %vm2953 = vcmp.eq.f32.partialorder %v2952, 8.507059e+37
    %v2954 = vand.u32 %v2942, 2147483648
    %v2955 = vor.u32 1.1754944e-38, %v2954
    %v2956 = vsel %vm2953, %v2955, %v2951
    %v2957 = vmul.f32 1.0, %v2956
    %v2958 = vxor.u32 %v2936, 2147483648
    %v2959 = vmul.f32 %v2958, 1.442695
    %v2960 = vpow.pop %v2959
    %v2961 = vadd.f32 %v2960, 1.0
    %v2962 = vrcp.pop %v2961
    %v2963 = vmul.f32 %v2961, %v2962
    %v2964 = vsub.f32 1.0, %v2963
    %v2965 = vmul.f32 %v2962, %v2964
    %v2966 = vadd.f32 %v2962, %v2965
    %vm2967 = vweird.f32 %v2961
    %vm2968 = vweird.f32 %v2962
    %vm2969 = vmor %vm2967, %vm2968
    %v2970 = vsel %vm2969, %v2962, %v2966
    %v2971 = vand.u32 2147483647, %v2961
    %vm2972 = vcmp.eq.f32.partialorder %v2971, 8.507059e+37
    %v2973 = vand.u32 %v2961, 2147483648
    %v2974 = vor.u32 1.1754944e-38, %v2973
    %v2975 = vsel %vm2972, %v2974, %v2970
    %v2976 = vmul.f32 1.0, %v2975
    %v2977 = vtanh.pop %v2937
    %v2978 = vxor.u32 %v2938, 2147483648
    %v2979 = vmul.f32 %v2978, 1.442695
    %v2980 = vpow.pop %v2979
    %v2981 = vadd.f32 %v2980, 1.0
    %v2982 = vrcp.pop %v2981
    %v2983 = vmul.f32 %v2981, %v2982
    %v2984 = vsub.f32 1.0, %v2983
    %v2985 = vmul.f32 %v2982, %v2984
    %v2986 = vadd.f32 %v2982, %v2985
    %vm2987 = vweird.f32 %v2981
    %vm2988 = vweird.f32 %v2982
    %vm2989 = vmor %vm2987, %vm2988
    %v2990 = vsel %vm2989, %v2982, %v2986
    %v2991 = vand.u32 2147483647, %v2981
    %vm2992 = vcmp.eq.f32.partialorder %v2991, 8.507059e+37
    %v2993 = vand.u32 %v2981, 2147483648
    %v2994 = vor.u32 1.1754944e-38, %v2993
    %v2995 = vsel %vm2992, %v2994, %v2990
    %v2996 = vmul.f32 1.0, %v2995
    %v2997 = vld [vmem:[#allocation5] sm:$0xff]
    %v2998 = vmul.f32 %v2976, %v2997
    %v2999 = vmul.f32 %v2957, %v2977
    %v3000 = vadd.f32 %v2998, %v2999
    %v3001 = vtanh.pop %v3000
    %v3002 = vmul.f32 %v2996, %v3001
    %3003 = vst [vmem:[#allocation5] sm:$0xff] %v3000
    %3004 = vst [vmem:[#allocation4] sm:$0xff] %v3002
    %v3005 = vpack.c.bf16 %v3002, %v3002
    %3006 = vst [vmem:[%s1194] sm:$0xf] %v3005
    %v3007 = vld [vmem:[%s1198] sm:$0xff]
    %v3008 = vld [vmem:[%s1198 + $0x8] sm:$0xff]
    %v3009 = vunpack.c.l.bf16 %v3007
    %v3010 = vunpack.c.h.bf16 %v3007
    %v3011 = vunpack.c.l.bf16 %v3008
    %v3012 = vunpack.c.h.bf16 %v3008
    %v3013 = vld [vmem:[#allocation4] sm:$0xff]
    %v3014 = vpack.c.bf16 %v3013, %v3013
    %3015 = vmatpush.bf16.msra.mxu0 %v2451
    %3016 = vmatpush.bf16.msra.mxu0 %v2447
    %3017 = vmatpush.bf16.msra.mxu0 %v2443
    %3018 = vmatpush.bf16.msra.mxu0 %v2439
    %3019 = vmatpush.bf16.msra.mxu0 %v2435
    %3020 = vmatpush.bf16.msra.mxu0 %v2431
    %3021 = vmatpush.bf16.msra.mxu0 %v2427
    %3022 = vmatpush.bf16.msra.mxu0 %v2423
    %3023 = vmatmul.bf16.gmra.mxu0 %v3014
    %v3024 = vpop.f32.mrf.mxu0
    %v3025 = vadd.f32 0.0, %v3024
    %v3026 = vpop.f32.mrf.mxu0
    %3027 = vdwg.mxu0
    %3028 = vmatpush.bf16.msra.mxu0 %v2452
    %3029 = vmatpush.bf16.msra.mxu0 %v2448
    %3030 = vmatpush.bf16.msra.mxu0 %v2444
    %3031 = vmatpush.bf16.msra.mxu0 %v2440
    %3032 = vmatpush.bf16.msra.mxu0 %v2436
    %3033 = vmatpush.bf16.msra.mxu0 %v2432
    %3034 = vmatpush.bf16.msra.mxu0 %v2428
    %3035 = vmatpush.bf16.msra.mxu0 %v2424
    %3036 = vmatmul.bf16.gmra.mxu0 %v3014
    %v3037 = vpop.f32.mrf.mxu0
    %v3038 = vadd.f32 0.0, %v3037
    %v3039 = vpop.f32.mrf.mxu0
    %3040 = vdwg.mxu0
    %3041 = vmatpush.bf16.msra.mxu0 %v2453
    %3042 = vmatpush.bf16.msra.mxu0 %v2449
    %3043 = vmatpush.bf16.msra.mxu0 %v2445
    %3044 = vmatpush.bf16.msra.mxu0 %v2441
    %3045 = vmatpush.bf16.msra.mxu0 %v2437
    %3046 = vmatpush.bf16.msra.mxu0 %v2433
    %3047 = vmatpush.bf16.msra.mxu0 %v2429
    %3048 = vmatpush.bf16.msra.mxu0 %v2425
    %3049 = vmatmul.bf16.gmra.mxu0 %v3014
    %v3050 = vpop.f32.mrf.mxu0
    %v3051 = vadd.f32 0.0, %v3050
    %v3052 = vpop.f32.mrf.mxu0
    %3053 = vdwg.mxu0
    %3054 = vmatpush.bf16.msra.mxu0 %v2454
    %3055 = vmatpush.bf16.msra.mxu0 %v2450
    %3056 = vmatpush.bf16.msra.mxu0 %v2446
    %3057 = vmatpush.bf16.msra.mxu0 %v2442
    %3058 = vmatpush.bf16.msra.mxu0 %v2438
    %3059 = vmatpush.bf16.msra.mxu0 %v2434
    %3060 = vmatpush.bf16.msra.mxu0 %v2430
    %3061 = vmatpush.bf16.msra.mxu0 %v2426
    %3062 = vmatmul.bf16.gmra.mxu0 %v3014
    %v3063 = vpop.f32.mrf.mxu0
    %v3064 = vadd.f32 0.0, %v3063
    %v3065 = vpop.f32.mrf.mxu0
    %3066 = vdwg.mxu0
    %v3067 = vadd.f32 %v3009, %v3025
    %v3068 = vadd.f32 %v3010, %v3038
    %v3069 = vadd.f32 %v3011, %v3051
    %v3070 = vadd.f32 %v3012, %v3064
    %v3071 = vxor.u32 %v3067, 2147483648
    %v3072 = vmul.f32 %v3071, 1.442695
    %v3073 = vpow.pop %v3072
    %v3074 = vadd.f32 %v3073, 1.0
    %v3075 = vrcp.pop %v3074
    %v3076 = vmul.f32 %v3074, %v3075
    %v3077 = vsub.f32 1.0, %v3076
    %v3078 = vmul.f32 %v3075, %v3077
    %v3079 = vadd.f32 %v3075, %v3078
    %vm3080 = vweird.f32 %v3074
    %vm3081 = vweird.f32 %v3075
    %vm3082 = vmor %vm3080, %vm3081
    %v3083 = vsel %vm3082, %v3075, %v3079
    %v3084 = vand.u32 2147483647, %v3074
    %vm3085 = vcmp.eq.f32.partialorder %v3084, 8.507059e+37
    %v3086 = vand.u32 %v3074, 2147483648
    %v3087 = vor.u32 1.1754944e-38, %v3086
    %v3088 = vsel %vm3085, %v3087, %v3083
    %v3089 = vmul.f32 1.0, %v3088
    %v3090 = vxor.u32 %v3068, 2147483648
    %v3091 = vmul.f32 %v3090, 1.442695
    %v3092 = vpow.pop %v3091
    %v3093 = vadd.f32 %v3092, 1.0
    %v3094 = vrcp.pop %v3093
    %v3095 = vmul.f32 %v3093, %v3094
    %v3096 = vsub.f32 1.0, %v3095
    %v3097 = vmul.f32 %v3094, %v3096
    %v3098 = vadd.f32 %v3094, %v3097
    %vm3099 = vweird.f32 %v3093
    %vm3100 = vweird.f32 %v3094
    %vm3101 = vmor %vm3099, %vm3100
    %v3102 = vsel %vm3101, %v3094, %v3098
    %v3103 = vand.u32 2147483647, %v3093
    %vm3104 = vcmp.eq.f32.partialorder %v3103, 8.507059e+37
    %v3105 = vand.u32 %v3093, 2147483648
    %v3106 = vor.u32 1.1754944e-38, %v3105
    %v3107 = vsel %vm3104, %v3106, %v3102
    %v3108 = vmul.f32 1.0, %v3107
    %v3109 = vtanh.pop %v3069
    %v3110 = vxor.u32 %v3070, 2147483648
    %v3111 = vmul.f32 %v3110, 1.442695
    %v3112 = vpow.pop %v3111
    %v3113 = vadd.f32 %v3112, 1.0
    %v3114 = vrcp.pop %v3113
    %v3115 = vmul.f32 %v3113, %v3114
    %v3116 = vsub.f32 1.0, %v3115
    %v3117 = vmul.f32 %v3114, %v3116
    %v3118 = vadd.f32 %v3114, %v3117
    %vm3119 = vweird.f32 %v3113
    %vm3120 = vweird.f32 %v3114
    %vm3121 = vmor %vm3119, %vm3120
    %v3122 = vsel %vm3121, %v3114, %v3118
    %v3123 = vand.u32 2147483647, %v3113
    %vm3124 = vcmp.eq.f32.partialorder %v3123, 8.507059e+37
    %v3125 = vand.u32 %v3113, 2147483648
    %v3126 = vor.u32 1.1754944e-38, %v3125
    %v3127 = vsel %vm3124, %v3126, %v3122
    %v3128 = vmul.f32 1.0, %v3127
    %v3129 = vld [vmem:[#allocation5] sm:$0xff]
    %v3130 = vmul.f32 %v3108, %v3129
    %v3131 = vmul.f32 %v3089, %v3109
    %v3132 = vadd.f32 %v3130, %v3131
    %v3133 = vtanh.pop %v3132
    %v3134 = vmul.f32 %v3128, %v3133
    %3135 = vst [vmem:[#allocation5] sm:$0xff] %v3132
    %3136 = vst [vmem:[#allocation4] sm:$0xff] %v3134
    %v3137 = vpack.c.bf16 %v3134, %v3134
    %3138 = vst [vmem:[%s1330] sm:$0xf] %v3137
    %v3139 = vld [vmem:[%s1334] sm:$0xff]
    %v3140 = vld [vmem:[%s1334 + $0x8] sm:$0xff]
    %v3141 = vunpack.c.l.bf16 %v3139
    %v3142 = vunpack.c.h.bf16 %v3139
    %v3143 = vunpack.c.l.bf16 %v3140
    %v3144 = vunpack.c.h.bf16 %v3140
    %v3145 = vld [vmem:[#allocation4] sm:$0xff]
    %v3146 = vpack.c.bf16 %v3145, %v3145
    %3147 = vmatpush.bf16.msra.mxu0 %v2451
    %3148 = vmatpush.bf16.msra.mxu0 %v2447
    %3149 = vmatpush.bf16.msra.mxu0 %v2443
    %3150 = vmatpush.bf16.msra.mxu0 %v2439
    %3151 = vmatpush.bf16.msra.mxu0 %v2435
    %3152 = vmatpush.bf16.msra.mxu0 %v2431
    %3153 = vmatpush.bf16.msra.mxu0 %v2427
    %3154 = vmatpush.bf16.msra.mxu0 %v2423
    %3155 = vmatmul.bf16.gmra.mxu0 %v3146
    %v3156 = vpop.f32.mrf.mxu0
    %v3157 = vadd.f32 0.0, %v3156
    %v3158 = vpop.f32.mrf.mxu0
    %3159 = vdwg.mxu0
    %3160 = vmatpush.bf16.msra.mxu0 %v2452
    %3161 = vmatpush.bf16.msra.mxu0 %v2448
    %3162 = vmatpush.bf16.msra.mxu0 %v2444
    %3163 = vmatpush.bf16.msra.mxu0 %v2440
    %3164 = vmatpush.bf16.msra.mxu0 %v2436
    %3165 = vmatpush.bf16.msra.mxu0 %v2432
    %3166 = vmatpush.bf16.msra.mxu0 %v2428
    %3167 = vmatpush.bf16.msra.mxu0 %v2424
    %3168 = vmatmul.bf16.gmra.mxu0 %v3146
    %v3169 = vpop.f32.mrf.mxu0
    %v3170 = vadd.f32 0.0, %v3169
    %v3171 = vpop.f32.mrf.mxu0
    %3172 = vdwg.mxu0
    %3173 = vmatpush.bf16.msra.mxu0 %v2453
    %3174 = vmatpush.bf16.msra.mxu0 %v2449
    %3175 = vmatpush.bf16.msra.mxu0 %v2445
    %3176 = vmatpush.bf16.msra.mxu0 %v2441
    %3177 = vmatpush.bf16.msra.mxu0 %v2437
    %3178 = vmatpush.bf16.msra.mxu0 %v2433
    %3179 = vmatpush.bf16.msra.mxu0 %v2429
    %3180 = vmatpush.bf16.msra.mxu0 %v2425
    %3181 = vmatmul.bf16.gmra.mxu0 %v3146
    %v3182 = vpop.f32.mrf.mxu0
    %v3183 = vadd.f32 0.0, %v3182
    %v3184 = vpop.f32.mrf.mxu0
    %3185 = vdwg.mxu0
    %3186 = vmatpush.bf16.msra.mxu0 %v2454
    %3187 = vmatpush.bf16.msra.mxu0 %v2450
    %3188 = vmatpush.bf16.msra.mxu0 %v2446
    %3189 = vmatpush.bf16.msra.mxu0 %v2442
    %3190 = vmatpush.bf16.msra.mxu0 %v2438
    %3191 = vmatpush.bf16.msra.mxu0 %v2434
    %3192 = vmatpush.bf16.msra.mxu0 %v2430
    %3193 = vmatpush.bf16.msra.mxu0 %v2426
    %3194 = vmatmul.bf16.gmra.mxu0 %v3146
    %v3195 = vpop.f32.mrf.mxu0
    %v3196 = vadd.f32 0.0, %v3195
    %v3197 = vpop.f32.mrf.mxu0
    %3198 = vdwg.mxu0
    %v3199 = vadd.f32 %v3141, %v3157
    %v3200 = vadd.f32 %v3142, %v3170
    %v3201 = vadd.f32 %v3143, %v3183
    %v3202 = vadd.f32 %v3144, %v3196
    %v3203 = vxor.u32 %v3199, 2147483648
    %v3204 = vmul.f32 %v3203, 1.442695
    %v3205 = vpow.pop %v3204
    %v3206 = vadd.f32 %v3205, 1.0
    %v3207 = vrcp.pop %v3206
    %v3208 = vmul.f32 %v3206, %v3207
    %v3209 = vsub.f32 1.0, %v3208
    %v3210 = vmul.f32 %v3207, %v3209
    %v3211 = vadd.f32 %v3207, %v3210
    %vm3212 = vweird.f32 %v3206
    %vm3213 = vweird.f32 %v3207
    %vm3214 = vmor %vm3212, %vm3213
    %v3215 = vsel %vm3214, %v3207, %v3211
    %v3216 = vand.u32 2147483647, %v3206
    %vm3217 = vcmp.eq.f32.partialorder %v3216, 8.507059e+37
    %v3218 = vand.u32 %v3206, 2147483648
    %v3219 = vor.u32 1.1754944e-38, %v3218
    %v3220 = vsel %vm3217, %v3219, %v3215
    %v3221 = vmul.f32 1.0, %v3220
    %v3222 = vxor.u32 %v3200, 2147483648
    %v3223 = vmul.f32 %v3222, 1.442695
    %v3224 = vpow.pop %v3223
    %v3225 = vadd.f32 %v3224, 1.0
    %v3226 = vrcp.pop %v3225
    %v3227 = vmul.f32 %v3225, %v3226
    %v3228 = vsub.f32 1.0, %v3227
    %v3229 = vmul.f32 %v3226, %v3228
    %v3230 = vadd.f32 %v3226, %v3229
    %vm3231 = vweird.f32 %v3225
    %vm3232 = vweird.f32 %v3226
    %vm3233 = vmor %vm3231, %vm3232
    %v3234 = vsel %vm3233, %v3226, %v3230
    %v3235 = vand.u32 2147483647, %v3225
    %vm3236 = vcmp.eq.f32.partialorder %v3235, 8.507059e+37
    %v3237 = vand.u32 %v3225, 2147483648
    %v3238 = vor.u32 1.1754944e-38, %v3237
    %v3239 = vsel %vm3236, %v3238, %v3234
    %v3240 = vmul.f32 1.0, %v3239
    %v3241 = vtanh.pop %v3201
    %v3242 = vxor.u32 %v3202, 2147483648
    %v3243 = vmul.f32 %v3242, 1.442695
    %v3244 = vpow.pop %v3243
    %v3245 = vadd.f32 %v3244, 1.0
    %v3246 = vrcp.pop %v3245
    %v3247 = vmul.f32 %v3245, %v3246
    %v3248 = vsub.f32 1.0, %v3247
    %v3249 = vmul.f32 %v3246, %v3248
    %v3250 = vadd.f32 %v3246, %v3249
    %vm3251 = vweird.f32 %v3245
    %vm3252 = vweird.f32 %v3246
    %vm3253 = vmor %vm3251, %vm3252
    %v3254 = vsel %vm3253, %v3246, %v3250
    %v3255 = vand.u32 2147483647, %v3245
    %vm3256 = vcmp.eq.f32.partialorder %v3255, 8.507059e+37
    %v3257 = vand.u32 %v3245, 2147483648
    %v3258 = vor.u32 1.1754944e-38, %v3257
    %v3259 = vsel %vm3256, %v3258, %v3254
    %v3260 = vmul.f32 1.0, %v3259
    %v3261 = vld [vmem:[#allocation5] sm:$0xff]
    %v3262 = vmul.f32 %v3240, %v3261
    %v3263 = vmul.f32 %v3221, %v3241
    %v3264 = vadd.f32 %v3262, %v3263
    %v3265 = vtanh.pop %v3264
    %v3266 = vmul.f32 %v3260, %v3265
    %3267 = vst [vmem:[#allocation5] sm:$0xff] %v3264
    %3268 = vst [vmem:[#allocation4] sm:$0xff] %v3266
    %v3269 = vpack.c.bf16 %v3266, %v3266
    %3270 = vst [vmem:[%s1466] sm:$0xf] %v3269
    %v3271 = vld [vmem:[%s1470] sm:$0xff]
    %v3272 = vld [vmem:[%s1470 + $0x8] sm:$0xff]
    %v3273 = vunpack.c.l.bf16 %v3271
    %v3274 = vunpack.c.h.bf16 %v3271
    %v3275 = vunpack.c.l.bf16 %v3272
    %v3276 = vunpack.c.h.bf16 %v3272
    %v3277 = vld [vmem:[#allocation4] sm:$0xff]
    %v3278 = vpack.c.bf16 %v3277, %v3277
    %3279 = vmatpush.bf16.msra.mxu0 %v2451
    %3280 = vmatpush.bf16.msra.mxu0 %v2447
    %3281 = vmatpush.bf16.msra.mxu0 %v2443
    %3282 = vmatpush.bf16.msra.mxu0 %v2439
    %3283 = vmatpush.bf16.msra.mxu0 %v2435
    %3284 = vmatpush.bf16.msra.mxu0 %v2431
    %3285 = vmatpush.bf16.msra.mxu0 %v2427
    %3286 = vmatpush.bf16.msra.mxu0 %v2423
    %3287 = vmatmul.bf16.gmra.mxu0 %v3278
    %v3288 = vpop.f32.mrf.mxu0
    %v3289 = vadd.f32 0.0, %v3288
    %v3290 = vpop.f32.mrf.mxu0
    %3291 = vdwg.mxu0
    %3292 = vmatpush.bf16.msra.mxu0 %v2452
    %3293 = vmatpush.bf16.msra.mxu0 %v2448
    %3294 = vmatpush.bf16.msra.mxu0 %v2444
    %3295 = vmatpush.bf16.msra.mxu0 %v2440
    %3296 = vmatpush.bf16.msra.mxu0 %v2436
    %3297 = vmatpush.bf16.msra.mxu0 %v2432
    %3298 = vmatpush.bf16.msra.mxu0 %v2428
    %3299 = vmatpush.bf16.msra.mxu0 %v2424
    %3300 = vmatmul.bf16.gmra.mxu0 %v3278
    %v3301 = vpop.f32.mrf.mxu0
    %v3302 = vadd.f32 0.0, %v3301
    %v3303 = vpop.f32.mrf.mxu0
    %3304 = vdwg.mxu0
    %3305 = vmatpush.bf16.msra.mxu0 %v2453
    %3306 = vmatpush.bf16.msra.mxu0 %v2449
    %3307 = vmatpush.bf16.msra.mxu0 %v2445
    %3308 = vmatpush.bf16.msra.mxu0 %v2441
    %3309 = vmatpush.bf16.msra.mxu0 %v2437
    %3310 = vmatpush.bf16.msra.mxu0 %v2433
    %3311 = vmatpush.bf16.msra.mxu0 %v2429
    %3312 = vmatpush.bf16.msra.mxu0 %v2425
    %3313 = vmatmul.bf16.gmra.mxu0 %v3278
    %v3314 = vpop.f32.mrf.mxu0
    %v3315 = vadd.f32 0.0, %v3314
    %v3316 = vpop.f32.mrf.mxu0
    %3317 = vdwg.mxu0
    %3318 = vmatpush.bf16.msra.mxu0 %v2454
    %3319 = vmatpush.bf16.msra.mxu0 %v2450
    %3320 = vmatpush.bf16.msra.mxu0 %v2446
    %3321 = vmatpush.bf16.msra.mxu0 %v2442
    %3322 = vmatpush.bf16.msra.mxu0 %v2438
    %3323 = vmatpush.bf16.msra.mxu0 %v2434
    %3324 = vmatpush.bf16.msra.mxu0 %v2430
    %3325 = vmatpush.bf16.msra.mxu0 %v2426
    %3326 = vmatmul.bf16.gmra.mxu0 %v3278
    %v3327 = vpop.f32.mrf.mxu0
    %v3328 = vadd.f32 0.0, %v3327
    %v3329 = vpop.f32.mrf.mxu0
    %3330 = vdwg.mxu0
    %v3331 = vadd.f32 %v3273, %v3289
    %v3332 = vadd.f32 %v3274, %v3302
    %v3333 = vadd.f32 %v3275, %v3315
    %v3334 = vadd.f32 %v3276, %v3328
    %v3335 = vxor.u32 %v3331, 2147483648
    %v3336 = vmul.f32 %v3335, 1.442695
    %v3337 = vpow.pop %v3336
    %v3338 = vadd.f32 %v3337, 1.0
    %v3339 = vrcp.pop %v3338
    %v3340 = vmul.f32 %v3338, %v3339
    %v3341 = vsub.f32 1.0, %v3340
    %v3342 = vmul.f32 %v3339, %v3341
    %v3343 = vadd.f32 %v3339, %v3342
    %vm3344 = vweird.f32 %v3338
    %vm3345 = vweird.f32 %v3339
    %vm3346 = vmor %vm3344, %vm3345
    %v3347 = vsel %vm3346, %v3339, %v3343
    %v3348 = vand.u32 2147483647, %v3338
    %vm3349 = vcmp.eq.f32.partialorder %v3348, 8.507059e+37
    %v3350 = vand.u32 %v3338, 2147483648
    %v3351 = vor.u32 1.1754944e-38, %v3350
    %v3352 = vsel %vm3349, %v3351, %v3347
    %v3353 = vmul.f32 1.0, %v3352
    %v3354 = vxor.u32 %v3332, 2147483648
    %v3355 = vmul.f32 %v3354, 1.442695
    %v3356 = vpow.pop %v3355
    %v3357 = vadd.f32 %v3356, 1.0
    %v3358 = vrcp.pop %v3357
    %v3359 = vmul.f32 %v3357, %v3358
    %v3360 = vsub.f32 1.0, %v3359
    %v3361 = vmul.f32 %v3358, %v3360
    %v3362 = vadd.f32 %v3358, %v3361
    %vm3363 = vweird.f32 %v3357
    %vm3364 = vweird.f32 %v3358
    %vm3365 = vmor %vm3363, %vm3364
    %v3366 = vsel %vm3365, %v3358, %v3362
    %v3367 = vand.u32 2147483647, %v3357
    %vm3368 = vcmp.eq.f32.partialorder %v3367, 8.507059e+37
    %v3369 = vand.u32 %v3357, 2147483648
    %v3370 = vor.u32 1.1754944e-38, %v3369
    %v3371 = vsel %vm3368, %v3370, %v3366
    %v3372 = vmul.f32 1.0, %v3371
    %v3373 = vtanh.pop %v3333
    %v3374 = vxor.u32 %v3334, 2147483648
    %v3375 = vmul.f32 %v3374, 1.442695
    %v3376 = vpow.pop %v3375
    %v3377 = vadd.f32 %v3376, 1.0
    %v3378 = vrcp.pop %v3377
    %v3379 = vmul.f32 %v3377, %v3378
    %v3380 = vsub.f32 1.0, %v3379
    %v3381 = vmul.f32 %v3378, %v3380
    %v3382 = vadd.f32 %v3378, %v3381
    %vm3383 = vweird.f32 %v3377
    %vm3384 = vweird.f32 %v3378
    %vm3385 = vmor %vm3383, %vm3384
    %v3386 = vsel %vm3385, %v3378, %v3382
    %v3387 = vand.u32 2147483647, %v3377
    %vm3388 = vcmp.eq.f32.partialorder %v3387, 8.507059e+37
    %v3389 = vand.u32 %v3377, 2147483648
    %v3390 = vor.u32 1.1754944e-38, %v3389
    %v3391 = vsel %vm3388, %v3390, %v3386
    %v3392 = vmul.f32 1.0, %v3391
    %v3393 = vld [vmem:[#allocation5] sm:$0xff]
    %v3394 = vmul.f32 %v3372, %v3393
    %v3395 = vmul.f32 %v3353, %v3373
    %v3396 = vadd.f32 %v3394, %v3395
    %v3397 = vtanh.pop %v3396
    %v3398 = vmul.f32 %v3392, %v3397
    %3399 = vst [vmem:[#allocation5] sm:$0xff] %v3396
    %3400 = vst [vmem:[#allocation4] sm:$0xff] %v3398
    %v3401 = vpack.c.bf16 %v3398, %v3398
    %3402 = vst [vmem:[%s1602] sm:$0xf] %v3401
    %v3403 = vld [vmem:[%s1606] sm:$0xff]
    %v3404 = vld [vmem:[%s1606 + $0x8] sm:$0xff]
    %v3405 = vunpack.c.l.bf16 %v3403
    %v3406 = vunpack.c.h.bf16 %v3403
    %v3407 = vunpack.c.l.bf16 %v3404
    %v3408 = vunpack.c.h.bf16 %v3404
    %v3409 = vld [vmem:[#allocation4] sm:$0xff]
    %v3410 = vpack.c.bf16 %v3409, %v3409
    %3411 = vmatpush.bf16.msra.mxu0 %v2451
    %3412 = vmatpush.bf16.msra.mxu0 %v2447
    %3413 = vmatpush.bf16.msra.mxu0 %v2443
    %3414 = vmatpush.bf16.msra.mxu0 %v2439
    %3415 = vmatpush.bf16.msra.mxu0 %v2435
    %3416 = vmatpush.bf16.msra.mxu0 %v2431
    %3417 = vmatpush.bf16.msra.mxu0 %v2427
    %3418 = vmatpush.bf16.msra.mxu0 %v2423
    %3419 = vmatmul.bf16.gmra.mxu0 %v3410
    %v3420 = vpop.f32.mrf.mxu0
    %v3421 = vadd.f32 0.0, %v3420
    %v3422 = vpop.f32.mrf.mxu0
    %3423 = vdwg.mxu0
    %3424 = vmatpush.bf16.msra.mxu0 %v2452
    %3425 = vmatpush.bf16.msra.mxu0 %v2448
    %3426 = vmatpush.bf16.msra.mxu0 %v2444
    %3427 = vmatpush.bf16.msra.mxu0 %v2440
    %3428 = vmatpush.bf16.msra.mxu0 %v2436
    %3429 = vmatpush.bf16.msra.mxu0 %v2432
    %3430 = vmatpush.bf16.msra.mxu0 %v2428
    %3431 = vmatpush.bf16.msra.mxu0 %v2424
    %3432 = vmatmul.bf16.gmra.mxu0 %v3410
    %v3433 = vpop.f32.mrf.mxu0
    %v3434 = vadd.f32 0.0, %v3433
    %v3435 = vpop.f32.mrf.mxu0
    %3436 = vdwg.mxu0
    %3437 = vmatpush.bf16.msra.mxu0 %v2453
    %3438 = vmatpush.bf16.msra.mxu0 %v2449
    %3439 = vmatpush.bf16.msra.mxu0 %v2445
    %3440 = vmatpush.bf16.msra.mxu0 %v2441
    %3441 = vmatpush.bf16.msra.mxu0 %v2437
    %3442 = vmatpush.bf16.msra.mxu0 %v2433
    %3443 = vmatpush.bf16.msra.mxu0 %v2429
    %3444 = vmatpush.bf16.msra.mxu0 %v2425
    %3445 = vmatmul.bf16.gmra.mxu0 %v3410
    %v3446 = vpop.f32.mrf.mxu0
    %v3447 = vadd.f32 0.0, %v3446
    %v3448 = vpop.f32.mrf.mxu0
    %3449 = vdwg.mxu0
    %3450 = vmatpush.bf16.msra.mxu0 %v2454
    %3451 = vmatpush.bf16.msra.mxu0 %v2450
    %3452 = vmatpush.bf16.msra.mxu0 %v2446
    %3453 = vmatpush.bf16.msra.mxu0 %v2442
    %3454 = vmatpush.bf16.msra.mxu0 %v2438
    %3455 = vmatpush.bf16.msra.mxu0 %v2434
    %3456 = vmatpush.bf16.msra.mxu0 %v2430
    %3457 = vmatpush.bf16.msra.mxu0 %v2426
    %3458 = vmatmul.bf16.gmra.mxu0 %v3410
    %v3459 = vpop.f32.mrf.mxu0
    %v3460 = vadd.f32 0.0, %v3459
    %v3461 = vpop.f32.mrf.mxu0
    %3462 = vdwg.mxu0
    %v3463 = vadd.f32 %v3405, %v3421
    %v3464 = vadd.f32 %v3406, %v3434
    %v3465 = vadd.f32 %v3407, %v3447
    %v3466 = vadd.f32 %v3408, %v3460
    %v3467 = vxor.u32 %v3463, 2147483648
    %v3468 = vmul.f32 %v3467, 1.442695
    %v3469 = vpow.pop %v3468
    %v3470 = vadd.f32 %v3469, 1.0
    %v3471 = vrcp.pop %v3470
    %v3472 = vmul.f32 %v3470, %v3471
    %v3473 = vsub.f32 1.0, %v3472
    %v3474 = vmul.f32 %v3471, %v3473
    %v3475 = vadd.f32 %v3471, %v3474
    %vm3476 = vweird.f32 %v3470
    %vm3477 = vweird.f32 %v3471
    %vm3478 = vmor %vm3476, %vm3477
    %v3479 = vsel %vm3478, %v3471, %v3475
    %v3480 = vand.u32 2147483647, %v3470
    %vm3481 = vcmp.eq.f32.partialorder %v3480, 8.507059e+37
    %v3482 = vand.u32 %v3470, 2147483648
    %v3483 = vor.u32 1.1754944e-38, %v3482
    %v3484 = vsel %vm3481, %v3483, %v3479
    %v3485 = vmul.f32 1.0, %v3484
    %v3486 = vxor.u32 %v3464, 2147483648
    %v3487 = vmul.f32 %v3486, 1.442695
    %v3488 = vpow.pop %v3487
    %v3489 = vadd.f32 %v3488, 1.0
    %v3490 = vrcp.pop %v3489
    %v3491 = vmul.f32 %v3489, %v3490
    %v3492 = vsub.f32 1.0, %v3491
    %v3493 = vmul.f32 %v3490, %v3492
    %v3494 = vadd.f32 %v3490, %v3493
    %vm3495 = vweird.f32 %v3489
    %vm3496 = vweird.f32 %v3490
    %vm3497 = vmor %vm3495, %vm3496
    %v3498 = vsel %vm3497, %v3490, %v3494
    %v3499 = vand.u32 2147483647, %v3489
    %vm3500 = vcmp.eq.f32.partialorder %v3499, 8.507059e+37
    %v3501 = vand.u32 %v3489, 2147483648
    %v3502 = vor.u32 1.1754944e-38, %v3501
    %v3503 = vsel %vm3500, %v3502, %v3498
    %v3504 = vmul.f32 1.0, %v3503
    %v3505 = vtanh.pop %v3465
    %v3506 = vxor.u32 %v3466, 2147483648
    %v3507 = vmul.f32 %v3506, 1.442695
    %v3508 = vpow.pop %v3507
    %v3509 = vadd.f32 %v3508, 1.0
    %v3510 = vrcp.pop %v3509
    %v3511 = vmul.f32 %v3509, %v3510
    %v3512 = vsub.f32 1.0, %v3511
    %v3513 = vmul.f32 %v3510, %v3512
    %v3514 = vadd.f32 %v3510, %v3513
    %vm3515 = vweird.f32 %v3509
    %vm3516 = vweird.f32 %v3510
    %vm3517 = vmor %vm3515, %vm3516
    %v3518 = vsel %vm3517, %v3510, %v3514
    %v3519 = vand.u32 2147483647, %v3509
    %vm3520 = vcmp.eq.f32.partialorder %v3519, 8.507059e+37
    %v3521 = vand.u32 %v3509, 2147483648
    %v3522 = vor.u32 1.1754944e-38, %v3521
    %v3523 = vsel %vm3520, %v3522, %v3518
    %v3524 = vmul.f32 1.0, %v3523
    %v3525 = vld [vmem:[#allocation5] sm:$0xff]
    %v3526 = vmul.f32 %v3504, %v3525
    %v3527 = vmul.f32 %v3485, %v3505
    %v3528 = vadd.f32 %v3526, %v3527
    %v3529 = vtanh.pop %v3528
    %v3530 = vmul.f32 %v3524, %v3529
    %3531 = vst [vmem:[#allocation5] sm:$0xff] %v3528
    %3532 = vst [vmem:[#allocation4] sm:$0xff] %v3530
    %v3533 = vpack.c.bf16 %v3530, %v3530
    %3534 = vst [vmem:[%s1738] sm:$0xf] %v3533
    %v3535 = vld [vmem:[%s1742] sm:$0xff]
    %v3536 = vld [vmem:[%s1742 + $0x8] sm:$0xff]
    %v3537 = vunpack.c.l.bf16 %v3535
    %v3538 = vunpack.c.h.bf16 %v3535
    %v3539 = vunpack.c.l.bf16 %v3536
    %v3540 = vunpack.c.h.bf16 %v3536
    %v3541 = vld [vmem:[#allocation4] sm:$0xff]
    %v3542 = vpack.c.bf16 %v3541, %v3541
    %3543 = vmatpush.bf16.msra.mxu0 %v2451
    %3544 = vmatpush.bf16.msra.mxu0 %v2447
    %3545 = vmatpush.bf16.msra.mxu0 %v2443
    %3546 = vmatpush.bf16.msra.mxu0 %v2439
    %3547 = vmatpush.bf16.msra.mxu0 %v2435
    %3548 = vmatpush.bf16.msra.mxu0 %v2431
    %3549 = vmatpush.bf16.msra.mxu0 %v2427
    %3550 = vmatpush.bf16.msra.mxu0 %v2423
    %3551 = vmatmul.bf16.gmra.mxu0 %v3542
    %v3552 = vpop.f32.mrf.mxu0
    %v3553 = vadd.f32 0.0, %v3552
    %v3554 = vpop.f32.mrf.mxu0
    %3555 = vdwg.mxu0
    %3556 = vmatpush.bf16.msra.mxu0 %v2452
    %3557 = vmatpush.bf16.msra.mxu0 %v2448
    %3558 = vmatpush.bf16.msra.mxu0 %v2444
    %3559 = vmatpush.bf16.msra.mxu0 %v2440
    %3560 = vmatpush.bf16.msra.mxu0 %v2436
    %3561 = vmatpush.bf16.msra.mxu0 %v2432
    %3562 = vmatpush.bf16.msra.mxu0 %v2428
    %3563 = vmatpush.bf16.msra.mxu0 %v2424
    %3564 = vmatmul.bf16.gmra.mxu0 %v3542
    %v3565 = vpop.f32.mrf.mxu0
    %v3566 = vadd.f32 0.0, %v3565
    %v3567 = vpop.f32.mrf.mxu0
    %3568 = vdwg.mxu0
    %3569 = vmatpush.bf16.msra.mxu0 %v2453
    %3570 = vmatpush.bf16.msra.mxu0 %v2449
    %3571 = vmatpush.bf16.msra.mxu0 %v2445
    %3572 = vmatpush.bf16.msra.mxu0 %v2441
    %3573 = vmatpush.bf16.msra.mxu0 %v2437
    %3574 = vmatpush.bf16.msra.mxu0 %v2433
    %3575 = vmatpush.bf16.msra.mxu0 %v2429
    %3576 = vmatpush.bf16.msra.mxu0 %v2425
    %3577 = vmatmul.bf16.gmra.mxu0 %v3542
    %v3578 = vpop.f32.mrf.mxu0
    %v3579 = vadd.f32 0.0, %v3578
    %v3580 = vpop.f32.mrf.mxu0
    %3581 = vdwg.mxu0
    %3582 = vmatpush.bf16.msra.mxu0 %v2454
    %3583 = vmatpush.bf16.msra.mxu0 %v2450
    %3584 = vmatpush.bf16.msra.mxu0 %v2446
    %3585 = vmatpush.bf16.msra.mxu0 %v2442
    %3586 = vmatpush.bf16.msra.mxu0 %v2438
    %3587 = vmatpush.bf16.msra.mxu0 %v2434
    %3588 = vmatpush.bf16.msra.mxu0 %v2430
    %3589 = vmatpush.bf16.msra.mxu0 %v2426
    %3590 = vmatmul.bf16.gmra.mxu0 %v3542
    %v3591 = vpop.f32.mrf.mxu0
    %v3592 = vadd.f32 0.0, %v3591
    %v3593 = vpop.f32.mrf.mxu0
    %3594 = vdwg.mxu0
    %v3595 = vadd.f32 %v3537, %v3553
    %v3596 = vadd.f32 %v3538, %v3566
    %v3597 = vadd.f32 %v3539, %v3579
    %v3598 = vadd.f32 %v3540, %v3592
    %v3599 = vxor.u32 %v3595, 2147483648
    %v3600 = vmul.f32 %v3599, 1.442695
    %v3601 = vpow.pop %v3600
    %v3602 = vadd.f32 %v3601, 1.0
    %v3603 = vrcp.pop %v3602
    %v3604 = vmul.f32 %v3602, %v3603
    %v3605 = vsub.f32 1.0, %v3604
    %v3606 = vmul.f32 %v3603, %v3605
    %v3607 = vadd.f32 %v3603, %v3606
    %vm3608 = vweird.f32 %v3602
    %vm3609 = vweird.f32 %v3603
    %vm3610 = vmor %vm3608, %vm3609
    %v3611 = vsel %vm3610, %v3603, %v3607
    %v3612 = vand.u32 2147483647, %v3602
    %vm3613 = vcmp.eq.f32.partialorder %v3612, 8.507059e+37
    %v3614 = vand.u32 %v3602, 2147483648
    %v3615 = vor.u32 1.1754944e-38, %v3614
    %v3616 = vsel %vm3613, %v3615, %v3611
    %v3617 = vmul.f32 1.0, %v3616
    %v3618 = vxor.u32 %v3596, 2147483648
    %v3619 = vmul.f32 %v3618, 1.442695
    %v3620 = vpow.pop %v3619
    %v3621 = vadd.f32 %v3620, 1.0
    %v3622 = vrcp.pop %v3621
    %v3623 = vmul.f32 %v3621, %v3622
    %v3624 = vsub.f32 1.0, %v3623
    %v3625 = vmul.f32 %v3622, %v3624
    %v3626 = vadd.f32 %v3622, %v3625
    %vm3627 = vweird.f32 %v3621
    %vm3628 = vweird.f32 %v3622
    %vm3629 = vmor %vm3627, %vm3628
    %v3630 = vsel %vm3629, %v3622, %v3626
    %v3631 = vand.u32 2147483647, %v3621
    %vm3632 = vcmp.eq.f32.partialorder %v3631, 8.507059e+37
    %v3633 = vand.u32 %v3621, 2147483648
    %v3634 = vor.u32 1.1754944e-38, %v3633
    %v3635 = vsel %vm3632, %v3634, %v3630
    %v3636 = vmul.f32 1.0, %v3635
    %v3637 = vtanh.pop %v3597
    %v3638 = vxor.u32 %v3598, 2147483648
    %v3639 = vmul.f32 %v3638, 1.442695
    %v3640 = vpow.pop %v3639
    %v3641 = vadd.f32 %v3640, 1.0
    %v3642 = vrcp.pop %v3641
    %v3643 = vmul.f32 %v3641, %v3642
    %v3644 = vsub.f32 1.0, %v3643
    %v3645 = vmul.f32 %v3642, %v3644
    %v3646 = vadd.f32 %v3642, %v3645
    %vm3647 = vweird.f32 %v3641
    %vm3648 = vweird.f32 %v3642
    %vm3649 = vmor %vm3647, %vm3648
    %v3650 = vsel %vm3649, %v3642, %v3646
    %v3651 = vand.u32 2147483647, %v3641
    %vm3652 = vcmp.eq.f32.partialorder %v3651, 8.507059e+37
    %v3653 = vand.u32 %v3641, 2147483648
    %v3654 = vor.u32 1.1754944e-38, %v3653
    %v3655 = vsel %vm3652, %v3654, %v3650
    %v3656 = vmul.f32 1.0, %v3655
    %v3657 = vld [vmem:[#allocation5] sm:$0xff]
    %v3658 = vmul.f32 %v3636, %v3657
    %v3659 = vmul.f32 %v3617, %v3637
    %v3660 = vadd.f32 %v3658, %v3659
    %v3661 = vtanh.pop %v3660
    %v3662 = vmul.f32 %v3656, %v3661
    %3663 = vst [vmem:[#allocation5] sm:$0xff] %v3660
    %3664 = vst [vmem:[#allocation4] sm:$0xff] %v3662
    %v3665 = vpack.c.bf16 %v3662, %v3662
    %3666 = vst [vmem:[%s1874] sm:$0xf] %v3665
    %v3667 = vld [vmem:[#allocation2] sm:$0xf]
    %v3668 = vld [vmem:[#allocation2 + $0x4] sm:$0xf]
    %v3669 = vld [vmem:[#allocation2 + $0x8] sm:$0xf]
    %v3670 = vld [vmem:[#allocation2 + $0xc] sm:$0xf]
    %v3671 = vld [vmem:[#allocation2 + $0x10] sm:$0xf]
    %v3672 = vld [vmem:[#allocation2 + $0x14] sm:$0xf]
    %v3673 = vld [vmem:[#allocation2 + $0x18] sm:$0xf]
    %v3674 = vld [vmem:[#allocation2 + $0x1c] sm:$0xf]
    %v3675 = vld [vmem:[#allocation2 + $0x20] sm:$0xf]
    %3676 = vst [vmem:[%s5] sm:$0xf] %v3667
    %3677 = vst [vmem:[%s5 + $0x4] sm:$0xf] %v3668
    %3678 = vst [vmem:[%s5 + $0x8] sm:$0xf] %v3669
    %3679 = vst [vmem:[%s5 + $0xc] sm:$0xf] %v3670
    %3680 = vst [vmem:[%s5 + $0x10] sm:$0xf] %v3671
    %3681 = vst [vmem:[%s5 + $0x14] sm:$0xf] %v3672
    %3682 = vst [vmem:[%s5 + $0x18] sm:$0xf] %v3673
    %3683 = vst [vmem:[%s5 + $0x1c] sm:$0xf] %v3674
    %3684 = vst [vmem:[%s5 + $0x20] sm:$0xf] %v3675
    // Predicated region
    $region30: #{decoder_rnn_forward.2} parent=1 // pred_check
      _
    $region31: #{decoder_rnn_forward.2} parent=1 // pred_check_branch
      %3686 = sbr.rel (0) target = $region33
    $region32: #{decoder_rnn_forward.2} parent=1 // pred_region
      _
    $region33: #{decoder_rnn_forward.2} parent=1 // pred_fallthru
      _
    // Predicated region
    $region34: #{decoder_rnn_forward.2} parent=1 // pred_check
      _
    $region35: #{decoder_rnn_forward.2} parent=1 // pred_check_branch
      %3688 = sbr.rel (0) target = $region37
    $region36: #{decoder_rnn_forward.2} parent=1 // pred_region
      _
    $region37: #{decoder_rnn_forward.2} parent=1 // pred_fallthru
      _
    %3689 = vsyncpa [#allocation7], 1
    %3690 = vsyncpa [#allocation9], 1

</llo_original>
